<compile_context>
chip_gen: v5e
topology: v5e:2x2
jax: 0.10.0
libtpu: 0.0.40
codegen_flags: <defaults>
</compile_context>

<pallas_src>
import jax
import jax.numpy as jnp
from jax import lax
from jax.experimental import pallas as pl
from jax.experimental.pallas import tpu as pltpu

EPS = 1e-5


# --------------------------------------------------------------------------
# Kernel 1: fused fc (Linear) + 2-layer bidirectional LSTM
# --------------------------------------------------------------------------

def _make_lstm_kernel(batch, seq_len, hidden):
    B, T, H = batch, seq_len, hidden

    def sig(z):
        return 1.0 / (1.0 + jnp.exp(-z))

    def step(g_x, h, c, whh_t):
        # g_x already holds the input projection + bias for this direction/time step
        g = g_x + jnp.dot(h, whh_t, preferred_element_type=jnp.float32)
        i = sig(g[:, 0:H])
        f = sig(g[:, H:2 * H])
        gg = jnp.tanh(g[:, 2 * H:3 * H])
        o = sig(g[:, 3 * H:4 * H])
        c_new = f * c + i * gg
        return o * jnp.tanh(c_new), c_new

    def kernel(x_ref, fcw_ref, fcb_ref, wih0_ref, whh0_ref, b0_ref,
               wih1_ref, whh1_ref, b1_ref, out_ref):
        # x_ref: (T*B, C_in) with T outermost
        seq = (jnp.dot(x_ref[...], fcw_ref[...], preferred_element_type=jnp.float32)
               + fcb_ref[...])                                   # (T*B, H)
        zero = jnp.zeros((B, H), jnp.float32)
        for wih_ref, whh_ref, b_ref in ((wih0_ref, whh0_ref, b0_ref),
                                        (wih1_ref, whh1_ref, b1_ref)):
            # one input projection for BOTH directions and all time steps
            proj = (jnp.dot(seq, wih_ref[...], preferred_element_type=jnp.float32)
                    + b_ref[...])                                # (T*B, 8H)
            u_f = whh_ref[0]                                     # (H, 4H)
            u_b = whh_ref[1]
            fwd = [None] * T
            bwd = [None] * T
            h, c = zero, zero
            for t in range(T):
                h, c = step(proj[t * B:(t + 1) * B, 0:4 * H], h, c, u_f)
                fwd[t] = h
            h, c = zero, zero
            for t in range(T - 1, -1, -1):
                h, c = step(proj[t * B:(t + 1) * B, 4 * H:8 * H], h, c, u_b)
                bwd[t] = h
            seq = jnp.concatenate(
                [jnp.concatenate([fwd[t], bwd[t]], axis=-1) for t in range(T)], axis=0)
        out_ref[...] = seq.astype(out_ref.dtype)                 # (T*B, 2H) lane-dense

    return kernel


def _prep_lstm(params):
    def comb_layer(layer_ws):
        # combine both directions: columns [0:4H] forward, [4H:8H] backward
        wih = jnp.concatenate([jnp.transpose(w[0]) for w in layer_ws], axis=-1)  # (in, 8H)
        whh = jnp.stack([jnp.transpose(w[1]) for w in layer_ws])                 # (2, H, 4H)
        b = jnp.concatenate([(w[2] + w[3]) for w in layer_ws])[None, :]          # (1, 8H)
        return wih, whh, b

    wih0, whh0, b0 = comb_layer(params['lstm'][0])
    wih1, whh1, b1 = comb_layer(params['lstm'][1])
    return wih0, whh0, b0, wih1, whh1, b1


def lstm_fc_pallas(x, params, hidden):
    B, T, C = x.shape
    wih0, whh0, b0, wih1, whh1, b1 = _prep_lstm(params)
    x_flat = jnp.transpose(x, (1, 0, 2)).reshape(T * B, C)       # T outermost
    out = pl.pallas_call(
        _make_lstm_kernel(B, T, hidden),
        out_shape=jax.ShapeDtypeStruct((T * B, 2 * hidden), jnp.float32),
    )(x_flat, jnp.transpose(params['fc_w']), params['fc_b'][None, :],
      wih0, whh0, b0, wih1, whh1, b1)
    # (T*B, 2H) -> (B, T, 2H): T becomes the conv channel dim, 2H the conv length
    return jnp.transpose(out.reshape(T, B, 2 * hidden), (1, 0, 2))


# --------------------------------------------------------------------------
# Kernel 2: ALL SimplifiedWaveBlock branches fused into one kernel
# --------------------------------------------------------------------------

def _make_waveblocks_kernel(num_layers, filters, l_out, kd, dmax):
    half = (kd - 1) // 2
    F, L = filters, l_out

    def kernel(taps_ref, w0_ref, b0_ref, s1_ref, t1_ref, wd_ref, bd_ref,
               s2_ref, t2_ref, wp_ref, bp_ref, out_ref, hbuf):
        # keep the halo regions of the scratch zeroed so dilated 'same' padding reads 0
        if dmax > 0:
            hbuf[:, 0:dmax] = jnp.zeros((F, dmax), jnp.float32)
            hbuf[:, dmax + L:dmax + L + dmax] = jnp.zeros((F, dmax), jnp.float32)

        # downsampling first conv: single (F, Kf*C_in) x (Kf*C_in, L) MXU contraction
        x = (jnp.dot(w0_ref[0], taps_ref[0], preferred_element_type=jnp.float32)
             + b0_ref[0])
        res = x
        for j in range(num_layers):
            d = 2 ** j
            # BN1 + ReLU (folded inference-mode affine), fused in registers
            h = jnp.maximum(x * s1_ref[0, j] + t1_ref[0, j], 0.0)
            if kd > 1:
                # store into the zero-padded scratch, read the +/- d shifted windows
                hbuf[:, dmax:dmax + L] = h
                taps = [h if k == half
                        else hbuf[:, dmax + (k - half) * d:dmax + (k - half) * d + L]
                        for k in range(kd)]
                t_cat = jnp.concatenate(taps, axis=0)
            else:
                t_cat = h
            # dilated conv as one (kd*F)-deep contraction
            h = (jnp.dot(wd_ref[0, j], t_cat, preferred_element_type=jnp.float32)
                 + bd_ref[0, j])
            # BN2 + ReLU
            h = jnp.maximum(h * s2_ref[0, j] + t2_ref[0, j], 0.0)
            # 1x1 conv
            h = (jnp.dot(wp_ref[0, j], h, preferred_element_type=jnp.float32)
                 + bp_ref[0, j])
            x = h
            res = res + h
        out_ref[0, 0] = res.astype(out_ref.dtype)

    return kernel


def first_conv_taps(x_conv, first_k, stride):
    """im2col for the downsampling first conv (kernel=stride+1, pad=stride//2),
    built once in XLA and shared by every wave-block branch."""
    _, _, L = x_conv.shape
    pad = (first_k - 1) // 2
    l_out = (L + 2 * pad - first_k) // stride + 1
    xp = jnp.pad(x_conv, ((0, 0), (0, 0), (pad, pad)))
    span = stride * (l_out - 1) + 1
    return jnp.concatenate(
        [xp[:, :, k:k + span:stride] for k in range(first_k)], axis=1)


def waveblocks_pallas(taps0, branches):
    B, KC, L1 = taps0.shape
    NB = len(branches)
    F = branches[0]['w0'].shape[0]
    kd = branches[0]['layers'][0]['wd'].shape[-1]
    NL = max(len(br['layers']) for br in branches)
    half = (kd - 1) // 2
    dmax = half * (2 ** (NL - 1))

    def branch_arrays(br):
        nl = len(br['layers'])
        npad = NL - nl

        def stk(vals, zshape):
            # pad trailing layers with zero weights: their 1x1-conv output is exactly 0,
            # so the residual (and hence the branch output) is unchanged.
            return jnp.stack(list(vals) + [jnp.zeros(zshape, jnp.float32)] * npad)

        w0r = jnp.transpose(br['w0'], (0, 2, 1)).reshape(F, -1)           # (F, Kf*C_in)
        b0 = br['b0'].reshape(F, 1)
        s1 = stk([l['bn1_scale'] for l in br['layers']], (F,))[:, :, None]
        t1 = stk([l['bn1_shift'] for l in br['layers']], (F,))[:, :, None]
        wd = stk([jnp.transpose(l['wd'], (0, 2, 1)).reshape(F, -1)
                  for l in br['layers']], (F, kd * F))                    # (NL, F, kd*F)
        bd = stk([l['bd'] for l in br['layers']], (F,))[:, :, None]
        s2 = stk([l['bn2_scale'] for l in br['layers']], (F,))[:, :, None]
        t2 = stk([l['bn2_shift'] for l in br['layers']], (F,))[:, :, None]
        wp = stk([l['wp'][:, :, 0] for l in br['layers']], (F, F))        # (NL, F, F)
        bp = stk([l['bp'] for l in br['layers']], (F,))[:, :, None]
        return w0r, b0, s1, t1, wd, bd, s2, t2, wp, bp

    parts = [branch_arrays(br) for br in branches]
    (w0s, b0s, s1s, t1s, wds, bds, s2s, t2s, wps, bps) = (
        jnp.stack([p[i] for p in parts]) for i in range(10))

    bspec = lambda idx: pl.BlockSpec((1, NL, F, idx), lambda j, i: (j, 0, 0, 0))

    return pl.pallas_call(
        _make_waveblocks_kernel(NL, F, L1, kd, dmax),
        out_shape=jax.ShapeDtypeStruct((B, NB, F, L1), jnp.float32),
        grid=(NB, B),
        in_specs=[
            pl.BlockSpec((1, KC, L1), lambda j, i: (i, 0, 0)),
            pl.BlockSpec((1, F, KC), lambda j, i: (j, 0, 0)),
            pl.BlockSpec((1, F, 1), lambda j, i: (j, 0, 0)),
            bspec(1),                 # s1
            bspec(1),                 # t1
            bspec(kd * F),            # wd
            bspec(1),                 # bd
            bspec(1),                 # s2
            bspec(1),                 # t2
            bspec(F),                 # wp
            bspec(1),                 # bp
        ],
        out_specs=pl.BlockSpec((1, 1, F, L1), lambda j, i: (i, j, 0, 0)),
        scratch_shapes=[pltpu.VMEM((F, L1 + 2 * dmax), jnp.float32)],
        compiler_params=pltpu.CompilerParams(
            dimension_semantics=("parallel", "parallel")),
    )(taps0, w0s, b0s, s1s, t1s, wds, bds, s2s, t2s, wps, bps)


# --------------------------------------------------------------------------
# Pallas forward
# --------------------------------------------------------------------------

def forward_pallas(x, params, sigmoid=False):
    hidden = params['fc_b'].shape[0]
    lstm_out = lstm_fc_pallas(x, params, hidden)       # (B, T, 2H) == (B, C_conv, L_conv)
    first_k = params['branches'][0]['w0'].shape[-1]
    stride = first_k - 1                               # module: first_kernel = downsample + 1
    taps0 = first_conv_taps(lstm_out, first_k, stride)
    out = waveblocks_pallas(taps0, params['branches'])  # (B, out_chans, F, L_out)
    if sigmoid:
        out = jax.nn.sigmoid(out)
    # TODO(synk): AdaptiveAvgPool2d((None, output_size)) epilogue not implemented
    # (output_size=None in this configuration).
    return out


# --------------------------------------------------------------------------
# Pure-JAX reference (structurally different conv path: lax.conv_general_dilated)
# --------------------------------------------------------------------------

def lstm_fc_ref(x, params):
    hidden = params['fc_b'].shape[0]
    B, T, _ = x.shape
    seq = x @ params['fc_w'].T + params['fc_b']
    for layer_ws in params['lstm']:
        dir_outs = []
        for (wih, whh, bih, bhh), reverse in zip(layer_ws, (False, True)):
            b = bih + bhh
            h = jnp.zeros((B, hidden), jnp.float32)
            c = jnp.zeros((B, hidden), jnp.float32)
            ys = [None] * T
            order = range(T - 1, -1, -1) if reverse else range(T)
            for t in order:
                g = seq[:, t, :] @ wih.T + h @ whh.T + b
                i = jax.nn.sigmoid(g[:, :hidden])
                f = jax.nn.sigmoid(g[:, hidden:2 * hidden])
                gg = jnp.tanh(g[:, 2 * hidden:3 * hidden])
                o = jax.nn.sigmoid(g[:, 3 * hidden:])
                c = f * c + i * gg
                h = o * jnp.tanh(c)
                ys[t] = h
            dir_outs.append(jnp.stack(ys, axis=1))
        seq = jnp.concatenate(dir_outs, axis=-1)
    return seq


def conv1d_ref(x, w, b, stride=1, dilation=1, padding=0):
    y = lax.conv_general_dilated(
        x, w, (stride,), [(padding, padding)], rhs_dilation=(dilation,),
        dimension_numbers=('NCH', 'OIH', 'NCH'),
        precision=lax.Precision.HIGHEST)
    return y + b[None, :, None]


def waveblock_ref(x, br):
    first_k = br['w0'].shape[-1]
    stride = first_k - 1
    h = conv1d_ref(x, br['w0'], br['b0'], stride=stride, padding=(first_k - 1) // 2)
    res = h
    for j, lyr in enumerate(br['layers']):
        d = 2 ** j
        kd = lyr['wd'].shape[-1]
        t = jnp.maximum(h * lyr['bn1_scale'][None, :, None]
                        + lyr['bn1_shift'][None, :, None], 0.0)
        t = conv1d_ref(t, lyr['wd'], lyr['bd'], dilation=d,
                       padding=d * ((kd - 1) // 2))
        t = jnp.maximum(t * lyr['bn2_scale'][None, :, None]
                        + lyr['bn2_shift'][None, :, None], 0.0)
        t = conv1d_ref(t, lyr['wp'], lyr['bp'])
        h = t
        res = res + t
    return res


def forward_ref(x, params, sigmoid=False):
    lstm_out = lstm_fc_ref(x, params)
    outs = [waveblock_ref(lstm_out, br) for br in params['branches']]
    out = jnp.stack(outs, axis=1)
    if sigmoid:
        out = jax.nn.sigmoid(out)
    return out


# --------------------------------------------------------------------------
# Parameter construction
# --------------------------------------------------------------------------

def init_params(key, in_channels, hidden, filters, wave_layers, kernel_size, downsample):
    kfc, klstm, kbr = jax.random.split(key, 3)

    k1, k2 = jax.random.split(kfc)
    params = {
        'fc_w': jax.random.normal(k1, (hidden, in_channels), jnp.float32)
                / jnp.sqrt(in_channels),
        'fc_b': 0.1 * jax.random.normal(k2, (hidden,), jnp.float32),
    }

    lstm = []
    lkeys = iter(jax.random.split(klstm, 16))
    for layer in range(2):
        in_sz = hidden if layer == 0 else 2 * hidden
        dirs = []
        for _ in range(2):
            wih = (jax.random.normal(next(lkeys), (4 * hidden, in_sz), jnp.float32)
                   / jnp.sqrt(in_sz))
            whh = (jax.random.normal(next(lkeys), (4 * hidden, hidden), jnp.float32)
                   / jnp.sqrt(hidden))
            bih = 0.1 * jax.random.normal(next(lkeys), (4 * hidden,), jnp.float32)
            bhh = 0.1 * jax.random.normal(next(lkeys), (4 * hidden,), jnp.float32)
            dirs.append((wih, whh, bih, bhh))
        lstm.append(dirs)
    params['lstm'] = lstm

    first_k = downsample + 1
    branches = []
    for nl, bk in zip(wave_layers, jax.random.split(kbr, len(wave_layers))):
        keys = iter(jax.random.split(bk, 2 + 12 * nl))
        br = {
            'w0': (jax.random.normal(next(keys), (filters, in_channels, first_k),
                                     jnp.float32)
                   / jnp.sqrt(in_channels * first_k)),
            'b0': 0.1 * jax.random.normal(next(keys), (filters,), jnp.float32),
            'layers': [],
        }
        for _ in range(nl):
            def bn_fold():
                gamma = 1.0 + 0.1 * jax.random.normal(next(keys), (filters,), jnp.float32)
                beta = 0.1 * jax.random.normal(next(keys), (filters,), jnp.float32)
                mean = 0.1 * jax.random.normal(next(keys), (filters,), jnp.float32)
                var = 1.0 + 0.5 * jax.random.uniform(next(keys), (filters,), jnp.float32)
                scale = gamma / jnp.sqrt(var + EPS)
                return scale, beta - mean * scale
            s1, t1 = bn_fold()
            wd = (jax.random.normal(next(keys), (filters, filters, kernel_size),
                                    jnp.float32)
                  / jnp.sqrt(filters * kernel_size))
            bd = 0.1 * jax.random.normal(next(keys), (filters,), jnp.float32)
            s2, t2 = bn_fold()
            wp = (jax.random.normal(next(keys), (filters, filters, 1), jnp.float32)
                  / jnp.sqrt(filters))
            bp = 0.1 * jax.random.normal(next(keys), (filters,), jnp.float32)
            br['layers'].append(dict(bn1_scale=s1, bn1_shift=t1, wd=wd, bd=bd,
                                     bn2_scale=s2, bn2_shift=t2, wp=wp, bp=bp))
        branches.append(br)
    params['branches'] = branches
    return params


# --------------------------------------------------------------------------
# main
# --------------------------------------------------------------------------

if __name__ == "__main__":
    # Small-but-faithful config.
    B = 2
    IN_CHANNELS = 4          # fc input features == Conv1d in_channels
    SEQ_LEN = IN_CHANNELS    # forward() feeds the LSTM output (B, T, 2H) directly into
                             # Conv1d(in_channels, ...), so T must equal in_channels
                             # when separate_channel=False.
    HIDDEN = 64              # LSTM hidden size (2 layers, bidirectional)
    BASE_FILTERS = 16        # spectrogram height
    WAVE_LAYERS = (3, 2, 2)  # out_chans = 3, dilations up to 4
    KERNEL_SIZE = 3
    DOWNSAMPLE = 4           # first conv: kernel 5, stride 4, pad 2
    SIGMOID = False

    key = jax.random.PRNGKey(0)
    kx, kp = jax.random.split(key)
    x = jax.random.normal(kx, (B, SEQ_LEN, IN_CHANNELS), jnp.float32)
    params = init_params(kp, IN_CHANNELS, HIDDEN, BASE_FILTERS, WAVE_LAYERS,
                         KERNEL_SIZE, DOWNSAMPLE)

    out = forward_pallas(x, params, sigmoid=SIGMOID)
    out = jax.block_until_ready(out)

    ref = forward_ref(x, params, sigmoid=SIGMOID)
    err = float(jnp.max(jnp.abs(out - ref)))

    L_CONV = 2 * HIDDEN
    L_OUT = (L_CONV + 2 * (DOWNSAMPLE // 2) - (DOWNSAMPLE + 1)) // DOWNSAMPLE + 1
    assert out.shape == (B, len(WAVE_LAYERS), BASE_FILTERS, L_OUT), out.shape
    assert err < 5e-3, f"max abs err {err}"
    print("KERNEL_OK")
</pallas_src>

<mosaic_0001>
module attributes {stable_mosaic.version = 11 : i64} {
  func.func @kernel(%arg0: memref<8x4xf32, #tpu.memory_space<vmem>>, %arg1: memref<4x64xf32, #tpu.memory_space<vmem>>, %arg2: memref<1x64xf32, #tpu.memory_space<vmem>>, %arg3: memref<64x512xf32, #tpu.memory_space<vmem>>, %arg4: memref<2x64x256xf32, #tpu.memory_space<vmem>>, %arg5: memref<1x512xf32, #tpu.memory_space<vmem>>, %arg6: memref<128x512xf32, #tpu.memory_space<vmem>>, %arg7: memref<2x64x256xf32, #tpu.memory_space<vmem>>, %arg8: memref<1x512xf32, #tpu.memory_space<vmem>>, %arg9: memref<8x128xf32, #tpu.memory_space<vmem>>) attributes {dimension_semantics = [], scalar_prefetch = 0 : i64, scratch_operands = 0 : i64, tpu.core_type = #tpu.core_type<tc>} {
    %c0 = arith.constant 0 : index
    %c0_0 = arith.constant 0 : index
    %0 = vector.load %arg0[%c0, %c0_0] : memref<8x4xf32, #tpu.memory_space<vmem>>, vector<8x4xf32>
    %c0_1 = arith.constant 0 : index
    %c0_2 = arith.constant 0 : index
    %1 = vector.load %arg1[%c0_1, %c0_2] : memref<4x64xf32, #tpu.memory_space<vmem>>, vector<4x64xf32>
    %cst = arith.constant dense<0.000000e+00> : vector<8x64xf32>
    %2 = tpu.matmul %0, %1, %cst {dimension_numbers = #tpu.dot_dimension_numbers<[1], [0], [0], [1], [0, 0, 1, 1], [], []>} : vector<8x4xf32>, vector<4x64xf32>, vector<8x64xf32> -> vector<8x64xf32>
    %c0_3 = arith.constant 0 : index
    %c0_4 = arith.constant 0 : index
    %3 = vector.load %arg2[%c0_3, %c0_4] : memref<1x64xf32, #tpu.memory_space<vmem>>, vector<1x64xf32>
    %4 = vector.broadcast %3 : vector<1x64xf32> to vector<8x64xf32>
    %5 = arith.addf %2, %4 : vector<8x64xf32>
    %cst_5 = arith.constant 0.000000e+00 : f32
    %6 = vector.broadcast %cst_5 : f32 to vector<2x64xf32>
    %c0_6 = arith.constant 0 : index
    %c0_7 = arith.constant 0 : index
    %7 = vector.load %arg3[%c0_6, %c0_7] : memref<64x512xf32, #tpu.memory_space<vmem>>, vector<64x512xf32>
    %cst_8 = arith.constant dense<0.000000e+00> : vector<8x512xf32>
    %8 = tpu.matmul %5, %7, %cst_8 {dimension_numbers = #tpu.dot_dimension_numbers<[1], [0], [0], [1], [0, 0, 1, 1], [], []>} : vector<8x64xf32>, vector<64x512xf32>, vector<8x512xf32> -> vector<8x512xf32>
    %c0_9 = arith.constant 0 : index
    %c0_10 = arith.constant 0 : index
    %9 = vector.load %arg5[%c0_9, %c0_10] : memref<1x512xf32, #tpu.memory_space<vmem>>, vector<1x512xf32>
    %10 = vector.broadcast %9 : vector<1x512xf32> to vector<8x512xf32>
    %11 = arith.addf %8, %10 : vector<8x512xf32>
    %c0_11 = arith.constant 0 : index
    %c0_12 = arith.constant 0 : index
    %c0_13 = arith.constant 0 : index
    %12 = vector.load %arg4[%c0_11, %c0_12, %c0_13] : memref<2x64x256xf32, #tpu.memory_space<vmem>>, vector<1x64x256xf32>
    %13 = vector.shape_cast %12 : vector<1x64x256xf32> to vector<64x256xf32>
    %c1 = arith.constant 1 : index
    %c0_14 = arith.constant 0 : index
    %c0_15 = arith.constant 0 : index
    %14 = vector.load %arg4[%c1, %c0_14, %c0_15] : memref<2x64x256xf32, #tpu.memory_space<vmem>>, vector<1x64x256xf32>
    %15 = vector.shape_cast %14 : vector<1x64x256xf32> to vector<64x256xf32>
    %16 = vector.extract_strided_slice %11 {offsets = [0, 0], sizes = [2, 256], strides = [1, 1]} : vector<8x512xf32> to vector<2x256xf32>
    %cst_16 = arith.constant dense<0.000000e+00> : vector<2x256xf32>
    %17 = tpu.matmul %6, %13, %cst_16 {dimension_numbers = #tpu.dot_dimension_numbers<[1], [0], [0], [1], [0, 0, 1, 1], [], []>} : vector<2x64xf32>, vector<64x256xf32>, vector<2x256xf32> -> vector<2x256xf32>
    %18 = arith.addf %16, %17 : vector<2x256xf32>
    %19 = vector.extract_strided_slice %18 {offsets = [0, 0], sizes = [2, 64], strides = [1, 1]} : vector<2x256xf32> to vector<2x64xf32>
    %cst_17 = arith.constant 0.000000e+00 : f32
    %20 = vector.broadcast %cst_17 : f32 to vector<2x64xf32>
    %21 = arith.subf %20, %19 : vector<2x64xf32>
    %22 = math.exp %21 : vector<2x64xf32>
    %cst_18 = arith.constant 1.000000e+00 : f32
    %23 = vector.broadcast %cst_18 : f32 to vector<2x64xf32>
    %24 = arith.addf %23, %22 : vector<2x64xf32>
    %cst_19 = arith.constant 1.000000e+00 : f32
    %25 = vector.broadcast %cst_19 : f32 to vector<2x64xf32>
    %26 = arith.divf %25, %24 : vector<2x64xf32>
    %27 = vector.extract_strided_slice %18 {offsets = [0, 64], sizes = [2, 64], strides = [1, 1]} : vector<2x256xf32> to vector<2x64xf32>
    %cst_20 = arith.constant 0.000000e+00 : f32
    %28 = vector.broadcast %cst_20 : f32 to vector<2x64xf32>
    %29 = arith.subf %28, %27 : vector<2x64xf32>
    %30 = math.exp %29 : vector<2x64xf32>
    %cst_21 = arith.constant 1.000000e+00 : f32
    %31 = vector.broadcast %cst_21 : f32 to vector<2x64xf32>
    %32 = arith.addf %31, %30 : vector<2x64xf32>
    %cst_22 = arith.constant 1.000000e+00 : f32
    %33 = vector.broadcast %cst_22 : f32 to vector<2x64xf32>
    %34 = arith.divf %33, %32 : vector<2x64xf32>
    %35 = vector.extract_strided_slice %18 {offsets = [0, 128], sizes = [2, 64], strides = [1, 1]} : vector<2x256xf32> to vector<2x64xf32>
    %36 = math.tanh %35 : vector<2x64xf32>
    %37 = vector.extract_strided_slice %18 {offsets = [0, 192], sizes = [2, 64], strides = [1, 1]} : vector<2x256xf32> to vector<2x64xf32>
    %cst_23 = arith.constant 0.000000e+00 : f32
    %38 = vector.broadcast %cst_23 : f32 to vector<2x64xf32>
    %39 = arith.subf %38, %37 : vector<2x64xf32>
    %40 = math.exp %39 : vector<2x64xf32>
    %cst_24 = arith.constant 1.000000e+00 : f32
    %41 = vector.broadcast %cst_24 : f32 to vector<2x64xf32>
    %42 = arith.addf %41, %40 : vector<2x64xf32>
    %cst_25 = arith.constant 1.000000e+00 : f32
    %43 = vector.broadcast %cst_25 : f32 to vector<2x64xf32>
    %44 = arith.divf %43, %42 : vector<2x64xf32>
    %45 = arith.mulf %34, %6 : vector<2x64xf32>
    %46 = arith.mulf %26, %36 : vector<2x64xf32>
    %47 = arith.addf %45, %46 : vector<2x64xf32>
    %48 = math.tanh %47 : vector<2x64xf32>
    %49 = arith.mulf %44, %48 : vector<2x64xf32>
    %50 = vector.extract_strided_slice %11 {offsets = [2, 0], sizes = [2, 256], strides = [1, 1]} : vector<8x512xf32> to vector<2x256xf32>
    %cst_26 = arith.constant dense<0.000000e+00> : vector<2x256xf32>
    %51 = tpu.matmul %49, %13, %cst_26 {dimension_numbers = #tpu.dot_dimension_numbers<[1], [0], [0], [1], [0, 0, 1, 1], [], []>} : vector<2x64xf32>, vector<64x256xf32>, vector<2x256xf32> -> vector<2x256xf32>
    %52 = arith.addf %50, %51 : vector<2x256xf32>
    %53 = vector.extract_strided_slice %52 {offsets = [0, 0], sizes = [2, 64], strides = [1, 1]} : vector<2x256xf32> to vector<2x64xf32>
    %cst_27 = arith.constant 0.000000e+00 : f32
    %54 = vector.broadcast %cst_27 : f32 to vector<2x64xf32>
    %55 = arith.subf %54, %53 : vector<2x64xf32>
    %56 = math.exp %55 : vector<2x64xf32>
    %cst_28 = arith.constant 1.000000e+00 : f32
    %57 = vector.broadcast %cst_28 : f32 to vector<2x64xf32>
    %58 = arith.addf %57, %56 : vector<2x64xf32>
    %cst_29 = arith.constant 1.000000e+00 : f32
    %59 = vector.broadcast %cst_29 : f32 to vector<2x64xf32>
    %60 = arith.divf %59, %58 : vector<2x64xf32>
    %61 = vector.extract_strided_slice %52 {offsets = [0, 64], sizes = [2, 64], strides = [1, 1]} : vector<2x256xf32> to vector<2x64xf32>
    %cst_30 = arith.constant 0.000000e+00 : f32
    %62 = vector.broadcast %cst_30 : f32 to vector<2x64xf32>
    %63 = arith.subf %62, %61 : vector<2x64xf32>
    %64 = math.exp %63 : vector<2x64xf32>
    %cst_31 = arith.constant 1.000000e+00 : f32
    %65 = vector.broadcast %cst_31 : f32 to vector<2x64xf32>
    %66 = arith.addf %65, %64 : vector<2x64xf32>
    %cst_32 = arith.constant 1.000000e+00 : f32
    %67 = vector.broadcast %cst_32 : f32 to vector<2x64xf32>
    %68 = arith.divf %67, %66 : vector<2x64xf32>
    %69 = vector.extract_strided_slice %52 {offsets = [0, 128], sizes = [2, 64], strides = [1, 1]} : vector<2x256xf32> to vector<2x64xf32>
    %70 = math.tanh %69 : vector<2x64xf32>
    %71 = vector.extract_strided_slice %52 {offsets = [0, 192], sizes = [2, 64], strides = [1, 1]} : vector<2x256xf32> to vector<2x64xf32>
    %cst_33 = arith.constant 0.000000e+00 : f32
    %72 = vector.broadcast %cst_33 : f32 to vector<2x64xf32>
    %73 = arith.subf %72, %71 : vector<2x64xf32>
    %74 = math.exp %73 : vector<2x64xf32>
    %cst_34 = arith.constant 1.000000e+00 : f32
    %75 = vector.broadcast %cst_34 : f32 to vector<2x64xf32>
    %76 = arith.addf %75, %74 : vector<2x64xf32>
    %cst_35 = arith.constant 1.000000e+00 : f32
    %77 = vector.broadcast %cst_35 : f32 to vector<2x64xf32>
    %78 = arith.divf %77, %76 : vector<2x64xf32>
    %79 = arith.mulf %68, %47 : vector<2x64xf32>
    %80 = arith.mulf %60, %70 : vector<2x64xf32>
    %81 = arith.addf %79, %80 : vector<2x64xf32>
    %82 = math.tanh %81 : vector<2x64xf32>
    %83 = arith.mulf %78, %82 : vector<2x64xf32>
    %84 = vector.extract_strided_slice %11 {offsets = [4, 0], sizes = [2, 256], strides = [1, 1]} : vector<8x512xf32> to vector<2x256xf32>
    %cst_36 = arith.constant dense<0.000000e+00> : vector<2x256xf32>
    %85 = tpu.matmul %83, %13, %cst_36 {dimension_numbers = #tpu.dot_dimension_numbers<[1], [0], [0], [1], [0, 0, 1, 1], [], []>} : vector<2x64xf32>, vector<64x256xf32>, vector<2x256xf32> -> vector<2x256xf32>
    %86 = arith.addf %84, %85 : vector<2x256xf32>
    %87 = vector.extract_strided_slice %86 {offsets = [0, 0], sizes = [2, 64], strides = [1, 1]} : vector<2x256xf32> to vector<2x64xf32>
    %cst_37 = arith.constant 0.000000e+00 : f32
    %88 = vector.broadcast %cst_37 : f32 to vector<2x64xf32>
    %89 = arith.subf %88, %87 : vector<2x64xf32>
    %90 = math.exp %89 : vector<2x64xf32>
    %cst_38 = arith.constant 1.000000e+00 : f32
    %91 = vector.broadcast %cst_38 : f32 to vector<2x64xf32>
    %92 = arith.addf %91, %90 : vector<2x64xf32>
    %cst_39 = arith.constant 1.000000e+00 : f32
    %93 = vector.broadcast %cst_39 : f32 to vector<2x64xf32>
    %94 = arith.divf %93, %92 : vector<2x64xf32>
    %95 = vector.extract_strided_slice %86 {offsets = [0, 64], sizes = [2, 64], strides = [1, 1]} : vector<2x256xf32> to vector<2x64xf32>
    %cst_40 = arith.constant 0.000000e+00 : f32
    %96 = vector.broadcast %cst_40 : f32 to vector<2x64xf32>
    %97 = arith.subf %96, %95 : vector<2x64xf32>
    %98 = math.exp %97 : vector<2x64xf32>
    %cst_41 = arith.constant 1.000000e+00 : f32
    %99 = vector.broadcast %cst_41 : f32 to vector<2x64xf32>
    %100 = arith.addf %99, %98 : vector<2x64xf32>
    %cst_42 = arith.constant 1.000000e+00 : f32
    %101 = vector.broadcast %cst_42 : f32 to vector<2x64xf32>
    %102 = arith.divf %101, %100 : vector<2x64xf32>
    %103 = vector.extract_strided_slice %86 {offsets = [0, 128], sizes = [2, 64], strides = [1, 1]} : vector<2x256xf32> to vector<2x64xf32>
    %104 = math.tanh %103 : vector<2x64xf32>
    %105 = vector.extract_strided_slice %86 {offsets = [0, 192], sizes = [2, 64], strides = [1, 1]} : vector<2x256xf32> to vector<2x64xf32>
    %cst_43 = arith.constant 0.000000e+00 : f32
    %106 = vector.broadcast %cst_43 : f32 to vector<2x64xf32>
    %107 = arith.subf %106, %105 : vector<2x64xf32>
    %108 = math.exp %107 : vector<2x64xf32>
    %cst_44 = arith.constant 1.000000e+00 : f32
    %109 = vector.broadcast %cst_44 : f32 to vector<2x64xf32>
    %110 = arith.addf %109, %108 : vector<2x64xf32>
    %cst_45 = arith.constant 1.000000e+00 : f32
    %111 = vector.broadcast %cst_45 : f32 to vector<2x64xf32>
    %112 = arith.divf %111, %110 : vector<2x64xf32>
    %113 = arith.mulf %102, %81 : vector<2x64xf32>
    %114 = arith.mulf %94, %104 : vector<2x64xf32>
    %115 = arith.addf %113, %114 : vector<2x64xf32>
    %116 = math.tanh %115 : vector<2x64xf32>
    %117 = arith.mulf %112, %116 : vector<2x64xf32>
    %118 = vector.extract_strided_slice %11 {offsets = [6, 0], sizes = [2, 256], strides = [1, 1]} : vector<8x512xf32> to vector<2x256xf32>
    %cst_46 = arith.constant dense<0.000000e+00> : vector<2x256xf32>
    %119 = tpu.matmul %117, %13, %cst_46 {dimension_numbers = #tpu.dot_dimension_numbers<[1], [0], [0], [1], [0, 0, 1, 1], [], []>} : vector<2x64xf32>, vector<64x256xf32>, vector<2x256xf32> -> vector<2x256xf32>
    %120 = arith.addf %118, %119 : vector<2x256xf32>
    %121 = vector.extract_strided_slice %120 {offsets = [0, 0], sizes = [2, 64], strides = [1, 1]} : vector<2x256xf32> to vector<2x64xf32>
    %cst_47 = arith.constant 0.000000e+00 : f32
    %122 = vector.broadcast %cst_47 : f32 to vector<2x64xf32>
    %123 = arith.subf %122, %121 : vector<2x64xf32>
    %124 = math.exp %123 : vector<2x64xf32>
    %cst_48 = arith.constant 1.000000e+00 : f32
    %125 = vector.broadcast %cst_48 : f32 to vector<2x64xf32>
    %126 = arith.addf %125, %124 : vector<2x64xf32>
    %cst_49 = arith.constant 1.000000e+00 : f32
    %127 = vector.broadcast %cst_49 : f32 to vector<2x64xf32>
    %128 = arith.divf %127, %126 : vector<2x64xf32>
    %129 = vector.extract_strided_slice %120 {offsets = [0, 64], sizes = [2, 64], strides = [1, 1]} : vector<2x256xf32> to vector<2x64xf32>
    %cst_50 = arith.constant 0.000000e+00 : f32
    %130 = vector.broadcast %cst_50 : f32 to vector<2x64xf32>
    %131 = arith.subf %130, %129 : vector<2x64xf32>
    %132 = math.exp %131 : vector<2x64xf32>
    %cst_51 = arith.constant 1.000000e+00 : f32
    %133 = vector.broadcast %cst_51 : f32 to vector<2x64xf32>
    %134 = arith.addf %133, %132 : vector<2x64xf32>
    %cst_52 = arith.constant 1.000000e+00 : f32
    %135 = vector.broadcast %cst_52 : f32 to vector<2x64xf32>
    %136 = arith.divf %135, %134 : vector<2x64xf32>
    %137 = vector.extract_strided_slice %120 {offsets = [0, 128], sizes = [2, 64], strides = [1, 1]} : vector<2x256xf32> to vector<2x64xf32>
    %138 = math.tanh %137 : vector<2x64xf32>
    %139 = vector.extract_strided_slice %120 {offsets = [0, 192], sizes = [2, 64], strides = [1, 1]} : vector<2x256xf32> to vector<2x64xf32>
    %cst_53 = arith.constant 0.000000e+00 : f32
    %140 = vector.broadcast %cst_53 : f32 to vector<2x64xf32>
    %141 = arith.subf %140, %139 : vector<2x64xf32>
    %142 = math.exp %141 : vector<2x64xf32>
    %cst_54 = arith.constant 1.000000e+00 : f32
    %143 = vector.broadcast %cst_54 : f32 to vector<2x64xf32>
    %144 = arith.addf %143, %142 : vector<2x64xf32>
    %cst_55 = arith.constant 1.000000e+00 : f32
    %145 = vector.broadcast %cst_55 : f32 to vector<2x64xf32>
    %146 = arith.divf %145, %144 : vector<2x64xf32>
    %147 = arith.mulf %136, %115 : vector<2x64xf32>
    %148 = arith.mulf %128, %138 : vector<2x64xf32>
    %149 = arith.addf %147, %148 : vector<2x64xf32>
    %150 = math.tanh %149 : vector<2x64xf32>
    %151 = arith.mulf %146, %150 : vector<2x64xf32>
    %152 = vector.extract_strided_slice %11 {offsets = [6, 256], sizes = [2, 256], strides = [1, 1]} : vector<8x512xf32> to vector<2x256xf32>
    %cst_56 = arith.constant dense<0.000000e+00> : vector<2x256xf32>
    %153 = tpu.matmul %6, %15, %cst_56 {dimension_numbers = #tpu.dot_dimension_numbers<[1], [0], [0], [1], [0, 0, 1, 1], [], []>} : vector<2x64xf32>, vector<64x256xf32>, vector<2x256xf32> -> vector<2x256xf32>
    %154 = arith.addf %152, %153 : vector<2x256xf32>
    %155 = vector.extract_strided_slice %154 {offsets = [0, 0], sizes = [2, 64], strides = [1, 1]} : vector<2x256xf32> to vector<2x64xf32>
    %cst_57 = arith.constant 0.000000e+00 : f32
    %156 = vector.broadcast %cst_57 : f32 to vector<2x64xf32>
    %157 = arith.subf %156, %155 : vector<2x64xf32>
    %158 = math.exp %157 : vector<2x64xf32>
    %cst_58 = arith.constant 1.000000e+00 : f32
    %159 = vector.broadcast %cst_58 : f32 to vector<2x64xf32>
    %160 = arith.addf %159, %158 : vector<2x64xf32>
    %cst_59 = arith.constant 1.000000e+00 : f32
    %161 = vector.broadcast %cst_59 : f32 to vector<2x64xf32>
    %162 = arith.divf %161, %160 : vector<2x64xf32>
    %163 = vector.extract_strided_slice %154 {offsets = [0, 64], sizes = [2, 64], strides = [1, 1]} : vector<2x256xf32> to vector<2x64xf32>
    %cst_60 = arith.constant 0.000000e+00 : f32
    %164 = vector.broadcast %cst_60 : f32 to vector<2x64xf32>
    %165 = arith.subf %164, %163 : vector<2x64xf32>
    %166 = math.exp %165 : vector<2x64xf32>
    %cst_61 = arith.constant 1.000000e+00 : f32
    %167 = vector.broadcast %cst_61 : f32 to vector<2x64xf32>
    %168 = arith.addf %167, %166 : vector<2x64xf32>
    %cst_62 = arith.constant 1.000000e+00 : f32
    %169 = vector.broadcast %cst_62 : f32 to vector<2x64xf32>
    %170 = arith.divf %169, %168 : vector<2x64xf32>
    %171 = vector.extract_strided_slice %154 {offsets = [0, 128], sizes = [2, 64], strides = [1, 1]} : vector<2x256xf32> to vector<2x64xf32>
    %172 = math.tanh %171 : vector<2x64xf32>
    %173 = vector.extract_strided_slice %154 {offsets = [0, 192], sizes = [2, 64], strides = [1, 1]} : vector<2x256xf32> to vector<2x64xf32>
    %cst_63 = arith.constant 0.000000e+00 : f32
    %174 = vector.broadcast %cst_63 : f32 to vector<2x64xf32>
    %175 = arith.subf %174, %173 : vector<2x64xf32>
    %176 = math.exp %175 : vector<2x64xf32>
    %cst_64 = arith.constant 1.000000e+00 : f32
    %177 = vector.broadcast %cst_64 : f32 to vector<2x64xf32>
    %178 = arith.addf %177, %176 : vector<2x64xf32>
    %cst_65 = arith.constant 1.000000e+00 : f32
    %179 = vector.broadcast %cst_65 : f32 to vector<2x64xf32>
    %180 = arith.divf %179, %178 : vector<2x64xf32>
    %181 = arith.mulf %170, %6 : vector<2x64xf32>
    %182 = arith.mulf %162, %172 : vector<2x64xf32>
    %183 = arith.addf %181, %182 : vector<2x64xf32>
    %184 = math.tanh %183 : vector<2x64xf32>
    %185 = arith.mulf %180, %184 : vector<2x64xf32>
    %186 = vector.extract_strided_slice %11 {offsets = [4, 256], sizes = [2, 256], strides = [1, 1]} : vector<8x512xf32> to vector<2x256xf32>
    %cst_66 = arith.constant dense<0.000000e+00> : vector<2x256xf32>
    %187 = tpu.matmul %185, %15, %cst_66 {dimension_numbers = #tpu.dot_dimension_numbers<[1], [0], [0], [1], [0, 0, 1, 1], [], []>} : vector<2x64xf32>, vector<64x256xf32>, vector<2x256xf32> -> vector<2x256xf32>
    %188 = arith.addf %186, %187 : vector<2x256xf32>
    %189 = vector.extract_strided_slice %188 {offsets = [0, 0], sizes = [2, 64], strides = [1, 1]} : vector<2x256xf32> to vector<2x64xf32>
    %cst_67 = arith.constant 0.000000e+00 : f32
    %190 = vector.broadcast %cst_67 : f32 to vector<2x64xf32>
    %191 = arith.subf %190, %189 : vector<2x64xf32>
    %192 = math.exp %191 : vector<2x64xf32>
    %cst_68 = arith.constant 1.000000e+00 : f32
    %193 = vector.broadcast %cst_68 : f32 to vector<2x64xf32>
    %194 = arith.addf %193, %192 : vector<2x64xf32>
    %cst_69 = arith.constant 1.000000e+00 : f32
    %195 = vector.broadcast %cst_69 : f32 to vector<2x64xf32>
    %196 = arith.divf %195, %194 : vector<2x64xf32>
    %197 = vector.extract_strided_slice %188 {offsets = [0, 64], sizes = [2, 64], strides = [1, 1]} : vector<2x256xf32> to vector<2x64xf32>
    %cst_70 = arith.constant 0.000000e+00 : f32
    %198 = vector.broadcast %cst_70 : f32 to vector<2x64xf32>
    %199 = arith.subf %198, %197 : vector<2x64xf32>
    %200 = math.exp %199 : vector<2x64xf32>
    %cst_71 = arith.constant 1.000000e+00 : f32
    %201 = vector.broadcast %cst_71 : f32 to vector<2x64xf32>
    %202 = arith.addf %201, %200 : vector<2x64xf32>
    %cst_72 = arith.constant 1.000000e+00 : f32
    %203 = vector.broadcast %cst_72 : f32 to vector<2x64xf32>
    %204 = arith.divf %203, %202 : vector<2x64xf32>
    %205 = vector.extract_strided_slice %188 {offsets = [0, 128], sizes = [2, 64], strides = [1, 1]} : vector<2x256xf32> to vector<2x64xf32>
    %206 = math.tanh %205 : vector<2x64xf32>
    %207 = vector.extract_strided_slice %188 {offsets = [0, 192], sizes = [2, 64], strides = [1, 1]} : vector<2x256xf32> to vector<2x64xf32>
    %cst_73 = arith.constant 0.000000e+00 : f32
    %208 = vector.broadcast %cst_73 : f32 to vector<2x64xf32>
    %209 = arith.subf %208, %207 : vector<2x64xf32>
    %210 = math.exp %209 : vector<2x64xf32>
    %cst_74 = arith.constant 1.000000e+00 : f32
    %211 = vector.broadcast %cst_74 : f32 to vector<2x64xf32>
    %212 = arith.addf %211, %210 : vector<2x64xf32>
    %cst_75 = arith.constant 1.000000e+00 : f32
    %213 = vector.broadcast %cst_75 : f32 to vector<2x64xf32>
    %214 = arith.divf %213, %212 : vector<2x64xf32>
    %215 = arith.mulf %204, %183 : vector<2x64xf32>
    %216 = arith.mulf %196, %206 : vector<2x64xf32>
    %217 = arith.addf %215, %216 : vector<2x64xf32>
    %218 = math.tanh %217 : vector<2x64xf32>
    %219 = arith.mulf %214, %218 : vector<2x64xf32>
    %220 = vector.extract_strided_slice %11 {offsets = [2, 256], sizes = [2, 256], strides = [1, 1]} : vector<8x512xf32> to vector<2x256xf32>
    %cst_76 = arith.constant dense<0.000000e+00> : vector<2x256xf32>
    %221 = tpu.matmul %219, %15, %cst_76 {dimension_numbers = #tpu.dot_dimension_numbers<[1], [0], [0], [1], [0, 0, 1, 1], [], []>} : vector<2x64xf32>, vector<64x256xf32>, vector<2x256xf32> -> vector<2x256xf32>
    %222 = arith.addf %220, %221 : vector<2x256xf32>
    %223 = vector.extract_strided_slice %222 {offsets = [0, 0], sizes = [2, 64], strides = [1, 1]} : vector<2x256xf32> to vector<2x64xf32>
    %cst_77 = arith.constant 0.000000e+00 : f32
    %224 = vector.broadcast %cst_77 : f32 to vector<2x64xf32>
    %225 = arith.subf %224, %223 : vector<2x64xf32>
    %226 = math.exp %225 : vector<2x64xf32>
    %cst_78 = arith.constant 1.000000e+00 : f32
    %227 = vector.broadcast %cst_78 : f32 to vector<2x64xf32>
    %228 = arith.addf %227, %226 : vector<2x64xf32>
    %cst_79 = arith.constant 1.000000e+00 : f32
    %229 = vector.broadcast %cst_79 : f32 to vector<2x64xf32>
    %230 = arith.divf %229, %228 : vector<2x64xf32>
    %231 = vector.extract_strided_slice %222 {offsets = [0, 64], sizes = [2, 64], strides = [1, 1]} : vector<2x256xf32> to vector<2x64xf32>
    %cst_80 = arith.constant 0.000000e+00 : f32
    %232 = vector.broadcast %cst_80 : f32 to vector<2x64xf32>
    %233 = arith.subf %232, %231 : vector<2x64xf32>
    %234 = math.exp %233 : vector<2x64xf32>
    %cst_81 = arith.constant 1.000000e+00 : f32
    %235 = vector.broadcast %cst_81 : f32 to vector<2x64xf32>
    %236 = arith.addf %235, %234 : vector<2x64xf32>
    %cst_82 = arith.constant 1.000000e+00 : f32
    %237 = vector.broadcast %cst_82 : f32 to vector<2x64xf32>
    %238 = arith.divf %237, %236 : vector<2x64xf32>
    %239 = vector.extract_strided_slice %222 {offsets = [0, 128], sizes = [2, 64], strides = [1, 1]} : vector<2x256xf32> to vector<2x64xf32>
    %240 = math.tanh %239 : vector<2x64xf32>
    %241 = vector.extract_strided_slice %222 {offsets = [0, 192], sizes = [2, 64], strides = [1, 1]} : vector<2x256xf32> to vector<2x64xf32>
    %cst_83 = arith.constant 0.000000e+00 : f32
    %242 = vector.broadcast %cst_83 : f32 to vector<2x64xf32>
    %243 = arith.subf %242, %241 : vector<2x64xf32>
    %244 = math.exp %243 : vector<2x64xf32>
    %cst_84 = arith.constant 1.000000e+00 : f32
    %245 = vector.broadcast %cst_84 : f32 to vector<2x64xf32>
    %246 = arith.addf %245, %244 : vector<2x64xf32>
    %cst_85 = arith.constant 1.000000e+00 : f32
    %247 = vector.broadcast %cst_85 : f32 to vector<2x64xf32>
    %248 = arith.divf %247, %246 : vector<2x64xf32>
    %249 = arith.mulf %238, %217 : vector<2x64xf32>
    %250 = arith.mulf %230, %240 : vector<2x64xf32>
    %251 = arith.addf %249, %250 : vector<2x64xf32>
    %252 = math.tanh %251 : vector<2x64xf32>
    %253 = arith.mulf %248, %252 : vector<2x64xf32>
    %254 = vector.extract_strided_slice %11 {offsets = [0, 256], sizes = [2, 256], strides = [1, 1]} : vector<8x512xf32> to vector<2x256xf32>
    %cst_86 = arith.constant dense<0.000000e+00> : vector<2x256xf32>
    %255 = tpu.matmul %253, %15, %cst_86 {dimension_numbers = #tpu.dot_dimension_numbers<[1], [0], [0], [1], [0, 0, 1, 1], [], []>} : vector<2x64xf32>, vector<64x256xf32>, vector<2x256xf32> -> vector<2x256xf32>
    %256 = arith.addf %254, %255 : vector<2x256xf32>
    %257 = vector.extract_strided_slice %256 {offsets = [0, 0], sizes = [2, 64], strides = [1, 1]} : vector<2x256xf32> to vector<2x64xf32>
    %cst_87 = arith.constant 0.000000e+00 : f32
    %258 = vector.broadcast %cst_87 : f32 to vector<2x64xf32>
    %259 = arith.subf %258, %257 : vector<2x64xf32>
    %260 = math.exp %259 : vector<2x64xf32>
    %cst_88 = arith.constant 1.000000e+00 : f32
    %261 = vector.broadcast %cst_88 : f32 to vector<2x64xf32>
    %262 = arith.addf %261, %260 : vector<2x64xf32>
    %cst_89 = arith.constant 1.000000e+00 : f32
    %263 = vector.broadcast %cst_89 : f32 to vector<2x64xf32>
    %264 = arith.divf %263, %262 : vector<2x64xf32>
    %265 = vector.extract_strided_slice %256 {offsets = [0, 64], sizes = [2, 64], strides = [1, 1]} : vector<2x256xf32> to vector<2x64xf32>
    %cst_90 = arith.constant 0.000000e+00 : f32
    %266 = vector.broadcast %cst_90 : f32 to vector<2x64xf32>
    %267 = arith.subf %266, %265 : vector<2x64xf32>
    %268 = math.exp %267 : vector<2x64xf32>
    %cst_91 = arith.constant 1.000000e+00 : f32
    %269 = vector.broadcast %cst_91 : f32 to vector<2x64xf32>
    %270 = arith.addf %269, %268 : vector<2x64xf32>
    %cst_92 = arith.constant 1.000000e+00 : f32
    %271 = vector.broadcast %cst_92 : f32 to vector<2x64xf32>
    %272 = arith.divf %271, %270 : vector<2x64xf32>
    %273 = vector.extract_strided_slice %256 {offsets = [0, 128], sizes = [2, 64], strides = [1, 1]} : vector<2x256xf32> to vector<2x64xf32>
    %274 = math.tanh %273 : vector<2x64xf32>
    %275 = vector.extract_strided_slice %256 {offsets = [0, 192], sizes = [2, 64], strides = [1, 1]} : vector<2x256xf32> to vector<2x64xf32>
    %cst_93 = arith.constant 0.000000e+00 : f32
    %276 = vector.broadcast %cst_93 : f32 to vector<2x64xf32>
    %277 = arith.subf %276, %275 : vector<2x64xf32>
    %278 = math.exp %277 : vector<2x64xf32>
    %cst_94 = arith.constant 1.000000e+00 : f32
    %279 = vector.broadcast %cst_94 : f32 to vector<2x64xf32>
    %280 = arith.addf %279, %278 : vector<2x64xf32>
    %cst_95 = arith.constant 1.000000e+00 : f32
    %281 = vector.broadcast %cst_95 : f32 to vector<2x64xf32>
    %282 = arith.divf %281, %280 : vector<2x64xf32>
    %283 = arith.mulf %272, %251 : vector<2x64xf32>
    %284 = arith.mulf %264, %274 : vector<2x64xf32>
    %285 = arith.addf %283, %284 : vector<2x64xf32>
    %286 = math.tanh %285 : vector<2x64xf32>
    %287 = arith.mulf %282, %286 : vector<2x64xf32>
    %288 = tpu.concatenate %49, %287 in 1 : vector<2x64xf32>, vector<2x64xf32> -> vector<2x128xf32>
    %289 = tpu.concatenate %83, %253 in 1 : vector<2x64xf32>, vector<2x64xf32> -> vector<2x128xf32>
    %290 = tpu.concatenate %117, %219 in 1 : vector<2x64xf32>, vector<2x64xf32> -> vector<2x128xf32>
    %291 = tpu.concatenate %151, %185 in 1 : vector<2x64xf32>, vector<2x64xf32> -> vector<2x128xf32>
    %292 = tpu.concatenate %288, %289, %290, %291 in 0 : vector<2x128xf32>, vector<2x128xf32>, vector<2x128xf32>, vector<2x128xf32> -> vector<8x128xf32>
    %c0_96 = arith.constant 0 : index
    %c0_97 = arith.constant 0 : index
    %293 = vector.load %arg6[%c0_96, %c0_97] : memref<128x512xf32, #tpu.memory_space<vmem>>, vector<128x512xf32>
    %cst_98 = arith.constant dense<0.000000e+00> : vector<8x512xf32>
    %294 = tpu.matmul %292, %293, %cst_98 {dimension_numbers = #tpu.dot_dimension_numbers<[1], [0], [0], [1], [0, 0, 1, 1], [], []>} : vector<8x128xf32>, vector<128x512xf32>, vector<8x512xf32> -> vector<8x512xf32>
    %c0_99 = arith.constant 0 : index
    %c0_100 = arith.constant 0 : index
    %295 = vector.load %arg8[%c0_99, %c0_100] : memref<1x512xf32, #tpu.memory_space<vmem>>, vector<1x512xf32>
    %296 = vector.broadcast %295 : vector<1x512xf32> to vector<8x512xf32>
    %297 = arith.addf %294, %296 : vector<8x512xf32>
    %c0_101 = arith.constant 0 : index
    %c0_102 = arith.constant 0 : index
    %c0_103 = arith.constant 0 : index
    %298 = vector.load %arg7[%c0_101, %c0_102, %c0_103] : memref<2x64x256xf32, #tpu.memory_space<vmem>>, vector<1x64x256xf32>
    %299 = vector.shape_cast %298 : vector<1x64x256xf32> to vector<64x256xf32>
    %c1_104 = arith.constant 1 : index
    %c0_105 = arith.constant 0 : index
    %c0_106 = arith.constant 0 : index
    %300 = vector.load %arg7[%c1_104, %c0_105, %c0_106] : memref<2x64x256xf32, #tpu.memory_space<vmem>>, vector<1x64x256xf32>
    %301 = vector.shape_cast %300 : vector<1x64x256xf32> to vector<64x256xf32>
    %302 = vector.extract_strided_slice %297 {offsets = [0, 0], sizes = [2, 256], strides = [1, 1]} : vector<8x512xf32> to vector<2x256xf32>
    %cst_107 = arith.constant dense<0.000000e+00> : vector<2x256xf32>
    %303 = tpu.matmul %6, %299, %cst_107 {dimension_numbers = #tpu.dot_dimension_numbers<[1], [0], [0], [1], [0, 0, 1, 1], [], []>} : vector<2x64xf32>, vector<64x256xf32>, vector<2x256xf32> -> vector<2x256xf32>
    %304 = arith.addf %302, %303 : vector<2x256xf32>
    %305 = vector.extract_strided_slice %304 {offsets = [0, 0], sizes = [2, 64], strides = [1, 1]} : vector<2x256xf32> to vector<2x64xf32>
    %cst_108 = arith.constant 0.000000e+00 : f32
    %306 = vector.broadcast %cst_108 : f32 to vector<2x64xf32>
    %307 = arith.subf %306, %305 : vector<2x64xf32>
    %308 = math.exp %307 : vector<2x64xf32>
    %cst_109 = arith.constant 1.000000e+00 : f32
    %309 = vector.broadcast %cst_109 : f32 to vector<2x64xf32>
    %310 = arith.addf %309, %308 : vector<2x64xf32>
    %cst_110 = arith.constant 1.000000e+00 : f32
    %311 = vector.broadcast %cst_110 : f32 to vector<2x64xf32>
    %312 = arith.divf %311, %310 : vector<2x64xf32>
    %313 = vector.extract_strided_slice %304 {offsets = [0, 64], sizes = [2, 64], strides = [1, 1]} : vector<2x256xf32> to vector<2x64xf32>
    %cst_111 = arith.constant 0.000000e+00 : f32
    %314 = vector.broadcast %cst_111 : f32 to vector<2x64xf32>
    %315 = arith.subf %314, %313 : vector<2x64xf32>
    %316 = math.exp %315 : vector<2x64xf32>
    %cst_112 = arith.constant 1.000000e+00 : f32
    %317 = vector.broadcast %cst_112 : f32 to vector<2x64xf32>
    %318 = arith.addf %317, %316 : vector<2x64xf32>
    %cst_113 = arith.constant 1.000000e+00 : f32
    %319 = vector.broadcast %cst_113 : f32 to vector<2x64xf32>
    %320 = arith.divf %319, %318 : vector<2x64xf32>
    %321 = vector.extract_strided_slice %304 {offsets = [0, 128], sizes = [2, 64], strides = [1, 1]} : vector<2x256xf32> to vector<2x64xf32>
    %322 = math.tanh %321 : vector<2x64xf32>
    %323 = vector.extract_strided_slice %304 {offsets = [0, 192], sizes = [2, 64], strides = [1, 1]} : vector<2x256xf32> to vector<2x64xf32>
    %cst_114 = arith.constant 0.000000e+00 : f32
    %324 = vector.broadcast %cst_114 : f32 to vector<2x64xf32>
    %325 = arith.subf %324, %323 : vector<2x64xf32>
    %326 = math.exp %325 : vector<2x64xf32>
    %cst_115 = arith.constant 1.000000e+00 : f32
    %327 = vector.broadcast %cst_115 : f32 to vector<2x64xf32>
    %328 = arith.addf %327, %326 : vector<2x64xf32>
    %cst_116 = arith.constant 1.000000e+00 : f32
    %329 = vector.broadcast %cst_116 : f32 to vector<2x64xf32>
    %330 = arith.divf %329, %328 : vector<2x64xf32>
    %331 = arith.mulf %320, %6 : vector<2x64xf32>
    %332 = arith.mulf %312, %322 : vector<2x64xf32>
    %333 = arith.addf %331, %332 : vector<2x64xf32>
    %334 = math.tanh %333 : vector<2x64xf32>
    %335 = arith.mulf %330, %334 : vector<2x64xf32>
    %336 = vector.extract_strided_slice %297 {offsets = [2, 0], sizes = [2, 256], strides = [1, 1]} : vector<8x512xf32> to vector<2x256xf32>
    %cst_117 = arith.constant dense<0.000000e+00> : vector<2x256xf32>
    %337 = tpu.matmul %335, %299, %cst_117 {dimension_numbers = #tpu.dot_dimension_numbers<[1], [0], [0], [1], [0, 0, 1, 1], [], []>} : vector<2x64xf32>, vector<64x256xf32>, vector<2x256xf32> -> vector<2x256xf32>
    %338 = arith.addf %336, %337 : vector<2x256xf32>
    %339 = vector.extract_strided_slice %338 {offsets = [0, 0], sizes = [2, 64], strides = [1, 1]} : vector<2x256xf32> to vector<2x64xf32>
    %cst_118 = arith.constant 0.000000e+00 : f32
    %340 = vector.broadcast %cst_118 : f32 to vector<2x64xf32>
    %341 = arith.subf %340, %339 : vector<2x64xf32>
    %342 = math.exp %341 : vector<2x64xf32>
    %cst_119 = arith.constant 1.000000e+00 : f32
    %343 = vector.broadcast %cst_119 : f32 to vector<2x64xf32>
    %344 = arith.addf %343, %342 : vector<2x64xf32>
    %cst_120 = arith.constant 1.000000e+00 : f32
    %345 = vector.broadcast %cst_120 : f32 to vector<2x64xf32>
    %346 = arith.divf %345, %344 : vector<2x64xf32>
    %347 = vector.extract_strided_slice %338 {offsets = [0, 64], sizes = [2, 64], strides = [1, 1]} : vector<2x256xf32> to vector<2x64xf32>
    %cst_121 = arith.constant 0.000000e+00 : f32
    %348 = vector.broadcast %cst_121 : f32 to vector<2x64xf32>
    %349 = arith.subf %348, %347 : vector<2x64xf32>
    %350 = math.exp %349 : vector<2x64xf32>
    %cst_122 = arith.constant 1.000000e+00 : f32
    %351 = vector.broadcast %cst_122 : f32 to vector<2x64xf32>
    %352 = arith.addf %351, %350 : vector<2x64xf32>
    %cst_123 = arith.constant 1.000000e+00 : f32
    %353 = vector.broadcast %cst_123 : f32 to vector<2x64xf32>
    %354 = arith.divf %353, %352 : vector<2x64xf32>
    %355 = vector.extract_strided_slice %338 {offsets = [0, 128], sizes = [2, 64], strides = [1, 1]} : vector<2x256xf32> to vector<2x64xf32>
    %356 = math.tanh %355 : vector<2x64xf32>
    %357 = vector.extract_strided_slice %338 {offsets = [0, 192], sizes = [2, 64], strides = [1, 1]} : vector<2x256xf32> to vector<2x64xf32>
    %cst_124 = arith.constant 0.000000e+00 : f32
    %358 = vector.broadcast %cst_124 : f32 to vector<2x64xf32>
    %359 = arith.subf %358, %357 : vector<2x64xf32>
    %360 = math.exp %359 : vector<2x64xf32>
    %cst_125 = arith.constant 1.000000e+00 : f32
    %361 = vector.broadcast %cst_125 : f32 to vector<2x64xf32>
    %362 = arith.addf %361, %360 : vector<2x64xf32>
    %cst_126 = arith.constant 1.000000e+00 : f32
    %363 = vector.broadcast %cst_126 : f32 to vector<2x64xf32>
    %364 = arith.divf %363, %362 : vector<2x64xf32>
    %365 = arith.mulf %354, %333 : vector<2x64xf32>
    %366 = arith.mulf %346, %356 : vector<2x64xf32>
    %367 = arith.addf %365, %366 : vector<2x64xf32>
    %368 = math.tanh %367 : vector<2x64xf32>
    %369 = arith.mulf %364, %368 : vector<2x64xf32>
    %370 = vector.extract_strided_slice %297 {offsets = [4, 0], sizes = [2, 256], strides = [1, 1]} : vector<8x512xf32> to vector<2x256xf32>
    %cst_127 = arith.constant dense<0.000000e+00> : vector<2x256xf32>
    %371 = tpu.matmul %369, %299, %cst_127 {dimension_numbers = #tpu.dot_dimension_numbers<[1], [0], [0], [1], [0, 0, 1, 1], [], []>} : vector<2x64xf32>, vector<64x256xf32>, vector<2x256xf32> -> vector<2x256xf32>
    %372 = arith.addf %370, %371 : vector<2x256xf32>
    %373 = vector.extract_strided_slice %372 {offsets = [0, 0], sizes = [2, 64], strides = [1, 1]} : vector<2x256xf32> to vector<2x64xf32>
    %cst_128 = arith.constant 0.000000e+00 : f32
    %374 = vector.broadcast %cst_128 : f32 to vector<2x64xf32>
    %375 = arith.subf %374, %373 : vector<2x64xf32>
    %376 = math.exp %375 : vector<2x64xf32>
    %cst_129 = arith.constant 1.000000e+00 : f32
    %377 = vector.broadcast %cst_129 : f32 to vector<2x64xf32>
    %378 = arith.addf %377, %376 : vector<2x64xf32>
    %cst_130 = arith.constant 1.000000e+00 : f32
    %379 = vector.broadcast %cst_130 : f32 to vector<2x64xf32>
    %380 = arith.divf %379, %378 : vector<2x64xf32>
    %381 = vector.extract_strided_slice %372 {offsets = [0, 64], sizes = [2, 64], strides = [1, 1]} : vector<2x256xf32> to vector<2x64xf32>
    %cst_131 = arith.constant 0.000000e+00 : f32
    %382 = vector.broadcast %cst_131 : f32 to vector<2x64xf32>
    %383 = arith.subf %382, %381 : vector<2x64xf32>
    %384 = math.exp %383 : vector<2x64xf32>
    %cst_132 = arith.constant 1.000000e+00 : f32
    %385 = vector.broadcast %cst_132 : f32 to vector<2x64xf32>
    %386 = arith.addf %385, %384 : vector<2x64xf32>
    %cst_133 = arith.constant 1.000000e+00 : f32
    %387 = vector.broadcast %cst_133 : f32 to vector<2x64xf32>
    %388 = arith.divf %387, %386 : vector<2x64xf32>
    %389 = vector.extract_strided_slice %372 {offsets = [0, 128], sizes = [2, 64], strides = [1, 1]} : vector<2x256xf32> to vector<2x64xf32>
    %390 = math.tanh %389 : vector<2x64xf32>
    %391 = vector.extract_strided_slice %372 {offsets = [0, 192], sizes = [2, 64], strides = [1, 1]} : vector<2x256xf32> to vector<2x64xf32>
    %cst_134 = arith.constant 0.000000e+00 : f32
    %392 = vector.broadcast %cst_134 : f32 to vector<2x64xf32>
    %393 = arith.subf %392, %391 : vector<2x64xf32>
    %394 = math.exp %393 : vector<2x64xf32>
    %cst_135 = arith.constant 1.000000e+00 : f32
    %395 = vector.broadcast %cst_135 : f32 to vector<2x64xf32>
    %396 = arith.addf %395, %394 : vector<2x64xf32>
    %cst_136 = arith.constant 1.000000e+00 : f32
    %397 = vector.broadcast %cst_136 : f32 to vector<2x64xf32>
    %398 = arith.divf %397, %396 : vector<2x64xf32>
    %399 = arith.mulf %388, %367 : vector<2x64xf32>
    %400 = arith.mulf %380, %390 : vector<2x64xf32>
    %401 = arith.addf %399, %400 : vector<2x64xf32>
    %402 = math.tanh %401 : vector<2x64xf32>
    %403 = arith.mulf %398, %402 : vector<2x64xf32>
    %404 = vector.extract_strided_slice %297 {offsets = [6, 0], sizes = [2, 256], strides = [1, 1]} : vector<8x512xf32> to vector<2x256xf32>
    %cst_137 = arith.constant dense<0.000000e+00> : vector<2x256xf32>
    %405 = tpu.matmul %403, %299, %cst_137 {dimension_numbers = #tpu.dot_dimension_numbers<[1], [0], [0], [1], [0, 0, 1, 1], [], []>} : vector<2x64xf32>, vector<64x256xf32>, vector<2x256xf32> -> vector<2x256xf32>
    %406 = arith.addf %404, %405 : vector<2x256xf32>
    %407 = vector.extract_strided_slice %406 {offsets = [0, 0], sizes = [2, 64], strides = [1, 1]} : vector<2x256xf32> to vector<2x64xf32>
    %cst_138 = arith.constant 0.000000e+00 : f32
    %408 = vector.broadcast %cst_138 : f32 to vector<2x64xf32>
    %409 = arith.subf %408, %407 : vector<2x64xf32>
    %410 = math.exp %409 : vector<2x64xf32>
    %cst_139 = arith.constant 1.000000e+00 : f32
    %411 = vector.broadcast %cst_139 : f32 to vector<2x64xf32>
    %412 = arith.addf %411, %410 : vector<2x64xf32>
    %cst_140 = arith.constant 1.000000e+00 : f32
    %413 = vector.broadcast %cst_140 : f32 to vector<2x64xf32>
    %414 = arith.divf %413, %412 : vector<2x64xf32>
    %415 = vector.extract_strided_slice %406 {offsets = [0, 64], sizes = [2, 64], strides = [1, 1]} : vector<2x256xf32> to vector<2x64xf32>
    %cst_141 = arith.constant 0.000000e+00 : f32
    %416 = vector.broadcast %cst_141 : f32 to vector<2x64xf32>
    %417 = arith.subf %416, %415 : vector<2x64xf32>
    %418 = math.exp %417 : vector<2x64xf32>
    %cst_142 = arith.constant 1.000000e+00 : f32
    %419 = vector.broadcast %cst_142 : f32 to vector<2x64xf32>
    %420 = arith.addf %419, %418 : vector<2x64xf32>
    %cst_143 = arith.constant 1.000000e+00 : f32
    %421 = vector.broadcast %cst_143 : f32 to vector<2x64xf32>
    %422 = arith.divf %421, %420 : vector<2x64xf32>
    %423 = vector.extract_strided_slice %406 {offsets = [0, 128], sizes = [2, 64], strides = [1, 1]} : vector<2x256xf32> to vector<2x64xf32>
    %424 = math.tanh %423 : vector<2x64xf32>
    %425 = vector.extract_strided_slice %406 {offsets = [0, 192], sizes = [2, 64], strides = [1, 1]} : vector<2x256xf32> to vector<2x64xf32>
    %cst_144 = arith.constant 0.000000e+00 : f32
    %426 = vector.broadcast %cst_144 : f32 to vector<2x64xf32>
    %427 = arith.subf %426, %425 : vector<2x64xf32>
    %428 = math.exp %427 : vector<2x64xf32>
    %cst_145 = arith.constant 1.000000e+00 : f32
    %429 = vector.broadcast %cst_145 : f32 to vector<2x64xf32>
    %430 = arith.addf %429, %428 : vector<2x64xf32>
    %cst_146 = arith.constant 1.000000e+00 : f32
    %431 = vector.broadcast %cst_146 : f32 to vector<2x64xf32>
    %432 = arith.divf %431, %430 : vector<2x64xf32>
    %433 = arith.mulf %422, %401 : vector<2x64xf32>
    %434 = arith.mulf %414, %424 : vector<2x64xf32>
    %435 = arith.addf %433, %434 : vector<2x64xf32>
    %436 = math.tanh %435 : vector<2x64xf32>
    %437 = arith.mulf %432, %436 : vector<2x64xf32>
    %438 = vector.extract_strided_slice %297 {offsets = [6, 256], sizes = [2, 256], strides = [1, 1]} : vector<8x512xf32> to vector<2x256xf32>
    %cst_147 = arith.constant dense<0.000000e+00> : vector<2x256xf32>
    %439 = tpu.matmul %6, %301, %cst_147 {dimension_numbers = #tpu.dot_dimension_numbers<[1], [0], [0], [1], [0, 0, 1, 1], [], []>} : vector<2x64xf32>, vector<64x256xf32>, vector<2x256xf32> -> vector<2x256xf32>
    %440 = arith.addf %438, %439 : vector<2x256xf32>
    %441 = vector.extract_strided_slice %440 {offsets = [0, 0], sizes = [2, 64], strides = [1, 1]} : vector<2x256xf32> to vector<2x64xf32>
    %cst_148 = arith.constant 0.000000e+00 : f32
    %442 = vector.broadcast %cst_148 : f32 to vector<2x64xf32>
    %443 = arith.subf %442, %441 : vector<2x64xf32>
    %444 = math.exp %443 : vector<2x64xf32>
    %cst_149 = arith.constant 1.000000e+00 : f32
    %445 = vector.broadcast %cst_149 : f32 to vector<2x64xf32>
    %446 = arith.addf %445, %444 : vector<2x64xf32>
    %cst_150 = arith.constant 1.000000e+00 : f32
    %447 = vector.broadcast %cst_150 : f32 to vector<2x64xf32>
    %448 = arith.divf %447, %446 : vector<2x64xf32>
    %449 = vector.extract_strided_slice %440 {offsets = [0, 64], sizes = [2, 64], strides = [1, 1]} : vector<2x256xf32> to vector<2x64xf32>
    %cst_151 = arith.constant 0.000000e+00 : f32
    %450 = vector.broadcast %cst_151 : f32 to vector<2x64xf32>
    %451 = arith.subf %450, %449 : vector<2x64xf32>
    %452 = math.exp %451 : vector<2x64xf32>
    %cst_152 = arith.constant 1.000000e+00 : f32
    %453 = vector.broadcast %cst_152 : f32 to vector<2x64xf32>
    %454 = arith.addf %453, %452 : vector<2x64xf32>
    %cst_153 = arith.constant 1.000000e+00 : f32
    %455 = vector.broadcast %cst_153 : f32 to vector<2x64xf32>
    %456 = arith.divf %455, %454 : vector<2x64xf32>
    %457 = vector.extract_strided_slice %440 {offsets = [0, 128], sizes = [2, 64], strides = [1, 1]} : vector<2x256xf32> to vector<2x64xf32>
    %458 = math.tanh %457 : vector<2x64xf32>
    %459 = vector.extract_strided_slice %440 {offsets = [0, 192], sizes = [2, 64], strides = [1, 1]} : vector<2x256xf32> to vector<2x64xf32>
    %cst_154 = arith.constant 0.000000e+00 : f32
    %460 = vector.broadcast %cst_154 : f32 to vector<2x64xf32>
    %461 = arith.subf %460, %459 : vector<2x64xf32>
    %462 = math.exp %461 : vector<2x64xf32>
    %cst_155 = arith.constant 1.000000e+00 : f32
    %463 = vector.broadcast %cst_155 : f32 to vector<2x64xf32>
    %464 = arith.addf %463, %462 : vector<2x64xf32>
    %cst_156 = arith.constant 1.000000e+00 : f32
    %465 = vector.broadcast %cst_156 : f32 to vector<2x64xf32>
    %466 = arith.divf %465, %464 : vector<2x64xf32>
    %467 = arith.mulf %456, %6 : vector<2x64xf32>
    %468 = arith.mulf %448, %458 : vector<2x64xf32>
    %469 = arith.addf %467, %468 : vector<2x64xf32>
    %470 = math.tanh %469 : vector<2x64xf32>
    %471 = arith.mulf %466, %470 : vector<2x64xf32>
    %472 = vector.extract_strided_slice %297 {offsets = [4, 256], sizes = [2, 256], strides = [1, 1]} : vector<8x512xf32> to vector<2x256xf32>
    %cst_157 = arith.constant dense<0.000000e+00> : vector<2x256xf32>
    %473 = tpu.matmul %471, %301, %cst_157 {dimension_numbers = #tpu.dot_dimension_numbers<[1], [0], [0], [1], [0, 0, 1, 1], [], []>} : vector<2x64xf32>, vector<64x256xf32>, vector<2x256xf32> -> vector<2x256xf32>
    %474 = arith.addf %472, %473 : vector<2x256xf32>
    %475 = vector.extract_strided_slice %474 {offsets = [0, 0], sizes = [2, 64], strides = [1, 1]} : vector<2x256xf32> to vector<2x64xf32>
    %cst_158 = arith.constant 0.000000e+00 : f32
    %476 = vector.broadcast %cst_158 : f32 to vector<2x64xf32>
    %477 = arith.subf %476, %475 : vector<2x64xf32>
    %478 = math.exp %477 : vector<2x64xf32>
    %cst_159 = arith.constant 1.000000e+00 : f32
    %479 = vector.broadcast %cst_159 : f32 to vector<2x64xf32>
    %480 = arith.addf %479, %478 : vector<2x64xf32>
    %cst_160 = arith.constant 1.000000e+00 : f32
    %481 = vector.broadcast %cst_160 : f32 to vector<2x64xf32>
    %482 = arith.divf %481, %480 : vector<2x64xf32>
    %483 = vector.extract_strided_slice %474 {offsets = [0, 64], sizes = [2, 64], strides = [1, 1]} : vector<2x256xf32> to vector<2x64xf32>
    %cst_161 = arith.constant 0.000000e+00 : f32
    %484 = vector.broadcast %cst_161 : f32 to vector<2x64xf32>
    %485 = arith.subf %484, %483 : vector<2x64xf32>
    %486 = math.exp %485 : vector<2x64xf32>
    %cst_162 = arith.constant 1.000000e+00 : f32
    %487 = vector.broadcast %cst_162 : f32 to vector<2x64xf32>
    %488 = arith.addf %487, %486 : vector<2x64xf32>
    %cst_163 = arith.constant 1.000000e+00 : f32
    %489 = vector.broadcast %cst_163 : f32 to vector<2x64xf32>
    %490 = arith.divf %489, %488 : vector<2x64xf32>
    %491 = vector.extract_strided_slice %474 {offsets = [0, 128], sizes = [2, 64], strides = [1, 1]} : vector<2x256xf32> to vector<2x64xf32>
    %492 = math.tanh %491 : vector<2x64xf32>
    %493 = vector.extract_strided_slice %474 {offsets = [0, 192], sizes = [2, 64], strides = [1, 1]} : vector<2x256xf32> to vector<2x64xf32>
    %cst_164 = arith.constant 0.000000e+00 : f32
    %494 = vector.broadcast %cst_164 : f32 to vector<2x64xf32>
    %495 = arith.subf %494, %493 : vector<2x64xf32>
    %496 = math.exp %495 : vector<2x64xf32>
    %cst_165 = arith.constant 1.000000e+00 : f32
    %497 = vector.broadcast %cst_165 : f32 to vector<2x64xf32>
    %498 = arith.addf %497, %496 : vector<2x64xf32>
    %cst_166 = arith.constant 1.000000e+00 : f32
    %499 = vector.broadcast %cst_166 : f32 to vector<2x64xf32>
    %500 = arith.divf %499, %498 : vector<2x64xf32>
    %501 = arith.mulf %490, %469 : vector<2x64xf32>
    %502 = arith.mulf %482, %492 : vector<2x64xf32>
    %503 = arith.addf %501, %502 : vector<2x64xf32>
    %504 = math.tanh %503 : vector<2x64xf32>
    %505 = arith.mulf %500, %504 : vector<2x64xf32>
    %506 = vector.extract_strided_slice %297 {offsets = [2, 256], sizes = [2, 256], strides = [1, 1]} : vector<8x512xf32> to vector<2x256xf32>
    %cst_167 = arith.constant dense<0.000000e+00> : vector<2x256xf32>
    %507 = tpu.matmul %505, %301, %cst_167 {dimension_numbers = #tpu.dot_dimension_numbers<[1], [0], [0], [1], [0, 0, 1, 1], [], []>} : vector<2x64xf32>, vector<64x256xf32>, vector<2x256xf32> -> vector<2x256xf32>
    %508 = arith.addf %506, %507 : vector<2x256xf32>
    %509 = vector.extract_strided_slice %508 {offsets = [0, 0], sizes = [2, 64], strides = [1, 1]} : vector<2x256xf32> to vector<2x64xf32>
    %cst_168 = arith.constant 0.000000e+00 : f32
    %510 = vector.broadcast %cst_168 : f32 to vector<2x64xf32>
    %511 = arith.subf %510, %509 : vector<2x64xf32>
    %512 = math.exp %511 : vector<2x64xf32>
    %cst_169 = arith.constant 1.000000e+00 : f32
    %513 = vector.broadcast %cst_169 : f32 to vector<2x64xf32>
    %514 = arith.addf %513, %512 : vector<2x64xf32>
    %cst_170 = arith.constant 1.000000e+00 : f32
    %515 = vector.broadcast %cst_170 : f32 to vector<2x64xf32>
    %516 = arith.divf %515, %514 : vector<2x64xf32>
    %517 = vector.extract_strided_slice %508 {offsets = [0, 64], sizes = [2, 64], strides = [1, 1]} : vector<2x256xf32> to vector<2x64xf32>
    %cst_171 = arith.constant 0.000000e+00 : f32
    %518 = vector.broadcast %cst_171 : f32 to vector<2x64xf32>
    %519 = arith.subf %518, %517 : vector<2x64xf32>
    %520 = math.exp %519 : vector<2x64xf32>
    %cst_172 = arith.constant 1.000000e+00 : f32
    %521 = vector.broadcast %cst_172 : f32 to vector<2x64xf32>
    %522 = arith.addf %521, %520 : vector<2x64xf32>
    %cst_173 = arith.constant 1.000000e+00 : f32
    %523 = vector.broadcast %cst_173 : f32 to vector<2x64xf32>
    %524 = arith.divf %523, %522 : vector<2x64xf32>
    %525 = vector.extract_strided_slice %508 {offsets = [0, 128], sizes = [2, 64], strides = [1, 1]} : vector<2x256xf32> to vector<2x64xf32>
    %526 = math.tanh %525 : vector<2x64xf32>
    %527 = vector.extract_strided_slice %508 {offsets = [0, 192], sizes = [2, 64], strides = [1, 1]} : vector<2x256xf32> to vector<2x64xf32>
    %cst_174 = arith.constant 0.000000e+00 : f32
    %528 = vector.broadcast %cst_174 : f32 to vector<2x64xf32>
    %529 = arith.subf %528, %527 : vector<2x64xf32>
    %530 = math.exp %529 : vector<2x64xf32>
    %cst_175 = arith.constant 1.000000e+00 : f32
    %531 = vector.broadcast %cst_175 : f32 to vector<2x64xf32>
    %532 = arith.addf %531, %530 : vector<2x64xf32>
    %cst_176 = arith.constant 1.000000e+00 : f32
    %533 = vector.broadcast %cst_176 : f32 to vector<2x64xf32>
    %534 = arith.divf %533, %532 : vector<2x64xf32>
    %535 = arith.mulf %524, %503 : vector<2x64xf32>
    %536 = arith.mulf %516, %526 : vector<2x64xf32>
    %537 = arith.addf %535, %536 : vector<2x64xf32>
    %538 = math.tanh %537 : vector<2x64xf32>
    %539 = arith.mulf %534, %538 : vector<2x64xf32>
    %540 = vector.extract_strided_slice %297 {offsets = [0, 256], sizes = [2, 256], strides = [1, 1]} : vector<8x512xf32> to vector<2x256xf32>
    %cst_177 = arith.constant dense<0.000000e+00> : vector<2x256xf32>
    %541 = tpu.matmul %539, %301, %cst_177 {dimension_numbers = #tpu.dot_dimension_numbers<[1], [0], [0], [1], [0, 0, 1, 1], [], []>} : vector<2x64xf32>, vector<64x256xf32>, vector<2x256xf32> -> vector<2x256xf32>
    %542 = arith.addf %540, %541 : vector<2x256xf32>
    %543 = vector.extract_strided_slice %542 {offsets = [0, 0], sizes = [2, 64], strides = [1, 1]} : vector<2x256xf32> to vector<2x64xf32>
    %cst_178 = arith.constant 0.000000e+00 : f32
    %544 = vector.broadcast %cst_178 : f32 to vector<2x64xf32>
    %545 = arith.subf %544, %543 : vector<2x64xf32>
    %546 = math.exp %545 : vector<2x64xf32>
    %cst_179 = arith.constant 1.000000e+00 : f32
    %547 = vector.broadcast %cst_179 : f32 to vector<2x64xf32>
    %548 = arith.addf %547, %546 : vector<2x64xf32>
    %cst_180 = arith.constant 1.000000e+00 : f32
    %549 = vector.broadcast %cst_180 : f32 to vector<2x64xf32>
    %550 = arith.divf %549, %548 : vector<2x64xf32>
    %551 = vector.extract_strided_slice %542 {offsets = [0, 64], sizes = [2, 64], strides = [1, 1]} : vector<2x256xf32> to vector<2x64xf32>
    %cst_181 = arith.constant 0.000000e+00 : f32
    %552 = vector.broadcast %cst_181 : f32 to vector<2x64xf32>
    %553 = arith.subf %552, %551 : vector<2x64xf32>
    %554 = math.exp %553 : vector<2x64xf32>
    %cst_182 = arith.constant 1.000000e+00 : f32
    %555 = vector.broadcast %cst_182 : f32 to vector<2x64xf32>
    %556 = arith.addf %555, %554 : vector<2x64xf32>
    %cst_183 = arith.constant 1.000000e+00 : f32
    %557 = vector.broadcast %cst_183 : f32 to vector<2x64xf32>
    %558 = arith.divf %557, %556 : vector<2x64xf32>
    %559 = vector.extract_strided_slice %542 {offsets = [0, 128], sizes = [2, 64], strides = [1, 1]} : vector<2x256xf32> to vector<2x64xf32>
    %560 = math.tanh %559 : vector<2x64xf32>
    %561 = vector.extract_strided_slice %542 {offsets = [0, 192], sizes = [2, 64], strides = [1, 1]} : vector<2x256xf32> to vector<2x64xf32>
    %cst_184 = arith.constant 0.000000e+00 : f32
    %562 = vector.broadcast %cst_184 : f32 to vector<2x64xf32>
    %563 = arith.subf %562, %561 : vector<2x64xf32>
    %564 = math.exp %563 : vector<2x64xf32>
    %cst_185 = arith.constant 1.000000e+00 : f32
    %565 = vector.broadcast %cst_185 : f32 to vector<2x64xf32>
    %566 = arith.addf %565, %564 : vector<2x64xf32>
    %cst_186 = arith.constant 1.000000e+00 : f32
    %567 = vector.broadcast %cst_186 : f32 to vector<2x64xf32>
    %568 = arith.divf %567, %566 : vector<2x64xf32>
    %569 = arith.mulf %558, %537 : vector<2x64xf32>
    %570 = arith.mulf %550, %560 : vector<2x64xf32>
    %571 = arith.addf %569, %570 : vector<2x64xf32>
    %572 = math.tanh %571 : vector<2x64xf32>
    %573 = arith.mulf %568, %572 : vector<2x64xf32>
    %574 = tpu.concatenate %335, %573 in 1 : vector<2x64xf32>, vector<2x64xf32> -> vector<2x128xf32>
    %575 = tpu.concatenate %369, %539 in 1 : vector<2x64xf32>, vector<2x64xf32> -> vector<2x128xf32>
    %576 = tpu.concatenate %403, %505 in 1 : vector<2x64xf32>, vector<2x64xf32> -> vector<2x128xf32>
    %577 = tpu.concatenate %437, %471 in 1 : vector<2x64xf32>, vector<2x64xf32> -> vector<2x128xf32>
    %578 = tpu.concatenate %574, %575, %576, %577 in 0 : vector<2x128xf32>, vector<2x128xf32>, vector<2x128xf32>, vector<2x128xf32> -> vector<8x128xf32>
    %c0_187 = arith.constant 0 : index
    %c0_188 = arith.constant 0 : index
    %579 = vector.load %arg9[%c0_187, %c0_188] : memref<8x128xf32, #tpu.memory_space<vmem>>, vector<8x128xf32>
    tpu.vector_store %arg9[%c0_187, %c0_188], %578 {strides = array<i32>} : memref<8x128xf32, #tpu.memory_space<vmem>>, vector<8x128xf32>,
    return
  }
}

</mosaic_0001>

<llo_original>
// kernel: tpu_custom_call.1
$region0: #{tpu_custom_call.1}
  #allocation0 [shape = 'u32[]', space=smem, size = 0x4, offset = 0x4, fixed_abs, tag = 'smem constant byte address 0x4 - core index']
  #allocation1 [shape = 'u32[72,128]{1,0:T(1,128)}', space=vmem, size = 0x9000, scoped, tag = 'internal scratch']
  %s0 = inlined_call_operand.vmem [shape: f32[8,4], index: 0, kind: input, shape index: {}]
  %s1 = inlined_call_operand.vmem [shape: f32[4,64], index: 1, kind: input, shape index: {}]
  %s2 = inlined_call_operand.vmem [shape: f32[1,64], index: 2, kind: input, shape index: {}]
  %s3 = inlined_call_operand.hbm [shape: f32[64,512], index: 3, kind: input, shape index: {}]
  %s4 = inlined_call_operand.hbm [shape: f32[2,64,256], index: 4, kind: input, shape index: {}]
  %s5 = inlined_call_operand.vmem [shape: f32[1,512], index: 5, kind: input, shape index: {}]
  %s6 = inlined_call_operand.hbm [shape: f32[128,512], index: 6, kind: input, shape index: {}]
  %s7 = inlined_call_operand.hbm [shape: f32[2,64,256], index: 7, kind: input, shape index: {}]
  %s8 = inlined_call_operand.vmem [shape: f32[1,512], index: 8, kind: input, shape index: {}]
  %s9 = inlined_call_operand.hbm [shape: f32[8,128], index: 9, kind: output, shape index: {}]
  %s10 = sld [smem:[#allocation0]]
  $region62: #{tpu_custom_call.1} parent=0
    _
  %s12 = ssub.s32 1, %s10
  %s13 = scalar_select 0, %s12, %s10
  $region1: #{tpu_custom_call.1} parent=0
    #allocation2 [shape = 'u8[131072]{0}', space=vmem, size = 0x20000, scoped, tag = 'input window, operand 3, single buffered']
    #allocation3 [shape = 's32[1]{0}', space=sflag, size = 0x4, scoped, tag = 'scoped memory for tpu_custom_call.1']
    #allocation4 [shape = 's32[1]{0}', space=sflag, size = 0x4, scoped, tag = 'scoped memory for tpu_custom_call.1']
    #allocation5 [shape = 'u8[131072]{0}', space=vmem, size = 0x20000, scoped, tag = 'input window, operand 4, single buffered']
    #allocation6 [shape = 's32[1]{0}', space=sflag, size = 0x4, scoped, tag = 'scoped memory for tpu_custom_call.1']
    #allocation7 [shape = 'u8[262144]{0}', space=vmem, size = 0x40000, scoped, tag = 'input window, operand 6, single buffered']
    #allocation8 [shape = 'u8[131072]{0}', space=vmem, size = 0x20000, scoped, tag = 'input window, operand 7, single buffered']
    #allocation9 [shape = 's32[1]{0}', space=sflag, size = 0x4, scoped, tag = 'scoped memory for tpu_custom_call.1']
    #allocation10 [shape = 'u8[4096]{0}', space=vmem, size = 0x1000, scoped, tag = 'output window, operand 0, single buffered']
    %14 = vsyncpa [#allocation3], 0
    %15 = vsyncpa [#allocation6], 0
    %16 = vsyncpa [#allocation9], 0
    %17 = vsyncpa [#allocation4], 0
    // Predicated region
    $region2: #{tpu_custom_call.1} parent=1 // pred_check
      _
    $region3: #{tpu_custom_call.1} parent=1 // pred_check_branch
      %19 = sbr.rel (0) target = $region5
    $region4: #{tpu_custom_call.1} parent=1 // pred_region
      _
    $region5: #{tpu_custom_call.1} parent=1 // pred_fallthru
      _
    // Predicated region
    $region6: #{tpu_custom_call.1} parent=1 // pred_check
      _
    $region7: #{tpu_custom_call.1} parent=1 // pred_check_branch
      %21 = sbr.rel (0) target = $region9
    $region8: #{tpu_custom_call.1} parent=1 // pred_region
      _
    $region9: #{tpu_custom_call.1} parent=1 // pred_fallthru
      _
    // Predicated region
    $region10: #{tpu_custom_call.1} parent=1 // pred_check
      _
    $region11: #{tpu_custom_call.1} parent=1 // pred_check_branch
      %23 = sbr.rel (0) target = $region13
    $region12: #{tpu_custom_call.1} parent=1 // pred_region
      _
    $region13: #{tpu_custom_call.1} parent=1 // pred_fallthru
      _
    // Predicated region
    $region14: #{tpu_custom_call.1} parent=1 // pred_check
      _
    $region15: #{tpu_custom_call.1} parent=1 // pred_check_branch
      %25 = sbr.rel (0) target = $region17
    $region16: #{tpu_custom_call.1} parent=1 // pred_region
      %27 = vsyncadd [#allocation3], 0
      %s28 = sshll.u32 %s3, 4
      %s29 = int_to_ptr.hbm [resolvable:$true] %s28
      %s30 = sshll.u32 [#allocation2], 4
      %s31 = int_to_ptr.vmem [resolvable:$true] %s30
      %36 = dma.hbm_to_vmem [thread:$0]  %s29, 4096, %s31, [#allocation3], 512, 512, 32
    $region17: #{tpu_custom_call.1} parent=1 // pred_fallthru
      _
    // Predicated region
    $region18: #{tpu_custom_call.1} parent=1 // pred_check
      _
    $region19: #{tpu_custom_call.1} parent=1 // pred_check_branch
      %38 = sbr.rel (0) target = $region21
    $region20: #{tpu_custom_call.1} parent=1 // pred_region
      %40 = vsyncadd [#allocation6], 0
      %s41 = sshll.u32 %s4, 4
      %s42 = int_to_ptr.hbm [resolvable:$true] %s41
      %s43 = sshll.u32 [#allocation5], 4
      %s44 = int_to_ptr.vmem [resolvable:$true] %s43
      %49 = dma.hbm_to_vmem [thread:$0]  %s42, 4096, %s44, [#allocation6], 256, 256, 16
    $region21: #{tpu_custom_call.1} parent=1 // pred_fallthru
      _
    // Predicated region
    $region22: #{tpu_custom_call.1} parent=1 // pred_check
      _
    $region23: #{tpu_custom_call.1} parent=1 // pred_check_branch
      %51 = sbr.rel (0) target = $region25
    $region24: #{tpu_custom_call.1} parent=1 // pred_region
      _
    $region25: #{tpu_custom_call.1} parent=1 // pred_fallthru
      _
    // Predicated region
    $region26: #{tpu_custom_call.1} parent=1 // pred_check
      _
    $region27: #{tpu_custom_call.1} parent=1 // pred_check_branch
      %53 = sbr.rel (0) target = $region29
    $region28: #{tpu_custom_call.1} parent=1 // pred_region
      %55 = vsyncadd [#allocation6], 0
      %s56 = sshll.u32 %s6, 4
      %s57 = int_to_ptr.hbm [resolvable:$true] %s56
      %s58 = sshll.u32 [#allocation7], 4
      %s59 = int_to_ptr.vmem [resolvable:$true] %s58
      %64 = dma.hbm_to_vmem [thread:$0]  %s57, 8192, %s59, [#allocation6], 512, 512, 32
    $region29: #{tpu_custom_call.1} parent=1 // pred_fallthru
      _
    // Predicated region
    $region30: #{tpu_custom_call.1} parent=1 // pred_check
      _
    $region31: #{tpu_custom_call.1} parent=1 // pred_check_branch
      %66 = sbr.rel (0) target = $region33
    $region32: #{tpu_custom_call.1} parent=1 // pred_region
      %68 = vsyncadd [#allocation9], 0
      %s69 = sshll.u32 %s7, 4
      %s70 = int_to_ptr.hbm [resolvable:$true] %s69
      %s71 = sshll.u32 [#allocation8], 4
      %s72 = int_to_ptr.vmem [resolvable:$true] %s71
      %77 = dma.hbm_to_vmem [thread:$0]  %s70, 4096, %s72, [#allocation9], 256, 256, 16
    $region33: #{tpu_custom_call.1} parent=1 // pred_fallthru
      _
    // Predicated region
    $region34: #{tpu_custom_call.1} parent=1 // pred_check
      _
    $region35: #{tpu_custom_call.1} parent=1 // pred_check_branch
      %79 = sbr.rel (0) target = $region37
    $region36: #{tpu_custom_call.1} parent=1 // pred_region
      _
    $region37: #{tpu_custom_call.1} parent=1 // pred_fallthru
      _
    // Predicated region
    $region38: #{tpu_custom_call.1} parent=1 // pred_check
      _
    $region39: #{tpu_custom_call.1} parent=1 // pred_check_branch
      %81 = sbr.rel (0) target = $region41
    $region40: #{tpu_custom_call.1} parent=1 // pred_region
      %83 = dma.done [#allocation3], 4096
    $region41: #{tpu_custom_call.1} parent=1 // pred_fallthru
      _
    // Predicated region
    $region42: #{tpu_custom_call.1} parent=1 // pred_check
      _
    $region43: #{tpu_custom_call.1} parent=1 // pred_check_branch
      %85 = sbr.rel (0) target = $region45
    $region44: #{tpu_custom_call.1} parent=1 // pred_region
      %87 = dma.done [#allocation6], 4096
    $region45: #{tpu_custom_call.1} parent=1 // pred_fallthru
      _
    // Predicated region
    $region46: #{tpu_custom_call.1} parent=1 // pred_check
      _
    $region47: #{tpu_custom_call.1} parent=1 // pred_check_branch
      %89 = sbr.rel (0) target = $region49
    $region48: #{tpu_custom_call.1} parent=1 // pred_region
      %91 = dma.done [#allocation6], 8192
    $region49: #{tpu_custom_call.1} parent=1 // pred_fallthru
      _
    // Predicated region
    $region50: #{tpu_custom_call.1} parent=1 // pred_check
      _
    $region51: #{tpu_custom_call.1} parent=1 // pred_check_branch
      %93 = sbr.rel (0) target = $region53
    $region52: #{tpu_custom_call.1} parent=1 // pred_region
      %95 = dma.done [#allocation9], 4096
    $region53: #{tpu_custom_call.1} parent=1 // pred_fallthru
      _
    %v96 = vld [vmem:[%s0] sm:$0xff]
    %v97 = vld [vmem:[%s1] sm:$0xf]
    %v98 = vld [vmem:[%s2] sm:$0x1]
    %v100 = vperm.slane %v98, 0
    %vm102 = vcmask 31744
    %v104 = vsel %vm102, %v96, 0
    %vm106 = vcmask 1043456
    %v108 = vsel %vm106, %v97, 0
    %110 = vmatpush.msra.mxu0 0.0
    %111 = vmatpush.msra.mxu0 0.0
    %112 = vmatpush.msra.mxu0 0.0
    %113 = vmatpush.msra.mxu0 0.0
    %114 = vmatpush.msra.mxu0 0.0
    %115 = vmatpush.msra.mxu0 0.0
    %116 = vmatpush.msra.mxu0 0.0
    %117 = vmatpush.msra.mxu0 0.0
    %118 = vmatpush.msra.mxu0 0.0
    %119 = vmatpush.msra.mxu0 0.0
    %120 = vmatpush.msra.mxu0 0.0
    %121 = vmatpush.msra.mxu0 0.0
    %122 = vmatpush.msra.mxu0 0.0
    %123 = vmatpush.msra.mxu0 0.0
    %124 = vmatpush.msra.mxu0 0.0
    %125 = vmatpush.msra.mxu0 %v108
    %126 = vmatmul.f32.gmra.mxu0 %v104
    %v127 = vpop.f32.mrf.mxu0
    %v128 = vadd.f32 %v100, %v127
    %129 = vdwg.mxu0
    %v130 = vld [vmem:[#allocation2] sm:$0xff]
    %v131 = vld [vmem:[#allocation2 + $0x8] sm:$0xff]
    %v132 = vld [vmem:[#allocation2 + $0x10] sm:$0xff]
    %v133 = vld [vmem:[#allocation2 + $0x18] sm:$0xff]
    %v134 = vld [vmem:[#allocation2 + $0x20] sm:$0xff]
    %v135 = vld [vmem:[#allocation2 + $0x28] sm:$0xff]
    %v136 = vld [vmem:[#allocation2 + $0x30] sm:$0xff]
    %v137 = vld [vmem:[#allocation2 + $0x38] sm:$0xff]
    %v138 = vld [vmem:[#allocation2 + $0x40] sm:$0xff]
    %v139 = vld [vmem:[#allocation2 + $0x48] sm:$0xff]
    %v140 = vld [vmem:[#allocation2 + $0x50] sm:$0xff]
    %v141 = vld [vmem:[#allocation2 + $0x58] sm:$0xff]
    %v142 = vld [vmem:[#allocation2 + $0x60] sm:$0xff]
    %v143 = vld [vmem:[#allocation2 + $0x68] sm:$0xff]
    %v144 = vld [vmem:[#allocation2 + $0x70] sm:$0xff]
    %v145 = vld [vmem:[#allocation2 + $0x78] sm:$0xff]
    %v146 = vld [vmem:[#allocation2 + $0x80] sm:$0xff]
    %v147 = vld [vmem:[#allocation2 + $0x88] sm:$0xff]
    %v148 = vld [vmem:[#allocation2 + $0x90] sm:$0xff]
    %v149 = vld [vmem:[#allocation2 + $0x98] sm:$0xff]
    %v150 = vld [vmem:[#allocation2 + $0xa0] sm:$0xff]
    %v151 = vld [vmem:[#allocation2 + $0xa8] sm:$0xff]
    %v152 = vld [vmem:[#allocation2 + $0xb0] sm:$0xff]
    %v153 = vld [vmem:[#allocation2 + $0xb8] sm:$0xff]
    %v154 = vld [vmem:[#allocation2 + $0xc0] sm:$0xff]
    %v155 = vld [vmem:[#allocation2 + $0xc8] sm:$0xff]
    %v156 = vld [vmem:[#allocation2 + $0xd0] sm:$0xff]
    %v157 = vld [vmem:[#allocation2 + $0xd8] sm:$0xff]
    %v158 = vld [vmem:[#allocation2 + $0xe0] sm:$0xff]
    %v159 = vld [vmem:[#allocation2 + $0xe8] sm:$0xff]
    %v160 = vld [vmem:[#allocation2 + $0xf0] sm:$0xff]
    %v161 = vld [vmem:[#allocation2 + $0xf8] sm:$0xff]
    %v162 = vld [vmem:[%s5] sm:$0xf]
    %v164 = vperm.slane %v162, 0
    %v165 = vperm.slane %v162, 1
    %v166 = vperm.slane %v162, 2
    %v167 = vperm.slane %v162, 3
    %vm172 = vcmask 523264
    %v174 = vsel %vm172, %v128, 0
    %176 = vmatpush.msra.mxu0 0.0
    %177 = vmatpush.msra.mxu0 0.0
    %178 = vmatpush.msra.mxu0 0.0
    %179 = vmatpush.msra.mxu0 0.0
    %180 = vmatpush.msra.mxu0 0.0
    %181 = vmatpush.msra.mxu0 0.0
    %182 = vmatpush.msra.mxu0 0.0
    %183 = vmatpush.msra.mxu0 0.0
    %184 = vmatpush.msra.mxu0 %v158
    %185 = vmatpush.msra.mxu0 %v154
    %186 = vmatpush.msra.mxu0 %v150
    %187 = vmatpush.msra.mxu0 %v146
    %188 = vmatpush.msra.mxu0 %v142
    %189 = vmatpush.msra.mxu0 %v138
    %190 = vmatpush.msra.mxu0 %v134
    %191 = vmatpush.msra.mxu0 %v130
    %192 = vmatmul.f32.gmra.mxu0 %v174
    %v193 = vpop.f32.mrf.mxu0
    %v194 = vadd.f32 %v164, %v193
    %195 = vdwg.mxu0
    %196 = vmatpush.msra.mxu0 0.0
    %197 = vmatpush.msra.mxu0 0.0
    %198 = vmatpush.msra.mxu0 0.0
    %199 = vmatpush.msra.mxu0 0.0
    %200 = vmatpush.msra.mxu0 0.0
    %201 = vmatpush.msra.mxu0 0.0
    %202 = vmatpush.msra.mxu0 0.0
    %203 = vmatpush.msra.mxu0 0.0
    %204 = vmatpush.msra.mxu0 %v159
    %205 = vmatpush.msra.mxu0 %v155
    %206 = vmatpush.msra.mxu0 %v151
    %207 = vmatpush.msra.mxu0 %v147
    %208 = vmatpush.msra.mxu0 %v143
    %209 = vmatpush.msra.mxu0 %v139
    %210 = vmatpush.msra.mxu0 %v135
    %211 = vmatpush.msra.mxu0 %v131
    %212 = vmatmul.f32.gmra.mxu0 %v174
    %v213 = vpop.f32.mrf.mxu0
    %v214 = vadd.f32 %v165, %v213
    %215 = vdwg.mxu0
    %216 = vmatpush.msra.mxu0 0.0
    %217 = vmatpush.msra.mxu0 0.0
    %218 = vmatpush.msra.mxu0 0.0
    %219 = vmatpush.msra.mxu0 0.0
    %220 = vmatpush.msra.mxu0 0.0
    %221 = vmatpush.msra.mxu0 0.0
    %222 = vmatpush.msra.mxu0 0.0
    %223 = vmatpush.msra.mxu0 0.0
    %224 = vmatpush.msra.mxu0 %v160
    %225 = vmatpush.msra.mxu0 %v156
    %226 = vmatpush.msra.mxu0 %v152
    %227 = vmatpush.msra.mxu0 %v148
    %228 = vmatpush.msra.mxu0 %v144
    %229 = vmatpush.msra.mxu0 %v140
    %230 = vmatpush.msra.mxu0 %v136
    %231 = vmatpush.msra.mxu0 %v132
    %232 = vmatmul.f32.gmra.mxu0 %v174
    %v233 = vpop.f32.mrf.mxu0
    %v234 = vadd.f32 %v166, %v233
    %235 = vdwg.mxu0
    %236 = vmatpush.msra.mxu0 0.0
    %237 = vmatpush.msra.mxu0 0.0
    %238 = vmatpush.msra.mxu0 0.0
    %239 = vmatpush.msra.mxu0 0.0
    %240 = vmatpush.msra.mxu0 0.0
    %241 = vmatpush.msra.mxu0 0.0
    %242 = vmatpush.msra.mxu0 0.0
    %243 = vmatpush.msra.mxu0 0.0
    %244 = vmatpush.msra.mxu0 %v161
    %245 = vmatpush.msra.mxu0 %v157
    %246 = vmatpush.msra.mxu0 %v153
    %247 = vmatpush.msra.mxu0 %v149
    %248 = vmatpush.msra.mxu0 %v145
    %249 = vmatpush.msra.mxu0 %v141
    %250 = vmatpush.msra.mxu0 %v137
    %251 = vmatpush.msra.mxu0 %v133
    %252 = vmatmul.f32.gmra.mxu0 %v174
    %v253 = vpop.f32.mrf.mxu0
    %v254 = vadd.f32 %v167, %v253
    %255 = vdwg.mxu0
    %v256 = vld [vmem:[#allocation5] sm:$0xff]
    %v257 = vld [vmem:[#allocation5 + $0x8] sm:$0xff]
    %v258 = vld [vmem:[#allocation5 + $0x10] sm:$0xff]
    %v259 = vld [vmem:[#allocation5 + $0x18] sm:$0xff]
    %v260 = vld [vmem:[#allocation5 + $0x20] sm:$0xff]
    %v261 = vld [vmem:[#allocation5 + $0x28] sm:$0xff]
    %v262 = vld [vmem:[#allocation5 + $0x30] sm:$0xff]
    %v263 = vld [vmem:[#allocation5 + $0x38] sm:$0xff]
    %v264 = vld [vmem:[#allocation5 + $0x40] sm:$0xff]
    %v265 = vld [vmem:[#allocation5 + $0x48] sm:$0xff]
    %v266 = vld [vmem:[#allocation5 + $0x50] sm:$0xff]
    %v267 = vld [vmem:[#allocation5 + $0x58] sm:$0xff]
    %v268 = vld [vmem:[#allocation5 + $0x60] sm:$0xff]
    %v269 = vld [vmem:[#allocation5 + $0x68] sm:$0xff]
    %v270 = vld [vmem:[#allocation5 + $0x70] sm:$0xff]
    %v271 = vld [vmem:[#allocation5 + $0x78] sm:$0xff]
    %s272 = scalar_lea.vmem [#allocation5], 128
    %v273 = vld [vmem:[%s272] sm:$0xff]
    %v274 = vld [vmem:[%s272 + $0x8] sm:$0xff]
    %v275 = vld [vmem:[%s272 + $0x10] sm:$0xff]
    %v276 = vld [vmem:[%s272 + $0x18] sm:$0xff]
    %v277 = vld [vmem:[%s272 + $0x20] sm:$0xff]
    %v278 = vld [vmem:[%s272 + $0x28] sm:$0xff]
    %v279 = vld [vmem:[%s272 + $0x30] sm:$0xff]
    %v280 = vld [vmem:[%s272 + $0x38] sm:$0xff]
    %v281 = vld [vmem:[%s272 + $0x40] sm:$0xff]
    %v282 = vld [vmem:[%s272 + $0x48] sm:$0xff]
    %v283 = vld [vmem:[%s272 + $0x50] sm:$0xff]
    %v284 = vld [vmem:[%s272 + $0x58] sm:$0xff]
    %v285 = vld [vmem:[%s272 + $0x60] sm:$0xff]
    %v286 = vld [vmem:[%s272 + $0x68] sm:$0xff]
    %v287 = vld [vmem:[%s272 + $0x70] sm:$0xff]
    %v288 = vld [vmem:[%s272 + $0x78] sm:$0xff]
    %v290 = vsel %vm172, 0.0, 0
    %292 = vmatpush.msra.mxu0 0.0
    %293 = vmatpush.msra.mxu0 0.0
    %294 = vmatpush.msra.mxu0 0.0
    %295 = vmatpush.msra.mxu0 0.0
    %296 = vmatpush.msra.mxu0 0.0
    %297 = vmatpush.msra.mxu0 0.0
    %298 = vmatpush.msra.mxu0 0.0
    %299 = vmatpush.msra.mxu0 0.0
    %300 = vmatpush.msra.mxu0 %v270
    %301 = vmatpush.msra.mxu0 %v268
    %302 = vmatpush.msra.mxu0 %v266
    %303 = vmatpush.msra.mxu0 %v264
    %304 = vmatpush.msra.mxu0 %v262
    %305 = vmatpush.msra.mxu0 %v260
    %306 = vmatpush.msra.mxu0 %v258
    %307 = vmatpush.msra.mxu0 %v256
    %308 = vmatmul.f32.gmra.mxu0 %v290
    %v309 = vpop.f32.mrf.mxu0
    %v310 = vadd.f32 0.0, %v309
    %311 = vdwg.mxu0
    %312 = vmatpush.msra.mxu0 0.0
    %313 = vmatpush.msra.mxu0 0.0
    %314 = vmatpush.msra.mxu0 0.0
    %315 = vmatpush.msra.mxu0 0.0
    %316 = vmatpush.msra.mxu0 0.0
    %317 = vmatpush.msra.mxu0 0.0
    %318 = vmatpush.msra.mxu0 0.0
    %319 = vmatpush.msra.mxu0 0.0
    %320 = vmatpush.msra.mxu0 %v271
    %321 = vmatpush.msra.mxu0 %v269
    %322 = vmatpush.msra.mxu0 %v267
    %323 = vmatpush.msra.mxu0 %v265
    %324 = vmatpush.msra.mxu0 %v263
    %325 = vmatpush.msra.mxu0 %v261
    %326 = vmatpush.msra.mxu0 %v259
    %327 = vmatpush.msra.mxu0 %v257
    %328 = vmatmul.f32.gmra.mxu0 %v290
    %v329 = vpop.f32.mrf.mxu0
    %v330 = vadd.f32 0.0, %v329
    %331 = vdwg.mxu0
    %v332 = vadd.f32 %v194, %v310
    %v333 = vadd.f32 %v214, %v330
    %v334 = vsub.f32 0.0, %v332
    %v335 = vmul.f32 %v334, 1.442695
    %v336 = vpow.pop %v335
    %v337 = vadd.f32 %v336, 1.0
    %v338 = vrcp.pop %v337
    %v339 = vmul.f32 %v337, %v338
    %v340 = vsub.f32 1.0, %v339
    %v341 = vmul.f32 %v338, %v340
    %v342 = vadd.f32 %v338, %v341
    %vm343 = vweird.f32 %v337
    %vm344 = vweird.f32 %v338
    %vm345 = vmor %vm343, %vm344
    %v346 = vsel %vm345, %v338, %v342
    %v347 = vand.u32 2147483647, %v337
    %vm348 = vcmp.eq.f32.partialorder %v347, 8.507059e+37
    %v349 = vand.u32 %v337, 2147483648
    %v350 = vor.u32 1.1754944e-38, %v349
    %v351 = vsel %vm348, %v350, %v346
    %v352 = vmul.f32 1.0, %v351
    %v353 = vtanh.pop %v333
    %v354 = vsub.f32 0.0, %v333
    %v355 = vmul.f32 %v354, 1.442695
    %v356 = vpow.pop %v355
    %v357 = vadd.f32 %v356, 1.0
    %v358 = vrcp.pop %v357
    %v359 = vmul.f32 %v357, %v358
    %v360 = vsub.f32 1.0, %v359
    %v361 = vmul.f32 %v358, %v360
    %v362 = vadd.f32 %v358, %v361
    %vm363 = vweird.f32 %v357
    %vm364 = vweird.f32 %v358
    %vm365 = vmor %vm363, %vm364
    %v366 = vsel %vm365, %v358, %v362
    %v367 = vand.u32 2147483647, %v357
    %vm368 = vcmp.eq.f32.partialorder %v367, 8.507059e+37
    %v369 = vand.u32 %v357, 2147483648
    %v370 = vor.u32 1.1754944e-38, %v369
    %v371 = vsel %vm368, %v370, %v366
    %v372 = vmul.f32 1.0, %v371
    %v373 = vmul.f32 %v352, 0.0
    %v374 = vmul.f32 %v352, %v353
    %376 = vrot.lane.b32.xlu0 %v374, 64
    %v377 = vpop.permute.xlu0 %376
    %v379 = vadd.f32 %v373, %v377
    %v380 = vtanh.pop %v379
    %v381 = vmul.f32 %v372, %v380
    %383 = vrot.lane.b32.xlu0 %v381, 64
    %v384 = vpop.permute.xlu0 %383
    %v385 = vsel %vm172, %v384, 0
    %387 = vmatpush.msra.mxu0 0.0
    %388 = vmatpush.msra.mxu0 0.0
    %389 = vmatpush.msra.mxu0 0.0
    %390 = vmatpush.msra.mxu0 0.0
    %391 = vmatpush.msra.mxu0 0.0
    %392 = vmatpush.msra.mxu0 0.0
    %393 = vmatpush.msra.mxu0 0.0
    %394 = vmatpush.msra.mxu0 0.0
    %395 = vmatpush.msra.mxu0 %v270
    %396 = vmatpush.msra.mxu0 %v268
    %397 = vmatpush.msra.mxu0 %v266
    %398 = vmatpush.msra.mxu0 %v264
    %399 = vmatpush.msra.mxu0 %v262
    %400 = vmatpush.msra.mxu0 %v260
    %401 = vmatpush.msra.mxu0 %v258
    %402 = vmatpush.msra.mxu0 %v256
    %403 = vmatmul.f32.gmra.mxu0 %v385
    %v404 = vpop.f32.mrf.mxu0
    %v405 = vadd.f32 0.0, %v404
    %406 = vdwg.mxu0
    %407 = vmatpush.msra.mxu0 0.0
    %408 = vmatpush.msra.mxu0 0.0
    %409 = vmatpush.msra.mxu0 0.0
    %410 = vmatpush.msra.mxu0 0.0
    %411 = vmatpush.msra.mxu0 0.0
    %412 = vmatpush.msra.mxu0 0.0
    %413 = vmatpush.msra.mxu0 0.0
    %414 = vmatpush.msra.mxu0 0.0
    %415 = vmatpush.msra.mxu0 %v271
    %416 = vmatpush.msra.mxu0 %v269
    %417 = vmatpush.msra.mxu0 %v267
    %418 = vmatpush.msra.mxu0 %v265
    %419 = vmatpush.msra.mxu0 %v263
    %420 = vmatpush.msra.mxu0 %v261
    %421 = vmatpush.msra.mxu0 %v259
    %422 = vmatpush.msra.mxu0 %v257
    %423 = vmatmul.f32.gmra.mxu0 %v385
    %v424 = vpop.f32.mrf.mxu0
    %v425 = vadd.f32 0.0, %v424
    %426 = vdwg.mxu0
    %v429 = vrot.slane %v405, 6
    %v430 = vrot.slane %v425, 6
    %v433 = vadd.f32 %v194, %v429
    %v434 = vadd.f32 %v214, %v430
    %v435 = vsub.f32 0.0, %v433
    %v436 = vmul.f32 %v435, 1.442695
    %v437 = vpow.pop %v436
    %v438 = vadd.f32 %v437, 1.0
    %v439 = vrcp.pop %v438
    %v440 = vmul.f32 %v438, %v439
    %v441 = vsub.f32 1.0, %v440
    %v442 = vmul.f32 %v439, %v441
    %v443 = vadd.f32 %v439, %v442
    %vm444 = vweird.f32 %v438
    %vm445 = vweird.f32 %v439
    %vm446 = vmor %vm444, %vm445
    %v447 = vsel %vm446, %v439, %v443
    %v448 = vand.u32 2147483647, %v438
    %vm449 = vcmp.eq.f32.partialorder %v448, 8.507059e+37
    %v450 = vand.u32 %v438, 2147483648
    %v451 = vor.u32 1.1754944e-38, %v450
    %v452 = vsel %vm449, %v451, %v447
    %v453 = vmul.f32 1.0, %v452
    %v454 = vtanh.pop %v434
    %v455 = vsub.f32 0.0, %v434
    %v456 = vmul.f32 %v455, 1.442695
    %v457 = vpow.pop %v456
    %v458 = vadd.f32 %v457, 1.0
    %v459 = vrcp.pop %v458
    %v460 = vmul.f32 %v458, %v459
    %v461 = vsub.f32 1.0, %v460
    %v462 = vmul.f32 %v459, %v461
    %v463 = vadd.f32 %v459, %v462
    %vm464 = vweird.f32 %v458
    %vm465 = vweird.f32 %v459
    %vm466 = vmor %vm464, %vm465
    %v467 = vsel %vm466, %v459, %v463
    %v468 = vand.u32 2147483647, %v458
    %vm469 = vcmp.eq.f32.partialorder %v468, 8.507059e+37
    %v470 = vand.u32 %v458, 2147483648
    %v471 = vor.u32 1.1754944e-38, %v470
    %v472 = vsel %vm469, %v471, %v467
    %v473 = vmul.f32 1.0, %v472
    %v475 = vrot.slane %v379, 6
    %v477 = vmul.f32 %v453, %v475
    %v478 = vmul.f32 %v453, %v454
    %480 = vrot.lane.b32.xlu0 %v478, 64
    %v481 = vpop.permute.xlu0 %480
    %v483 = vadd.f32 %v477, %v481
    %v484 = vtanh.pop %v483
    %v485 = vmul.f32 %v473, %v484
    %v487 = vrot.slane %v485, 2
    %488 = vrot.lane.b32.xlu0 %v487, 64
    %v489 = vpop.permute.xlu0 %488
    %v490 = vsel %vm172, %v489, 0
    %492 = vmatpush.msra.mxu0 0.0
    %493 = vmatpush.msra.mxu0 0.0
    %494 = vmatpush.msra.mxu0 0.0
    %495 = vmatpush.msra.mxu0 0.0
    %496 = vmatpush.msra.mxu0 0.0
    %497 = vmatpush.msra.mxu0 0.0
    %498 = vmatpush.msra.mxu0 0.0
    %499 = vmatpush.msra.mxu0 0.0
    %500 = vmatpush.msra.mxu0 %v270
    %501 = vmatpush.msra.mxu0 %v268
    %502 = vmatpush.msra.mxu0 %v266
    %503 = vmatpush.msra.mxu0 %v264
    %504 = vmatpush.msra.mxu0 %v262
    %505 = vmatpush.msra.mxu0 %v260
    %506 = vmatpush.msra.mxu0 %v258
    %507 = vmatpush.msra.mxu0 %v256
    %508 = vmatmul.f32.gmra.mxu0 %v490
    %v509 = vpop.f32.mrf.mxu0
    %v510 = vadd.f32 0.0, %v509
    %511 = vdwg.mxu0
    %512 = vmatpush.msra.mxu0 0.0
    %513 = vmatpush.msra.mxu0 0.0
    %514 = vmatpush.msra.mxu0 0.0
    %515 = vmatpush.msra.mxu0 0.0
    %516 = vmatpush.msra.mxu0 0.0
    %517 = vmatpush.msra.mxu0 0.0
    %518 = vmatpush.msra.mxu0 0.0
    %519 = vmatpush.msra.mxu0 0.0
    %520 = vmatpush.msra.mxu0 %v271
    %521 = vmatpush.msra.mxu0 %v269
    %522 = vmatpush.msra.mxu0 %v267
    %523 = vmatpush.msra.mxu0 %v265
    %524 = vmatpush.msra.mxu0 %v263
    %525 = vmatpush.msra.mxu0 %v261
    %526 = vmatpush.msra.mxu0 %v259
    %527 = vmatpush.msra.mxu0 %v257
    %528 = vmatmul.f32.gmra.mxu0 %v490
    %v529 = vpop.f32.mrf.mxu0
    %v530 = vadd.f32 0.0, %v529
    %531 = vdwg.mxu0
    %v534 = vrot.slane %v510, 4
    %v535 = vrot.slane %v530, 4
    %v538 = vadd.f32 %v194, %v534
    %v539 = vadd.f32 %v214, %v535
    %v540 = vsub.f32 0.0, %v538
    %v541 = vmul.f32 %v540, 1.442695
    %v542 = vpow.pop %v541
    %v543 = vadd.f32 %v542, 1.0
    %v544 = vrcp.pop %v543
    %v545 = vmul.f32 %v543, %v544
    %v546 = vsub.f32 1.0, %v545
    %v547 = vmul.f32 %v544, %v546
    %v548 = vadd.f32 %v544, %v547
    %vm549 = vweird.f32 %v543
    %vm550 = vweird.f32 %v544
    %vm551 = vmor %vm549, %vm550
    %v552 = vsel %vm551, %v544, %v548
    %v553 = vand.u32 2147483647, %v543
    %vm554 = vcmp.eq.f32.partialorder %v553, 8.507059e+37
    %v555 = vand.u32 %v543, 2147483648
    %v556 = vor.u32 1.1754944e-38, %v555
    %v557 = vsel %vm554, %v556, %v552
    %v558 = vmul.f32 1.0, %v557
    %v559 = vtanh.pop %v539
    %v560 = vsub.f32 0.0, %v539
    %v561 = vmul.f32 %v560, 1.442695
    %v562 = vpow.pop %v561
    %v563 = vadd.f32 %v562, 1.0
    %v564 = vrcp.pop %v563
    %v565 = vmul.f32 %v563, %v564
    %v566 = vsub.f32 1.0, %v565
    %v567 = vmul.f32 %v564, %v566
    %v568 = vadd.f32 %v564, %v567
    %vm569 = vweird.f32 %v563
    %vm570 = vweird.f32 %v564
    %vm571 = vmor %vm569, %vm570
    %v572 = vsel %vm571, %v564, %v568
    %v573 = vand.u32 2147483647, %v563
    %vm574 = vcmp.eq.f32.partialorder %v573, 8.507059e+37
    %v575 = vand.u32 %v563, 2147483648
    %v576 = vor.u32 1.1754944e-38, %v575
    %v577 = vsel %vm574, %v576, %v572
    %v578 = vmul.f32 1.0, %v577
    %v580 = vrot.slane %v483, 6
    %v582 = vmul.f32 %v558, %v580
    %v583 = vmul.f32 %v558, %v559
    %585 = vrot.lane.b32.xlu0 %v583, 64
    %v586 = vpop.permute.xlu0 %585
    %v588 = vadd.f32 %v582, %v586
    %v589 = vtanh.pop %v588
    %v590 = vmul.f32 %v578, %v589
    %v592 = vrot.slane %v590, 4
    %593 = vrot.lane.b32.xlu0 %v592, 64
    %v594 = vpop.permute.xlu0 %593
    %v595 = vsel %vm172, %v594, 0
    %597 = vmatpush.msra.mxu0 0.0
    %598 = vmatpush.msra.mxu0 0.0
    %599 = vmatpush.msra.mxu0 0.0
    %600 = vmatpush.msra.mxu0 0.0
    %601 = vmatpush.msra.mxu0 0.0
    %602 = vmatpush.msra.mxu0 0.0
    %603 = vmatpush.msra.mxu0 0.0
    %604 = vmatpush.msra.mxu0 0.0
    %605 = vmatpush.msra.mxu0 %v270
    %606 = vmatpush.msra.mxu0 %v268
    %607 = vmatpush.msra.mxu0 %v266
    %608 = vmatpush.msra.mxu0 %v264
    %609 = vmatpush.msra.mxu0 %v262
    %610 = vmatpush.msra.mxu0 %v260
    %611 = vmatpush.msra.mxu0 %v258
    %612 = vmatpush.msra.mxu0 %v256
    %613 = vmatmul.f32.gmra.mxu0 %v595
    %v614 = vpop.f32.mrf.mxu0
    %v615 = vadd.f32 0.0, %v614
    %616 = vdwg.mxu0
    %617 = vmatpush.msra.mxu0 0.0
    %618 = vmatpush.msra.mxu0 0.0
    %619 = vmatpush.msra.mxu0 0.0
    %620 = vmatpush.msra.mxu0 0.0
    %621 = vmatpush.msra.mxu0 0.0
    %622 = vmatpush.msra.mxu0 0.0
    %623 = vmatpush.msra.mxu0 0.0
    %624 = vmatpush.msra.mxu0 0.0
    %625 = vmatpush.msra.mxu0 %v271
    %626 = vmatpush.msra.mxu0 %v269
    %627 = vmatpush.msra.mxu0 %v267
    %628 = vmatpush.msra.mxu0 %v265
    %629 = vmatpush.msra.mxu0 %v263
    %630 = vmatpush.msra.mxu0 %v261
    %631 = vmatpush.msra.mxu0 %v259
    %632 = vmatpush.msra.mxu0 %v257
    %633 = vmatmul.f32.gmra.mxu0 %v595
    %v634 = vpop.f32.mrf.mxu0
    %v635 = vadd.f32 0.0, %v634
    %636 = vdwg.mxu0
    %v639 = vrot.slane %v615, 2
    %v640 = vrot.slane %v635, 2
    %v643 = vadd.f32 %v194, %v639
    %v644 = vadd.f32 %v214, %v640
    %v645 = vsub.f32 0.0, %v643
    %v646 = vmul.f32 %v645, 1.442695
    %v647 = vpow.pop %v646
    %v648 = vadd.f32 %v647, 1.0
    %v649 = vrcp.pop %v648
    %v650 = vmul.f32 %v648, %v649
    %v651 = vsub.f32 1.0, %v650
    %v652 = vmul.f32 %v649, %v651
    %v653 = vadd.f32 %v649, %v652
    %vm654 = vweird.f32 %v648
    %vm655 = vweird.f32 %v649
    %vm656 = vmor %vm654, %vm655
    %v657 = vsel %vm656, %v649, %v653
    %v658 = vand.u32 2147483647, %v648
    %vm659 = vcmp.eq.f32.partialorder %v658, 8.507059e+37
    %v660 = vand.u32 %v648, 2147483648
    %v661 = vor.u32 1.1754944e-38, %v660
    %v662 = vsel %vm659, %v661, %v657
    %v663 = vmul.f32 1.0, %v662
    %v664 = vtanh.pop %v644
    %v665 = vsub.f32 0.0, %v644
    %v666 = vmul.f32 %v665, 1.442695
    %v667 = vpow.pop %v666
    %v668 = vadd.f32 %v667, 1.0
    %v669 = vrcp.pop %v668
    %v670 = vmul.f32 %v668, %v669
    %v671 = vsub.f32 1.0, %v670
    %v672 = vmul.f32 %v669, %v671
    %v673 = vadd.f32 %v669, %v672
    %vm674 = vweird.f32 %v668
    %vm675 = vweird.f32 %v669
    %vm676 = vmor %vm674, %vm675
    %v677 = vsel %vm676, %v669, %v673
    %v678 = vand.u32 2147483647, %v668
    %vm679 = vcmp.eq.f32.partialorder %v678, 8.507059e+37
    %v680 = vand.u32 %v668, 2147483648
    %v681 = vor.u32 1.1754944e-38, %v680
    %v682 = vsel %vm679, %v681, %v677
    %v683 = vmul.f32 1.0, %v682
    %v685 = vrot.slane %v588, 6
    %v687 = vmul.f32 %v663, %v685
    %v688 = vmul.f32 %v663, %v664
    %690 = vrot.lane.b32.xlu0 %v688, 64
    %v691 = vpop.permute.xlu0 %690
    %v693 = vadd.f32 %v687, %v691
    %v694 = vtanh.pop %v693
    %v695 = vmul.f32 %v683, %v694
    %696 = vmatpush.msra.mxu0 0.0
    %697 = vmatpush.msra.mxu0 0.0
    %698 = vmatpush.msra.mxu0 0.0
    %699 = vmatpush.msra.mxu0 0.0
    %700 = vmatpush.msra.mxu0 0.0
    %701 = vmatpush.msra.mxu0 0.0
    %702 = vmatpush.msra.mxu0 0.0
    %703 = vmatpush.msra.mxu0 0.0
    %704 = vmatpush.msra.mxu0 %v287
    %705 = vmatpush.msra.mxu0 %v285
    %706 = vmatpush.msra.mxu0 %v283
    %707 = vmatpush.msra.mxu0 %v281
    %708 = vmatpush.msra.mxu0 %v279
    %709 = vmatpush.msra.mxu0 %v277
    %710 = vmatpush.msra.mxu0 %v275
    %711 = vmatpush.msra.mxu0 %v273
    %712 = vmatmul.f32.gmra.mxu0 %v290
    %v713 = vpop.f32.mrf.mxu0
    %v714 = vadd.f32 0.0, %v713
    %715 = vdwg.mxu0
    %716 = vmatpush.msra.mxu0 0.0
    %717 = vmatpush.msra.mxu0 0.0
    %718 = vmatpush.msra.mxu0 0.0
    %719 = vmatpush.msra.mxu0 0.0
    %720 = vmatpush.msra.mxu0 0.0
    %721 = vmatpush.msra.mxu0 0.0
    %722 = vmatpush.msra.mxu0 0.0
    %723 = vmatpush.msra.mxu0 0.0
    %724 = vmatpush.msra.mxu0 %v288
    %725 = vmatpush.msra.mxu0 %v286
    %726 = vmatpush.msra.mxu0 %v284
    %727 = vmatpush.msra.mxu0 %v282
    %728 = vmatpush.msra.mxu0 %v280
    %729 = vmatpush.msra.mxu0 %v278
    %730 = vmatpush.msra.mxu0 %v276
    %731 = vmatpush.msra.mxu0 %v274
    %732 = vmatmul.f32.gmra.mxu0 %v290
    %v733 = vpop.f32.mrf.mxu0
    %v734 = vadd.f32 0.0, %v733
    %735 = vdwg.mxu0
    %v738 = vrot.slane %v714, 2
    %v739 = vrot.slane %v734, 2
    %v742 = vadd.f32 %v234, %v738
    %v743 = vadd.f32 %v254, %v739
    %v744 = vsub.f32 0.0, %v742
    %v745 = vmul.f32 %v744, 1.442695
    %v746 = vpow.pop %v745
    %v747 = vadd.f32 %v746, 1.0
    %v748 = vrcp.pop %v747
    %v749 = vmul.f32 %v747, %v748
    %v750 = vsub.f32 1.0, %v749
    %v751 = vmul.f32 %v748, %v750
    %v752 = vadd.f32 %v748, %v751
    %vm753 = vweird.f32 %v747
    %vm754 = vweird.f32 %v748
    %vm755 = vmor %vm753, %vm754
    %v756 = vsel %vm755, %v748, %v752
    %v757 = vand.u32 2147483647, %v747
    %vm758 = vcmp.eq.f32.partialorder %v757, 8.507059e+37
    %v759 = vand.u32 %v747, 2147483648
    %v760 = vor.u32 1.1754944e-38, %v759
    %v761 = vsel %vm758, %v760, %v756
    %v762 = vmul.f32 1.0, %v761
    %v763 = vtanh.pop %v743
    %v764 = vsub.f32 0.0, %v743
    %v765 = vmul.f32 %v764, 1.442695
    %v766 = vpow.pop %v765
    %v767 = vadd.f32 %v766, 1.0
    %v768 = vrcp.pop %v767
    %v769 = vmul.f32 %v767, %v768
    %v770 = vsub.f32 1.0, %v769
    %v771 = vmul.f32 %v768, %v770
    %v772 = vadd.f32 %v768, %v771
    %vm773 = vweird.f32 %v767
    %vm774 = vweird.f32 %v768
    %vm775 = vmor %vm773, %vm774
    %v776 = vsel %vm775, %v768, %v772
    %v777 = vand.u32 2147483647, %v767
    %vm778 = vcmp.eq.f32.partialorder %v777, 8.507059e+37
    %v779 = vand.u32 %v767, 2147483648
    %v780 = vor.u32 1.1754944e-38, %v779
    %v781 = vsel %vm778, %v780, %v776
    %v782 = vmul.f32 1.0, %v781
    %v783 = vmul.f32 %v762, 0.0
    %v784 = vmul.f32 %v762, %v763
    %786 = vrot.lane.b32.xlu0 %v784, 64
    %v787 = vpop.permute.xlu0 %786
    %v789 = vadd.f32 %v783, %v787
    %v790 = vtanh.pop %v789
    %v791 = vmul.f32 %v782, %v790
    %v793 = vrot.slane %v791, 6
    %794 = vrot.lane.b32.xlu0 %v793, 64
    %v795 = vpop.permute.xlu0 %794
    %v796 = vsel %vm172, %v795, 0
    %798 = vmatpush.msra.mxu0 0.0
    %799 = vmatpush.msra.mxu0 0.0
    %800 = vmatpush.msra.mxu0 0.0
    %801 = vmatpush.msra.mxu0 0.0
    %802 = vmatpush.msra.mxu0 0.0
    %803 = vmatpush.msra.mxu0 0.0
    %804 = vmatpush.msra.mxu0 0.0
    %805 = vmatpush.msra.mxu0 0.0
    %806 = vmatpush.msra.mxu0 %v287
    %807 = vmatpush.msra.mxu0 %v285
    %808 = vmatpush.msra.mxu0 %v283
    %809 = vmatpush.msra.mxu0 %v281
    %810 = vmatpush.msra.mxu0 %v279
    %811 = vmatpush.msra.mxu0 %v277
    %812 = vmatpush.msra.mxu0 %v275
    %813 = vmatpush.msra.mxu0 %v273
    %814 = vmatmul.f32.gmra.mxu0 %v796
    %v815 = vpop.f32.mrf.mxu0
    %v816 = vadd.f32 0.0, %v815
    %817 = vdwg.mxu0
    %818 = vmatpush.msra.mxu0 0.0
    %819 = vmatpush.msra.mxu0 0.0
    %820 = vmatpush.msra.mxu0 0.0
    %821 = vmatpush.msra.mxu0 0.0
    %822 = vmatpush.msra.mxu0 0.0
    %823 = vmatpush.msra.mxu0 0.0
    %824 = vmatpush.msra.mxu0 0.0
    %825 = vmatpush.msra.mxu0 0.0
    %826 = vmatpush.msra.mxu0 %v288
    %827 = vmatpush.msra.mxu0 %v286
    %828 = vmatpush.msra.mxu0 %v284
    %829 = vmatpush.msra.mxu0 %v282
    %830 = vmatpush.msra.mxu0 %v280
    %831 = vmatpush.msra.mxu0 %v278
    %832 = vmatpush.msra.mxu0 %v276
    %833 = vmatpush.msra.mxu0 %v274
    %834 = vmatmul.f32.gmra.mxu0 %v796
    %v835 = vpop.f32.mrf.mxu0
    %v836 = vadd.f32 0.0, %v835
    %837 = vdwg.mxu0
    %v840 = vrot.slane %v816, 4
    %v841 = vrot.slane %v836, 4
    %v844 = vadd.f32 %v234, %v840
    %v845 = vadd.f32 %v254, %v841
    %v846 = vsub.f32 0.0, %v844
    %v847 = vmul.f32 %v846, 1.442695
    %v848 = vpow.pop %v847
    %v849 = vadd.f32 %v848, 1.0
    %v850 = vrcp.pop %v849
    %v851 = vmul.f32 %v849, %v850
    %v852 = vsub.f32 1.0, %v851
    %v853 = vmul.f32 %v850, %v852
    %v854 = vadd.f32 %v850, %v853
    %vm855 = vweird.f32 %v849
    %vm856 = vweird.f32 %v850
    %vm857 = vmor %vm855, %vm856
    %v858 = vsel %vm857, %v850, %v854
    %v859 = vand.u32 2147483647, %v849
    %vm860 = vcmp.eq.f32.partialorder %v859, 8.507059e+37
    %v861 = vand.u32 %v849, 2147483648
    %v862 = vor.u32 1.1754944e-38, %v861
    %v863 = vsel %vm860, %v862, %v858
    %v864 = vmul.f32 1.0, %v863
    %v865 = vtanh.pop %v845
    %v866 = vsub.f32 0.0, %v845
    %v867 = vmul.f32 %v866, 1.442695
    %v868 = vpow.pop %v867
    %v869 = vadd.f32 %v868, 1.0
    %v870 = vrcp.pop %v869
    %v871 = vmul.f32 %v869, %v870
    %v872 = vsub.f32 1.0, %v871
    %v873 = vmul.f32 %v870, %v872
    %v874 = vadd.f32 %v870, %v873
    %vm875 = vweird.f32 %v869
    %vm876 = vweird.f32 %v870
    %vm877 = vmor %vm875, %vm876
    %v878 = vsel %vm877, %v870, %v874
    %v879 = vand.u32 2147483647, %v869
    %vm880 = vcmp.eq.f32.partialorder %v879, 8.507059e+37
    %v881 = vand.u32 %v869, 2147483648
    %v882 = vor.u32 1.1754944e-38, %v881
    %v883 = vsel %vm880, %v882, %v878
    %v884 = vmul.f32 1.0, %v883
    %v886 = vrot.slane %v789, 2
    %v888 = vmul.f32 %v864, %v886
    %v889 = vmul.f32 %v864, %v865
    %891 = vrot.lane.b32.xlu0 %v889, 64
    %v892 = vpop.permute.xlu0 %891
    %v894 = vadd.f32 %v888, %v892
    %v895 = vtanh.pop %v894
    %v896 = vmul.f32 %v884, %v895
    %v898 = vrot.slane %v896, 4
    %899 = vrot.lane.b32.xlu0 %v898, 64
    %v900 = vpop.permute.xlu0 %899
    %v901 = vsel %vm172, %v900, 0
    %903 = vmatpush.msra.mxu0 0.0
    %904 = vmatpush.msra.mxu0 0.0
    %905 = vmatpush.msra.mxu0 0.0
    %906 = vmatpush.msra.mxu0 0.0
    %907 = vmatpush.msra.mxu0 0.0
    %908 = vmatpush.msra.mxu0 0.0
    %909 = vmatpush.msra.mxu0 0.0
    %910 = vmatpush.msra.mxu0 0.0
    %911 = vmatpush.msra.mxu0 %v287
    %912 = vmatpush.msra.mxu0 %v285
    %913 = vmatpush.msra.mxu0 %v283
    %914 = vmatpush.msra.mxu0 %v281
    %915 = vmatpush.msra.mxu0 %v279
    %916 = vmatpush.msra.mxu0 %v277
    %917 = vmatpush.msra.mxu0 %v275
    %918 = vmatpush.msra.mxu0 %v273
    %919 = vmatmul.f32.gmra.mxu0 %v901
    %v920 = vpop.f32.mrf.mxu0
    %v921 = vadd.f32 0.0, %v920
    %922 = vdwg.mxu0
    %923 = vmatpush.msra.mxu0 0.0
    %924 = vmatpush.msra.mxu0 0.0
    %925 = vmatpush.msra.mxu0 0.0
    %926 = vmatpush.msra.mxu0 0.0
    %927 = vmatpush.msra.mxu0 0.0
    %928 = vmatpush.msra.mxu0 0.0
    %929 = vmatpush.msra.mxu0 0.0
    %930 = vmatpush.msra.mxu0 0.0
    %931 = vmatpush.msra.mxu0 %v288
    %932 = vmatpush.msra.mxu0 %v286
    %933 = vmatpush.msra.mxu0 %v284
    %934 = vmatpush.msra.mxu0 %v282
    %935 = vmatpush.msra.mxu0 %v280
    %936 = vmatpush.msra.mxu0 %v278
    %937 = vmatpush.msra.mxu0 %v276
    %938 = vmatpush.msra.mxu0 %v274
    %939 = vmatmul.f32.gmra.mxu0 %v901
    %v940 = vpop.f32.mrf.mxu0
    %v941 = vadd.f32 0.0, %v940
    %942 = vdwg.mxu0
    %v945 = vrot.slane %v921, 6
    %v946 = vrot.slane %v941, 6
    %v949 = vadd.f32 %v234, %v945
    %v950 = vadd.f32 %v254, %v946
    %v951 = vsub.f32 0.0, %v949
    %v952 = vmul.f32 %v951, 1.442695
    %v953 = vpow.pop %v952
    %v954 = vadd.f32 %v953, 1.0
    %v955 = vrcp.pop %v954
    %v956 = vmul.f32 %v954, %v955
    %v957 = vsub.f32 1.0, %v956
    %v958 = vmul.f32 %v955, %v957
    %v959 = vadd.f32 %v955, %v958
    %vm960 = vweird.f32 %v954
    %vm961 = vweird.f32 %v955
    %vm962 = vmor %vm960, %vm961
    %v963 = vsel %vm962, %v955, %v959
    %v964 = vand.u32 2147483647, %v954
    %vm965 = vcmp.eq.f32.partialorder %v964, 8.507059e+37
    %v966 = vand.u32 %v954, 2147483648
    %v967 = vor.u32 1.1754944e-38, %v966
    %v968 = vsel %vm965, %v967, %v963
    %v969 = vmul.f32 1.0, %v968
    %v970 = vtanh.pop %v950
    %v971 = vsub.f32 0.0, %v950
    %v972 = vmul.f32 %v971, 1.442695
    %v973 = vpow.pop %v972
    %v974 = vadd.f32 %v973, 1.0
    %v975 = vrcp.pop %v974
    %v976 = vmul.f32 %v974, %v975
    %v977 = vsub.f32 1.0, %v976
    %v978 = vmul.f32 %v975, %v977
    %v979 = vadd.f32 %v975, %v978
    %vm980 = vweird.f32 %v974
    %vm981 = vweird.f32 %v975
    %vm982 = vmor %vm980, %vm981
    %v983 = vsel %vm982, %v975, %v979
    %v984 = vand.u32 2147483647, %v974
    %vm985 = vcmp.eq.f32.partialorder %v984, 8.507059e+37
    %v986 = vand.u32 %v974, 2147483648
    %v987 = vor.u32 1.1754944e-38, %v986
    %v988 = vsel %vm985, %v987, %v983
    %v989 = vmul.f32 1.0, %v988
    %v991 = vrot.slane %v894, 2
    %v993 = vmul.f32 %v969, %v991
    %v994 = vmul.f32 %v969, %v970
    %996 = vrot.lane.b32.xlu0 %v994, 64
    %v997 = vpop.permute.xlu0 %996
    %v999 = vadd.f32 %v993, %v997
    %v1000 = vtanh.pop %v999
    %v1001 = vmul.f32 %v989, %v1000
    %v1003 = vrot.slane %v1001, 2
    %1004 = vrot.lane.b32.xlu0 %v1003, 64
    %v1005 = vpop.permute.xlu0 %1004
    %v1006 = vsel %vm172, %v1005, 0
    %1008 = vmatpush.msra.mxu0 0.0
    %1009 = vmatpush.msra.mxu0 0.0
    %1010 = vmatpush.msra.mxu0 0.0
    %1011 = vmatpush.msra.mxu0 0.0
    %1012 = vmatpush.msra.mxu0 0.0
    %1013 = vmatpush.msra.mxu0 0.0
    %1014 = vmatpush.msra.mxu0 0.0
    %1015 = vmatpush.msra.mxu0 0.0
    %1016 = vmatpush.msra.mxu0 %v287
    %1017 = vmatpush.msra.mxu0 %v285
    %1018 = vmatpush.msra.mxu0 %v283
    %1019 = vmatpush.msra.mxu0 %v281
    %1020 = vmatpush.msra.mxu0 %v279
    %1021 = vmatpush.msra.mxu0 %v277
    %1022 = vmatpush.msra.mxu0 %v275
    %1023 = vmatpush.msra.mxu0 %v273
    %1024 = vmatmul.f32.gmra.mxu0 %v1006
    %v1025 = vpop.f32.mrf.mxu0
    %v1026 = vadd.f32 0.0, %v1025
    %1027 = vdwg.mxu0
    %1028 = vmatpush.msra.mxu0 0.0
    %1029 = vmatpush.msra.mxu0 0.0
    %1030 = vmatpush.msra.mxu0 0.0
    %1031 = vmatpush.msra.mxu0 0.0
    %1032 = vmatpush.msra.mxu0 0.0
    %1033 = vmatpush.msra.mxu0 0.0
    %1034 = vmatpush.msra.mxu0 0.0
    %1035 = vmatpush.msra.mxu0 0.0
    %1036 = vmatpush.msra.mxu0 %v288
    %1037 = vmatpush.msra.mxu0 %v286
    %1038 = vmatpush.msra.mxu0 %v284
    %1039 = vmatpush.msra.mxu0 %v282
    %1040 = vmatpush.msra.mxu0 %v280
    %1041 = vmatpush.msra.mxu0 %v278
    %1042 = vmatpush.msra.mxu0 %v276
    %1043 = vmatpush.msra.mxu0 %v274
    %1044 = vmatmul.f32.gmra.mxu0 %v1006
    %v1045 = vpop.f32.mrf.mxu0
    %v1046 = vadd.f32 0.0, %v1045
    %1047 = vdwg.mxu0
    %v1048 = vadd.f32 %v234, %v1026
    %v1049 = vadd.f32 %v254, %v1046
    %v1050 = vsub.f32 0.0, %v1048
    %v1051 = vmul.f32 %v1050, 1.442695
    %v1052 = vpow.pop %v1051
    %v1053 = vadd.f32 %v1052, 1.0
    %v1054 = vrcp.pop %v1053
    %v1055 = vmul.f32 %v1053, %v1054
    %v1056 = vsub.f32 1.0, %v1055
    %v1057 = vmul.f32 %v1054, %v1056
    %v1058 = vadd.f32 %v1054, %v1057
    %vm1059 = vweird.f32 %v1053
    %vm1060 = vweird.f32 %v1054
    %vm1061 = vmor %vm1059, %vm1060
    %v1062 = vsel %vm1061, %v1054, %v1058
    %v1063 = vand.u32 2147483647, %v1053
    %vm1064 = vcmp.eq.f32.partialorder %v1063, 8.507059e+37
    %v1065 = vand.u32 %v1053, 2147483648
    %v1066 = vor.u32 1.1754944e-38, %v1065
    %v1067 = vsel %vm1064, %v1066, %v1062
    %v1068 = vmul.f32 1.0, %v1067
    %v1069 = vtanh.pop %v1049
    %v1070 = vsub.f32 0.0, %v1049
    %v1071 = vmul.f32 %v1070, 1.442695
    %v1072 = vpow.pop %v1071
    %v1073 = vadd.f32 %v1072, 1.0
    %v1074 = vrcp.pop %v1073
    %v1075 = vmul.f32 %v1073, %v1074
    %v1076 = vsub.f32 1.0, %v1075
    %v1077 = vmul.f32 %v1074, %v1076
    %v1078 = vadd.f32 %v1074, %v1077
    %vm1079 = vweird.f32 %v1073
    %vm1080 = vweird.f32 %v1074
    %vm1081 = vmor %vm1079, %vm1080
    %v1082 = vsel %vm1081, %v1074, %v1078
    %v1083 = vand.u32 2147483647, %v1073
    %vm1084 = vcmp.eq.f32.partialorder %v1083, 8.507059e+37
    %v1085 = vand.u32 %v1073, 2147483648
    %v1086 = vor.u32 1.1754944e-38, %v1085
    %v1087 = vsel %vm1084, %v1086, %v1082
    %v1088 = vmul.f32 1.0, %v1087
    %v1090 = vrot.slane %v999, 2
    %v1092 = vmul.f32 %v1068, %v1090
    %v1093 = vmul.f32 %v1068, %v1069
    %1095 = vrot.lane.b32.xlu0 %v1093, 64
    %v1096 = vpop.permute.xlu0 %1095
    %v1098 = vadd.f32 %v1092, %v1096
    %v1099 = vtanh.pop %v1098
    %v1100 = vmul.f32 %v1088, %v1099
    %v1102 = vsel %vm172, %v384, %v1100
    %1103 = vrot.lane.b32.xlu0 %v485, 64
    %v1104 = vpop.permute.xlu0 %1103
    %v1106 = vsel %vm172, %v1104, %v1001
    %1107 = vrot.lane.b32.xlu0 %v590, 64
    %v1108 = vpop.permute.xlu0 %1107
    %v1110 = vsel %vm172, %v1108, %v896
    %1112 = vrot.lane.b32.xlu0 %v695, 64
    %v1113 = vpop.permute.xlu0 %1112
    %v1115 = vsel %vm172, %v1113, %v791
    %vm1116 = vcmask 1041408
    %v1117 = vsel %vm1116, %v1102, %v1106
    %v1118 = vsel %vm106, %v1117, %v1110
    %vm1119 = vcmask 1045504
    %v1120 = vsel %vm1119, %v1118, %v1115
    %v1121 = vld [vmem:[#allocation7] sm:$0xff]
    %v1122 = vld [vmem:[#allocation7 + $0x8] sm:$0xff]
    %v1123 = vld [vmem:[#allocation7 + $0x10] sm:$0xff]
    %v1124 = vld [vmem:[#allocation7 + $0x18] sm:$0xff]
    %v1125 = vld [vmem:[#allocation7 + $0x20] sm:$0xff]
    %v1126 = vld [vmem:[#allocation7 + $0x28] sm:$0xff]
    %v1127 = vld [vmem:[#allocation7 + $0x30] sm:$0xff]
    %v1128 = vld [vmem:[#allocation7 + $0x38] sm:$0xff]
    %v1129 = vld [vmem:[#allocation7 + $0x40] sm:$0xff]
    %v1130 = vld [vmem:[#allocation7 + $0x48] sm:$0xff]
    %v1131 = vld [vmem:[#allocation7 + $0x50] sm:$0xff]
    %v1132 = vld [vmem:[#allocation7 + $0x58] sm:$0xff]
    %v1133 = vld [vmem:[#allocation7 + $0x60] sm:$0xff]
    %v1134 = vld [vmem:[#allocation7 + $0x68] sm:$0xff]
    %v1135 = vld [vmem:[#allocation7 + $0x70] sm:$0xff]
    %v1136 = vld [vmem:[#allocation7 + $0x78] sm:$0xff]
    %v1137 = vld [vmem:[#allocation7 + $0x80] sm:$0xff]
    %v1138 = vld [vmem:[#allocation7 + $0x88] sm:$0xff]
    %v1139 = vld [vmem:[#allocation7 + $0x90] sm:$0xff]
    %v1140 = vld [vmem:[#allocation7 + $0x98] sm:$0xff]
    %v1141 = vld [vmem:[#allocation7 + $0xa0] sm:$0xff]
    %v1142 = vld [vmem:[#allocation7 + $0xa8] sm:$0xff]
    %v1143 = vld [vmem:[#allocation7 + $0xb0] sm:$0xff]
    %v1144 = vld [vmem:[#allocation7 + $0xb8] sm:$0xff]
    %v1145 = vld [vmem:[#allocation7 + $0xc0] sm:$0xff]
    %v1146 = vld [vmem:[#allocation7 + $0xc8] sm:$0xff]
    %v1147 = vld [vmem:[#allocation7 + $0xd0] sm:$0xff]
    %v1148 = vld [vmem:[#allocation7 + $0xd8] sm:$0xff]
    %v1149 = vld [vmem:[#allocation7 + $0xe0] sm:$0xff]
    %v1150 = vld [vmem:[#allocation7 + $0xe8] sm:$0xff]
    %v1151 = vld [vmem:[#allocation7 + $0xf0] sm:$0xff]
    %v1152 = vld [vmem:[#allocation7 + $0xf8] sm:$0xff]
    %v1153 = vld [vmem:[#allocation7 + $0x100] sm:$0xff]
    %v1154 = vld [vmem:[#allocation7 + $0x108] sm:$0xff]
    %v1155 = vld [vmem:[#allocation7 + $0x110] sm:$0xff]
    %v1156 = vld [vmem:[#allocation7 + $0x118] sm:$0xff]
    %v1157 = vld [vmem:[#allocation7 + $0x120] sm:$0xff]
    %v1158 = vld [vmem:[#allocation7 + $0x128] sm:$0xff]
    %v1159 = vld [vmem:[#allocation7 + $0x130] sm:$0xff]
    %v1160 = vld [vmem:[#allocation7 + $0x138] sm:$0xff]
    %v1161 = vld [vmem:[#allocation7 + $0x140] sm:$0xff]
    %v1162 = vld [vmem:[#allocation7 + $0x148] sm:$0xff]
    %v1163 = vld [vmem:[#allocation7 + $0x150] sm:$0xff]
    %v1164 = vld [vmem:[#allocation7 + $0x158] sm:$0xff]
    %v1165 = vld [vmem:[#allocation7 + $0x160] sm:$0xff]
    %v1166 = vld [vmem:[#allocation7 + $0x168] sm:$0xff]
    %v1167 = vld [vmem:[#allocation7 + $0x170] sm:$0xff]
    %v1168 = vld [vmem:[#allocation7 + $0x178] sm:$0xff]
    %v1169 = vld [vmem:[#allocation7 + $0x180] sm:$0xff]
    %v1170 = vld [vmem:[#allocation7 + $0x188] sm:$0xff]
    %v1171 = vld [vmem:[#allocation7 + $0x190] sm:$0xff]
    %v1172 = vld [vmem:[#allocation7 + $0x198] sm:$0xff]
    %v1173 = vld [vmem:[#allocation7 + $0x1a0] sm:$0xff]
    %v1174 = vld [vmem:[#allocation7 + $0x1a8] sm:$0xff]
    %v1175 = vld [vmem:[#allocation7 + $0x1b0] sm:$0xff]
    %v1176 = vld [vmem:[#allocation7 + $0x1b8] sm:$0xff]
    %v1177 = vld [vmem:[#allocation7 + $0x1c0] sm:$0xff]
    %v1178 = vld [vmem:[#allocation7 + $0x1c8] sm:$0xff]
    %v1179 = vld [vmem:[#allocation7 + $0x1d0] sm:$0xff]
    %v1180 = vld [vmem:[#allocation7 + $0x1d8] sm:$0xff]
    %v1181 = vld [vmem:[#allocation7 + $0x1e0] sm:$0xff]
    %v1182 = vld [vmem:[#allocation7 + $0x1e8] sm:$0xff]
    %v1183 = vld [vmem:[#allocation7 + $0x1f0] sm:$0xff]
    %v1184 = vld [vmem:[#allocation7 + $0x1f8] sm:$0xff]
    %v1185 = vld [vmem:[%s8] sm:$0xf]
    %v1187 = vperm.slane %v1185, 0
    %v1188 = vperm.slane %v1185, 1
    %v1189 = vperm.slane %v1185, 2
    %v1190 = vperm.slane %v1185, 3
    %1195 = vmatpush.msra.mxu0 %v1181
    %1196 = vmatpush.msra.mxu0 %v1177
    %1197 = vmatpush.msra.mxu0 %v1173
    %1198 = vmatpush.msra.mxu0 %v1169
    %1199 = vmatpush.msra.mxu0 %v1165
    %1200 = vmatpush.msra.mxu0 %v1161
    %1201 = vmatpush.msra.mxu0 %v1157
    %1202 = vmatpush.msra.mxu0 %v1153
    %1203 = vmatpush.msra.mxu0 %v1149
    %1204 = vmatpush.msra.mxu0 %v1145
    %1205 = vmatpush.msra.mxu0 %v1141
    %1206 = vmatpush.msra.mxu0 %v1137
    %1207 = vmatpush.msra.mxu0 %v1133
    %1208 = vmatpush.msra.mxu0 %v1129
    %1209 = vmatpush.msra.mxu0 %v1125
    %1210 = vmatpush.msra.mxu0 %v1121
    %1211 = vmatmul.f32.gmra.mxu0 %v1120
    %v1212 = vpop.f32.mrf.mxu0
    %v1213 = vadd.f32 %v1187, %v1212
    %1214 = vdwg.mxu0
    %1215 = vmatpush.msra.mxu0 %v1182
    %1216 = vmatpush.msra.mxu0 %v1178
    %1217 = vmatpush.msra.mxu0 %v1174
    %1218 = vmatpush.msra.mxu0 %v1170
    %1219 = vmatpush.msra.mxu0 %v1166
    %1220 = vmatpush.msra.mxu0 %v1162
    %1221 = vmatpush.msra.mxu0 %v1158
    %1222 = vmatpush.msra.mxu0 %v1154
    %1223 = vmatpush.msra.mxu0 %v1150
    %1224 = vmatpush.msra.mxu0 %v1146
    %1225 = vmatpush.msra.mxu0 %v1142
    %1226 = vmatpush.msra.mxu0 %v1138
    %1227 = vmatpush.msra.mxu0 %v1134
    %1228 = vmatpush.msra.mxu0 %v1130
    %1229 = vmatpush.msra.mxu0 %v1126
    %1230 = vmatpush.msra.mxu0 %v1122
    %1231 = vmatmul.f32.gmra.mxu0 %v1120
    %v1232 = vpop.f32.mrf.mxu0
    %v1233 = vadd.f32 %v1188, %v1232
    %1234 = vdwg.mxu0
    %1235 = vmatpush.msra.mxu0 %v1183
    %1236 = vmatpush.msra.mxu0 %v1179
    %1237 = vmatpush.msra.mxu0 %v1175
    %1238 = vmatpush.msra.mxu0 %v1171
    %1239 = vmatpush.msra.mxu0 %v1167
    %1240 = vmatpush.msra.mxu0 %v1163
    %1241 = vmatpush.msra.mxu0 %v1159
    %1242 = vmatpush.msra.mxu0 %v1155
    %1243 = vmatpush.msra.mxu0 %v1151
    %1244 = vmatpush.msra.mxu0 %v1147
    %1245 = vmatpush.msra.mxu0 %v1143
    %1246 = vmatpush.msra.mxu0 %v1139
    %1247 = vmatpush.msra.mxu0 %v1135
    %1248 = vmatpush.msra.mxu0 %v1131
    %1249 = vmatpush.msra.mxu0 %v1127
    %1250 = vmatpush.msra.mxu0 %v1123
    %1251 = vmatmul.f32.gmra.mxu0 %v1120
    %v1252 = vpop.f32.mrf.mxu0
    %v1253 = vadd.f32 %v1189, %v1252
    %1254 = vdwg.mxu0
    %1255 = vmatpush.msra.mxu0 %v1184
    %1256 = vmatpush.msra.mxu0 %v1180
    %1257 = vmatpush.msra.mxu0 %v1176
    %1258 = vmatpush.msra.mxu0 %v1172
    %1259 = vmatpush.msra.mxu0 %v1168
    %1260 = vmatpush.msra.mxu0 %v1164
    %1261 = vmatpush.msra.mxu0 %v1160
    %1262 = vmatpush.msra.mxu0 %v1156
    %1263 = vmatpush.msra.mxu0 %v1152
    %1264 = vmatpush.msra.mxu0 %v1148
    %1265 = vmatpush.msra.mxu0 %v1144
    %1266 = vmatpush.msra.mxu0 %v1140
    %1267 = vmatpush.msra.mxu0 %v1136
    %1268 = vmatpush.msra.mxu0 %v1132
    %1269 = vmatpush.msra.mxu0 %v1128
    %1270 = vmatpush.msra.mxu0 %v1124
    %1271 = vmatmul.f32.gmra.mxu0 %v1120
    %v1272 = vpop.f32.mrf.mxu0
    %v1273 = vadd.f32 %v1190, %v1272
    %1274 = vdwg.mxu0
    %v1275 = vld [vmem:[#allocation8] sm:$0xff]
    %v1276 = vld [vmem:[#allocation8 + $0x8] sm:$0xff]
    %v1277 = vld [vmem:[#allocation8 + $0x10] sm:$0xff]
    %v1278 = vld [vmem:[#allocation8 + $0x18] sm:$0xff]
    %v1279 = vld [vmem:[#allocation8 + $0x20] sm:$0xff]
    %v1280 = vld [vmem:[#allocation8 + $0x28] sm:$0xff]
    %v1281 = vld [vmem:[#allocation8 + $0x30] sm:$0xff]
    %v1282 = vld [vmem:[#allocation8 + $0x38] sm:$0xff]
    %v1283 = vld [vmem:[#allocation8 + $0x40] sm:$0xff]
    %v1284 = vld [vmem:[#allocation8 + $0x48] sm:$0xff]
    %v1285 = vld [vmem:[#allocation8 + $0x50] sm:$0xff]
    %v1286 = vld [vmem:[#allocation8 + $0x58] sm:$0xff]
    %v1287 = vld [vmem:[#allocation8 + $0x60] sm:$0xff]
    %v1288 = vld [vmem:[#allocation8 + $0x68] sm:$0xff]
    %v1289 = vld [vmem:[#allocation8 + $0x70] sm:$0xff]
    %v1290 = vld [vmem:[#allocation8 + $0x78] sm:$0xff]
    %s1291 = scalar_lea.vmem [#allocation8], 128
    %v1292 = vld [vmem:[%s1291] sm:$0xff]
    %v1293 = vld [vmem:[%s1291 + $0x8] sm:$0xff]
    %v1294 = vld [vmem:[%s1291 + $0x10] sm:$0xff]
    %v1295 = vld [vmem:[%s1291 + $0x18] sm:$0xff]
    %v1296 = vld [vmem:[%s1291 + $0x20] sm:$0xff]
    %v1297 = vld [vmem:[%s1291 + $0x28] sm:$0xff]
    %v1298 = vld [vmem:[%s1291 + $0x30] sm:$0xff]
    %v1299 = vld [vmem:[%s1291 + $0x38] sm:$0xff]
    %v1300 = vld [vmem:[%s1291 + $0x40] sm:$0xff]
    %v1301 = vld [vmem:[%s1291 + $0x48] sm:$0xff]
    %v1302 = vld [vmem:[%s1291 + $0x50] sm:$0xff]
    %v1303 = vld [vmem:[%s1291 + $0x58] sm:$0xff]
    %v1304 = vld [vmem:[%s1291 + $0x60] sm:$0xff]
    %v1305 = vld [vmem:[%s1291 + $0x68] sm:$0xff]
    %v1306 = vld [vmem:[%s1291 + $0x70] sm:$0xff]
    %v1307 = vld [vmem:[%s1291 + $0x78] sm:$0xff]
    %1308 = vmatpush.msra.mxu0 0.0
    %1309 = vmatpush.msra.mxu0 0.0
    %1310 = vmatpush.msra.mxu0 0.0
    %1311 = vmatpush.msra.mxu0 0.0
    %1312 = vmatpush.msra.mxu0 0.0
    %1313 = vmatpush.msra.mxu0 0.0
    %1314 = vmatpush.msra.mxu0 0.0
    %1315 = vmatpush.msra.mxu0 0.0
    %1316 = vmatpush.msra.mxu0 %v1289
    %1317 = vmatpush.msra.mxu0 %v1287
    %1318 = vmatpush.msra.mxu0 %v1285
    %1319 = vmatpush.msra.mxu0 %v1283
    %1320 = vmatpush.msra.mxu0 %v1281
    %1321 = vmatpush.msra.mxu0 %v1279
    %1322 = vmatpush.msra.mxu0 %v1277
    %1323 = vmatpush.msra.mxu0 %v1275
    %1324 = vmatmul.f32.gmra.mxu0 %v290
    %v1325 = vpop.f32.mrf.mxu0
    %v1326 = vadd.f32 0.0, %v1325
    %1327 = vdwg.mxu0
    %1328 = vmatpush.msra.mxu0 0.0
    %1329 = vmatpush.msra.mxu0 0.0
    %1330 = vmatpush.msra.mxu0 0.0
    %1331 = vmatpush.msra.mxu0 0.0
    %1332 = vmatpush.msra.mxu0 0.0
    %1333 = vmatpush.msra.mxu0 0.0
    %1334 = vmatpush.msra.mxu0 0.0
    %1335 = vmatpush.msra.mxu0 0.0
    %1336 = vmatpush.msra.mxu0 %v1290
    %1337 = vmatpush.msra.mxu0 %v1288
    %1338 = vmatpush.msra.mxu0 %v1286
    %1339 = vmatpush.msra.mxu0 %v1284
    %1340 = vmatpush.msra.mxu0 %v1282
    %1341 = vmatpush.msra.mxu0 %v1280
    %1342 = vmatpush.msra.mxu0 %v1278
    %1343 = vmatpush.msra.mxu0 %v1276
    %1344 = vmatmul.f32.gmra.mxu0 %v290
    %v1345 = vpop.f32.mrf.mxu0
    %v1346 = vadd.f32 0.0, %v1345
    %1347 = vdwg.mxu0
    %v1348 = vadd.f32 %v1213, %v1326
    %v1349 = vadd.f32 %v1233, %v1346
    %v1350 = vsub.f32 0.0, %v1348
    %v1351 = vmul.f32 %v1350, 1.442695
    %v1352 = vpow.pop %v1351
    %v1353 = vadd.f32 %v1352, 1.0
    %v1354 = vrcp.pop %v1353
    %v1355 = vmul.f32 %v1353, %v1354
    %v1356 = vsub.f32 1.0, %v1355
    %v1357 = vmul.f32 %v1354, %v1356
    %v1358 = vadd.f32 %v1354, %v1357
    %vm1359 = vweird.f32 %v1353
    %vm1360 = vweird.f32 %v1354
    %vm1361 = vmor %vm1359, %vm1360
    %v1362 = vsel %vm1361, %v1354, %v1358
    %v1363 = vand.u32 2147483647, %v1353
    %vm1364 = vcmp.eq.f32.partialorder %v1363, 8.507059e+37
    %v1365 = vand.u32 %v1353, 2147483648
    %v1366 = vor.u32 1.1754944e-38, %v1365
    %v1367 = vsel %vm1364, %v1366, %v1362
    %v1368 = vmul.f32 1.0, %v1367
    %v1369 = vtanh.pop %v1349
    %v1370 = vsub.f32 0.0, %v1349
    %v1371 = vmul.f32 %v1370, 1.442695
    %v1372 = vpow.pop %v1371
    %v1373 = vadd.f32 %v1372, 1.0
    %v1374 = vrcp.pop %v1373
    %v1375 = vmul.f32 %v1373, %v1374
    %v1376 = vsub.f32 1.0, %v1375
    %v1377 = vmul.f32 %v1374, %v1376
    %v1378 = vadd.f32 %v1374, %v1377
    %vm1379 = vweird.f32 %v1373
    %vm1380 = vweird.f32 %v1374
    %vm1381 = vmor %vm1379, %vm1380
    %v1382 = vsel %vm1381, %v1374, %v1378
    %v1383 = vand.u32 2147483647, %v1373
    %vm1384 = vcmp.eq.f32.partialorder %v1383, 8.507059e+37
    %v1385 = vand.u32 %v1373, 2147483648
    %v1386 = vor.u32 1.1754944e-38, %v1385
    %v1387 = vsel %vm1384, %v1386, %v1382
    %v1388 = vmul.f32 1.0, %v1387
    %v1389 = vmul.f32 %v1368, 0.0
    %v1390 = vmul.f32 %v1368, %v1369
    %1392 = vrot.lane.b32.xlu0 %v1390, 64
    %v1393 = vpop.permute.xlu0 %1392
    %v1395 = vadd.f32 %v1389, %v1393
    %v1396 = vtanh.pop %v1395
    %v1397 = vmul.f32 %v1388, %v1396
    %1399 = vrot.lane.b32.xlu0 %v1397, 64
    %v1400 = vpop.permute.xlu0 %1399
    %v1401 = vsel %vm172, %v1400, 0
    %1403 = vmatpush.msra.mxu0 0.0
    %1404 = vmatpush.msra.mxu0 0.0
    %1405 = vmatpush.msra.mxu0 0.0
    %1406 = vmatpush.msra.mxu0 0.0
    %1407 = vmatpush.msra.mxu0 0.0
    %1408 = vmatpush.msra.mxu0 0.0
    %1409 = vmatpush.msra.mxu0 0.0
    %1410 = vmatpush.msra.mxu0 0.0
    %1411 = vmatpush.msra.mxu0 %v1289
    %1412 = vmatpush.msra.mxu0 %v1287
    %1413 = vmatpush.msra.mxu0 %v1285
    %1414 = vmatpush.msra.mxu0 %v1283
    %1415 = vmatpush.msra.mxu0 %v1281
    %1416 = vmatpush.msra.mxu0 %v1279
    %1417 = vmatpush.msra.mxu0 %v1277
    %1418 = vmatpush.msra.mxu0 %v1275
    %1419 = vmatmul.f32.gmra.mxu0 %v1401
    %v1420 = vpop.f32.mrf.mxu0
    %v1421 = vadd.f32 0.0, %v1420
    %1422 = vdwg.mxu0
    %1423 = vmatpush.msra.mxu0 0.0
    %1424 = vmatpush.msra.mxu0 0.0
    %1425 = vmatpush.msra.mxu0 0.0
    %1426 = vmatpush.msra.mxu0 0.0
    %1427 = vmatpush.msra.mxu0 0.0
    %1428 = vmatpush.msra.mxu0 0.0
    %1429 = vmatpush.msra.mxu0 0.0
    %1430 = vmatpush.msra.mxu0 0.0
    %1431 = vmatpush.msra.mxu0 %v1290
    %1432 = vmatpush.msra.mxu0 %v1288
    %1433 = vmatpush.msra.mxu0 %v1286
    %1434 = vmatpush.msra.mxu0 %v1284
    %1435 = vmatpush.msra.mxu0 %v1282
    %1436 = vmatpush.msra.mxu0 %v1280
    %1437 = vmatpush.msra.mxu0 %v1278
    %1438 = vmatpush.msra.mxu0 %v1276
    %1439 = vmatmul.f32.gmra.mxu0 %v1401
    %v1440 = vpop.f32.mrf.mxu0
    %v1441 = vadd.f32 0.0, %v1440
    %1442 = vdwg.mxu0
    %v1445 = vrot.slane %v1421, 6
    %v1446 = vrot.slane %v1441, 6
    %v1449 = vadd.f32 %v1213, %v1445
    %v1450 = vadd.f32 %v1233, %v1446
    %v1451 = vsub.f32 0.0, %v1449
    %v1452 = vmul.f32 %v1451, 1.442695
    %v1453 = vpow.pop %v1452
    %v1454 = vadd.f32 %v1453, 1.0
    %v1455 = vrcp.pop %v1454
    %v1456 = vmul.f32 %v1454, %v1455
    %v1457 = vsub.f32 1.0, %v1456
    %v1458 = vmul.f32 %v1455, %v1457
    %v1459 = vadd.f32 %v1455, %v1458
    %vm1460 = vweird.f32 %v1454
    %vm1461 = vweird.f32 %v1455
    %vm1462 = vmor %vm1460, %vm1461
    %v1463 = vsel %vm1462, %v1455, %v1459
    %v1464 = vand.u32 2147483647, %v1454
    %vm1465 = vcmp.eq.f32.partialorder %v1464, 8.507059e+37
    %v1466 = vand.u32 %v1454, 2147483648
    %v1467 = vor.u32 1.1754944e-38, %v1466
    %v1468 = vsel %vm1465, %v1467, %v1463
    %v1469 = vmul.f32 1.0, %v1468
    %v1470 = vtanh.pop %v1450
    %v1471 = vsub.f32 0.0, %v1450
    %v1472 = vmul.f32 %v1471, 1.442695
    %v1473 = vpow.pop %v1472
    %v1474 = vadd.f32 %v1473, 1.0
    %v1475 = vrcp.pop %v1474
    %v1476 = vmul.f32 %v1474, %v1475
    %v1477 = vsub.f32 1.0, %v1476
    %v1478 = vmul.f32 %v1475, %v1477
    %v1479 = vadd.f32 %v1475, %v1478
    %vm1480 = vweird.f32 %v1474
    %vm1481 = vweird.f32 %v1475
    %vm1482 = vmor %vm1480, %vm1481
    %v1483 = vsel %vm1482, %v1475, %v1479
    %v1484 = vand.u32 2147483647, %v1474
    %vm1485 = vcmp.eq.f32.partialorder %v1484, 8.507059e+37
    %v1486 = vand.u32 %v1474, 2147483648
    %v1487 = vor.u32 1.1754944e-38, %v1486
    %v1488 = vsel %vm1485, %v1487, %v1483
    %v1489 = vmul.f32 1.0, %v1488
    %v1491 = vrot.slane %v1395, 6
    %v1493 = vmul.f32 %v1469, %v1491
    %v1494 = vmul.f32 %v1469, %v1470
    %1496 = vrot.lane.b32.xlu0 %v1494, 64
    %v1497 = vpop.permute.xlu0 %1496
    %v1499 = vadd.f32 %v1493, %v1497
    %v1500 = vtanh.pop %v1499
    %v1501 = vmul.f32 %v1489, %v1500
    %v1503 = vrot.slane %v1501, 2
    %1504 = vrot.lane.b32.xlu0 %v1503, 64
    %v1505 = vpop.permute.xlu0 %1504
    %v1506 = vsel %vm172, %v1505, 0
    %1508 = vmatpush.msra.mxu0 0.0
    %1509 = vmatpush.msra.mxu0 0.0
    %1510 = vmatpush.msra.mxu0 0.0
    %1511 = vmatpush.msra.mxu0 0.0
    %1512 = vmatpush.msra.mxu0 0.0
    %1513 = vmatpush.msra.mxu0 0.0
    %1514 = vmatpush.msra.mxu0 0.0
    %1515 = vmatpush.msra.mxu0 0.0
    %1516 = vmatpush.msra.mxu0 %v1289
    %1517 = vmatpush.msra.mxu0 %v1287
    %1518 = vmatpush.msra.mxu0 %v1285
    %1519 = vmatpush.msra.mxu0 %v1283
    %1520 = vmatpush.msra.mxu0 %v1281
    %1521 = vmatpush.msra.mxu0 %v1279
    %1522 = vmatpush.msra.mxu0 %v1277
    %1523 = vmatpush.msra.mxu0 %v1275
    %1524 = vmatmul.f32.gmra.mxu0 %v1506
    %v1525 = vpop.f32.mrf.mxu0
    %v1526 = vadd.f32 0.0, %v1525
    %1527 = vdwg.mxu0
    %1528 = vmatpush.msra.mxu0 0.0
    %1529 = vmatpush.msra.mxu0 0.0
    %1530 = vmatpush.msra.mxu0 0.0
    %1531 = vmatpush.msra.mxu0 0.0
    %1532 = vmatpush.msra.mxu0 0.0
    %1533 = vmatpush.msra.mxu0 0.0
    %1534 = vmatpush.msra.mxu0 0.0
    %1535 = vmatpush.msra.mxu0 0.0
    %1536 = vmatpush.msra.mxu0 %v1290
    %1537 = vmatpush.msra.mxu0 %v1288
    %1538 = vmatpush.msra.mxu0 %v1286
    %1539 = vmatpush.msra.mxu0 %v1284
    %1540 = vmatpush.msra.mxu0 %v1282
    %1541 = vmatpush.msra.mxu0 %v1280
    %1542 = vmatpush.msra.mxu0 %v1278
    %1543 = vmatpush.msra.mxu0 %v1276
    %1544 = vmatmul.f32.gmra.mxu0 %v1506
    %v1545 = vpop.f32.mrf.mxu0
    %v1546 = vadd.f32 0.0, %v1545
    %1547 = vdwg.mxu0
    %v1550 = vrot.slane %v1526, 4
    %v1551 = vrot.slane %v1546, 4
    %v1554 = vadd.f32 %v1213, %v1550
    %v1555 = vadd.f32 %v1233, %v1551
    %v1556 = vsub.f32 0.0, %v1554
    %v1557 = vmul.f32 %v1556, 1.442695
    %v1558 = vpow.pop %v1557
    %v1559 = vadd.f32 %v1558, 1.0
    %v1560 = vrcp.pop %v1559
    %v1561 = vmul.f32 %v1559, %v1560
    %v1562 = vsub.f32 1.0, %v1561
    %v1563 = vmul.f32 %v1560, %v1562
    %v1564 = vadd.f32 %v1560, %v1563
    %vm1565 = vweird.f32 %v1559
    %vm1566 = vweird.f32 %v1560
    %vm1567 = vmor %vm1565, %vm1566
    %v1568 = vsel %vm1567, %v1560, %v1564
    %v1569 = vand.u32 2147483647, %v1559
    %vm1570 = vcmp.eq.f32.partialorder %v1569, 8.507059e+37
    %v1571 = vand.u32 %v1559, 2147483648
    %v1572 = vor.u32 1.1754944e-38, %v1571
    %v1573 = vsel %vm1570, %v1572, %v1568
    %v1574 = vmul.f32 1.0, %v1573
    %v1575 = vtanh.pop %v1555
    %v1576 = vsub.f32 0.0, %v1555
    %v1577 = vmul.f32 %v1576, 1.442695
    %v1578 = vpow.pop %v1577
    %v1579 = vadd.f32 %v1578, 1.0
    %v1580 = vrcp.pop %v1579
    %v1581 = vmul.f32 %v1579, %v1580
    %v1582 = vsub.f32 1.0, %v1581
    %v1583 = vmul.f32 %v1580, %v1582
    %v1584 = vadd.f32 %v1580, %v1583
    %vm1585 = vweird.f32 %v1579
    %vm1586 = vweird.f32 %v1580
    %vm1587 = vmor %vm1585, %vm1586
    %v1588 = vsel %vm1587, %v1580, %v1584
    %v1589 = vand.u32 2147483647, %v1579
    %vm1590 = vcmp.eq.f32.partialorder %v1589, 8.507059e+37
    %v1591 = vand.u32 %v1579, 2147483648
    %v1592 = vor.u32 1.1754944e-38, %v1591
    %v1593 = vsel %vm1590, %v1592, %v1588
    %v1594 = vmul.f32 1.0, %v1593
    %v1596 = vrot.slane %v1499, 6
    %v1598 = vmul.f32 %v1574, %v1596
    %v1599 = vmul.f32 %v1574, %v1575
    %1601 = vrot.lane.b32.xlu0 %v1599, 64
    %v1602 = vpop.permute.xlu0 %1601
    %v1604 = vadd.f32 %v1598, %v1602
    %v1605 = vtanh.pop %v1604
    %v1606 = vmul.f32 %v1594, %v1605
    %v1608 = vrot.slane %v1606, 4
    %1609 = vrot.lane.b32.xlu0 %v1608, 64
    %v1610 = vpop.permute.xlu0 %1609
    %v1611 = vsel %vm172, %v1610, 0
    %1613 = vmatpush.msra.mxu0 0.0
    %1614 = vmatpush.msra.mxu0 0.0
    %1615 = vmatpush.msra.mxu0 0.0
    %1616 = vmatpush.msra.mxu0 0.0
    %1617 = vmatpush.msra.mxu0 0.0
    %1618 = vmatpush.msra.mxu0 0.0
    %1619 = vmatpush.msra.mxu0 0.0
    %1620 = vmatpush.msra.mxu0 0.0
    %1621 = vmatpush.msra.mxu0 %v1289
    %1622 = vmatpush.msra.mxu0 %v1287
    %1623 = vmatpush.msra.mxu0 %v1285
    %1624 = vmatpush.msra.mxu0 %v1283
    %1625 = vmatpush.msra.mxu0 %v1281
    %1626 = vmatpush.msra.mxu0 %v1279
    %1627 = vmatpush.msra.mxu0 %v1277
    %1628 = vmatpush.msra.mxu0 %v1275
    %1629 = vmatmul.f32.gmra.mxu0 %v1611
    %v1630 = vpop.f32.mrf.mxu0
    %v1631 = vadd.f32 0.0, %v1630
    %1632 = vdwg.mxu0
    %1633 = vmatpush.msra.mxu0 0.0
    %1634 = vmatpush.msra.mxu0 0.0
    %1635 = vmatpush.msra.mxu0 0.0
    %1636 = vmatpush.msra.mxu0 0.0
    %1637 = vmatpush.msra.mxu0 0.0
    %1638 = vmatpush.msra.mxu0 0.0
    %1639 = vmatpush.msra.mxu0 0.0
    %1640 = vmatpush.msra.mxu0 0.0
    %1641 = vmatpush.msra.mxu0 %v1290
    %1642 = vmatpush.msra.mxu0 %v1288
    %1643 = vmatpush.msra.mxu0 %v1286
    %1644 = vmatpush.msra.mxu0 %v1284
    %1645 = vmatpush.msra.mxu0 %v1282
    %1646 = vmatpush.msra.mxu0 %v1280
    %1647 = vmatpush.msra.mxu0 %v1278
    %1648 = vmatpush.msra.mxu0 %v1276
    %1649 = vmatmul.f32.gmra.mxu0 %v1611
    %v1650 = vpop.f32.mrf.mxu0
    %v1651 = vadd.f32 0.0, %v1650
    %1652 = vdwg.mxu0
    %v1655 = vrot.slane %v1631, 2
    %v1656 = vrot.slane %v1651, 2
    %v1659 = vadd.f32 %v1213, %v1655
    %v1660 = vadd.f32 %v1233, %v1656
    %v1661 = vsub.f32 0.0, %v1659
    %v1662 = vmul.f32 %v1661, 1.442695
    %v1663 = vpow.pop %v1662
    %v1664 = vadd.f32 %v1663, 1.0
    %v1665 = vrcp.pop %v1664
    %v1666 = vmul.f32 %v1664, %v1665
    %v1667 = vsub.f32 1.0, %v1666
    %v1668 = vmul.f32 %v1665, %v1667
    %v1669 = vadd.f32 %v1665, %v1668
    %vm1670 = vweird.f32 %v1664
    %vm1671 = vweird.f32 %v1665
    %vm1672 = vmor %vm1670, %vm1671
    %v1673 = vsel %vm1672, %v1665, %v1669
    %v1674 = vand.u32 2147483647, %v1664
    %vm1675 = vcmp.eq.f32.partialorder %v1674, 8.507059e+37
    %v1676 = vand.u32 %v1664, 2147483648
    %v1677 = vor.u32 1.1754944e-38, %v1676
    %v1678 = vsel %vm1675, %v1677, %v1673
    %v1679 = vmul.f32 1.0, %v1678
    %v1680 = vtanh.pop %v1660
    %v1681 = vsub.f32 0.0, %v1660
    %v1682 = vmul.f32 %v1681, 1.442695
    %v1683 = vpow.pop %v1682
    %v1684 = vadd.f32 %v1683, 1.0
    %v1685 = vrcp.pop %v1684
    %v1686 = vmul.f32 %v1684, %v1685
    %v1687 = vsub.f32 1.0, %v1686
    %v1688 = vmul.f32 %v1685, %v1687
    %v1689 = vadd.f32 %v1685, %v1688
    %vm1690 = vweird.f32 %v1684
    %vm1691 = vweird.f32 %v1685
    %vm1692 = vmor %vm1690, %vm1691
    %v1693 = vsel %vm1692, %v1685, %v1689
    %v1694 = vand.u32 2147483647, %v1684
    %vm1695 = vcmp.eq.f32.partialorder %v1694, 8.507059e+37
    %v1696 = vand.u32 %v1684, 2147483648
    %v1697 = vor.u32 1.1754944e-38, %v1696
    %v1698 = vsel %vm1695, %v1697, %v1693
    %v1699 = vmul.f32 1.0, %v1698
    %v1701 = vrot.slane %v1604, 6
    %v1703 = vmul.f32 %v1679, %v1701
    %v1704 = vmul.f32 %v1679, %v1680
    %1706 = vrot.lane.b32.xlu0 %v1704, 64
    %v1707 = vpop.permute.xlu0 %1706
    %v1709 = vadd.f32 %v1703, %v1707
    %v1710 = vtanh.pop %v1709
    %v1711 = vmul.f32 %v1699, %v1710
    %1712 = vmatpush.msra.mxu0 0.0
    %1713 = vmatpush.msra.mxu0 0.0
    %1714 = vmatpush.msra.mxu0 0.0
    %1715 = vmatpush.msra.mxu0 0.0
    %1716 = vmatpush.msra.mxu0 0.0
    %1717 = vmatpush.msra.mxu0 0.0
    %1718 = vmatpush.msra.mxu0 0.0
    %1719 = vmatpush.msra.mxu0 0.0
    %1720 = vmatpush.msra.mxu0 %v1306
    %1721 = vmatpush.msra.mxu0 %v1304
    %1722 = vmatpush.msra.mxu0 %v1302
    %1723 = vmatpush.msra.mxu0 %v1300
    %1724 = vmatpush.msra.mxu0 %v1298
    %1725 = vmatpush.msra.mxu0 %v1296
    %1726 = vmatpush.msra.mxu0 %v1294
    %1727 = vmatpush.msra.mxu0 %v1292
    %1728 = vmatmul.f32.gmra.mxu0 %v290
    %v1729 = vpop.f32.mrf.mxu0
    %v1730 = vadd.f32 0.0, %v1729
    %1731 = vdwg.mxu0
    %1732 = vmatpush.msra.mxu0 0.0
    %1733 = vmatpush.msra.mxu0 0.0
    %1734 = vmatpush.msra.mxu0 0.0
    %1735 = vmatpush.msra.mxu0 0.0
    %1736 = vmatpush.msra.mxu0 0.0
    %1737 = vmatpush.msra.mxu0 0.0
    %1738 = vmatpush.msra.mxu0 0.0
    %1739 = vmatpush.msra.mxu0 0.0
    %1740 = vmatpush.msra.mxu0 %v1307
    %1741 = vmatpush.msra.mxu0 %v1305
    %1742 = vmatpush.msra.mxu0 %v1303
    %1743 = vmatpush.msra.mxu0 %v1301
    %1744 = vmatpush.msra.mxu0 %v1299
    %1745 = vmatpush.msra.mxu0 %v1297
    %1746 = vmatpush.msra.mxu0 %v1295
    %1747 = vmatpush.msra.mxu0 %v1293
    %1748 = vmatmul.f32.gmra.mxu0 %v290
    %v1749 = vpop.f32.mrf.mxu0
    %v1750 = vadd.f32 0.0, %v1749
    %1751 = vdwg.mxu0
    %v1754 = vrot.slane %v1730, 2
    %v1755 = vrot.slane %v1750, 2
    %v1758 = vadd.f32 %v1253, %v1754
    %v1759 = vadd.f32 %v1273, %v1755
    %v1760 = vsub.f32 0.0, %v1758
    %v1761 = vmul.f32 %v1760, 1.442695
    %v1762 = vpow.pop %v1761
    %v1763 = vadd.f32 %v1762, 1.0
    %v1764 = vrcp.pop %v1763
    %v1765 = vmul.f32 %v1763, %v1764
    %v1766 = vsub.f32 1.0, %v1765
    %v1767 = vmul.f32 %v1764, %v1766
    %v1768 = vadd.f32 %v1764, %v1767
    %vm1769 = vweird.f32 %v1763
    %vm1770 = vweird.f32 %v1764
    %vm1771 = vmor %vm1769, %vm1770
    %v1772 = vsel %vm1771, %v1764, %v1768
    %v1773 = vand.u32 2147483647, %v1763
    %vm1774 = vcmp.eq.f32.partialorder %v1773, 8.507059e+37
    %v1775 = vand.u32 %v1763, 2147483648
    %v1776 = vor.u32 1.1754944e-38, %v1775
    %v1777 = vsel %vm1774, %v1776, %v1772
    %v1778 = vmul.f32 1.0, %v1777
    %v1779 = vtanh.pop %v1759
    %v1780 = vsub.f32 0.0, %v1759
    %v1781 = vmul.f32 %v1780, 1.442695
    %v1782 = vpow.pop %v1781
    %v1783 = vadd.f32 %v1782, 1.0
    %v1784 = vrcp.pop %v1783
    %v1785 = vmul.f32 %v1783, %v1784
    %v1786 = vsub.f32 1.0, %v1785
    %v1787 = vmul.f32 %v1784, %v1786
    %v1788 = vadd.f32 %v1784, %v1787
    %vm1789 = vweird.f32 %v1783
    %vm1790 = vweird.f32 %v1784
    %vm1791 = vmor %vm1789, %vm1790
    %v1792 = vsel %vm1791, %v1784, %v1788
    %v1793 = vand.u32 2147483647, %v1783
    %vm1794 = vcmp.eq.f32.partialorder %v1793, 8.507059e+37
    %v1795 = vand.u32 %v1783, 2147483648
    %v1796 = vor.u32 1.1754944e-38, %v1795
    %v1797 = vsel %vm1794, %v1796, %v1792
    %v1798 = vmul.f32 1.0, %v1797
    %v1799 = vmul.f32 %v1778, 0.0
    %v1800 = vmul.f32 %v1778, %v1779
    %1802 = vrot.lane.b32.xlu0 %v1800, 64
    %v1803 = vpop.permute.xlu0 %1802
    %v1805 = vadd.f32 %v1799, %v1803
    %v1806 = vtanh.pop %v1805
    %v1807 = vmul.f32 %v1798, %v1806
    %v1809 = vrot.slane %v1807, 6
    %1810 = vrot.lane.b32.xlu0 %v1809, 64
    %v1811 = vpop.permute.xlu0 %1810
    %v1812 = vsel %vm172, %v1811, 0
    %1814 = vmatpush.msra.mxu0 0.0
    %1815 = vmatpush.msra.mxu0 0.0
    %1816 = vmatpush.msra.mxu0 0.0
    %1817 = vmatpush.msra.mxu0 0.0
    %1818 = vmatpush.msra.mxu0 0.0
    %1819 = vmatpush.msra.mxu0 0.0
    %1820 = vmatpush.msra.mxu0 0.0
    %1821 = vmatpush.msra.mxu0 0.0
    %1822 = vmatpush.msra.mxu0 %v1306
    %1823 = vmatpush.msra.mxu0 %v1304
    %1824 = vmatpush.msra.mxu0 %v1302
    %1825 = vmatpush.msra.mxu0 %v1300
    %1826 = vmatpush.msra.mxu0 %v1298
    %1827 = vmatpush.msra.mxu0 %v1296
    %1828 = vmatpush.msra.mxu0 %v1294
    %1829 = vmatpush.msra.mxu0 %v1292
    %1830 = vmatmul.f32.gmra.mxu0 %v1812
    %v1831 = vpop.f32.mrf.mxu0
    %v1832 = vadd.f32 0.0, %v1831
    %1833 = vdwg.mxu0
    %1834 = vmatpush.msra.mxu0 0.0
    %1835 = vmatpush.msra.mxu0 0.0
    %1836 = vmatpush.msra.mxu0 0.0
    %1837 = vmatpush.msra.mxu0 0.0
    %1838 = vmatpush.msra.mxu0 0.0
    %1839 = vmatpush.msra.mxu0 0.0
    %1840 = vmatpush.msra.mxu0 0.0
    %1841 = vmatpush.msra.mxu0 0.0
    %1842 = vmatpush.msra.mxu0 %v1307
    %1843 = vmatpush.msra.mxu0 %v1305
    %1844 = vmatpush.msra.mxu0 %v1303
    %1845 = vmatpush.msra.mxu0 %v1301
    %1846 = vmatpush.msra.mxu0 %v1299
    %1847 = vmatpush.msra.mxu0 %v1297
    %1848 = vmatpush.msra.mxu0 %v1295
    %1849 = vmatpush.msra.mxu0 %v1293
    %1850 = vmatmul.f32.gmra.mxu0 %v1812
    %v1851 = vpop.f32.mrf.mxu0
    %v1852 = vadd.f32 0.0, %v1851
    %1853 = vdwg.mxu0
    %v1856 = vrot.slane %v1832, 4
    %v1857 = vrot.slane %v1852, 4
    %v1860 = vadd.f32 %v1253, %v1856
    %v1861 = vadd.f32 %v1273, %v1857
    %v1862 = vsub.f32 0.0, %v1860
    %v1863 = vmul.f32 %v1862, 1.442695
    %v1864 = vpow.pop %v1863
    %v1865 = vadd.f32 %v1864, 1.0
    %v1866 = vrcp.pop %v1865
    %v1867 = vmul.f32 %v1865, %v1866
    %v1868 = vsub.f32 1.0, %v1867
    %v1869 = vmul.f32 %v1866, %v1868
    %v1870 = vadd.f32 %v1866, %v1869
    %vm1871 = vweird.f32 %v1865
    %vm1872 = vweird.f32 %v1866
    %vm1873 = vmor %vm1871, %vm1872
    %v1874 = vsel %vm1873, %v1866, %v1870
    %v1875 = vand.u32 2147483647, %v1865
    %vm1876 = vcmp.eq.f32.partialorder %v1875, 8.507059e+37
    %v1877 = vand.u32 %v1865, 2147483648
    %v1878 = vor.u32 1.1754944e-38, %v1877
    %v1879 = vsel %vm1876, %v1878, %v1874
    %v1880 = vmul.f32 1.0, %v1879
    %v1881 = vtanh.pop %v1861
    %v1882 = vsub.f32 0.0, %v1861
    %v1883 = vmul.f32 %v1882, 1.442695
    %v1884 = vpow.pop %v1883
    %v1885 = vadd.f32 %v1884, 1.0
    %v1886 = vrcp.pop %v1885
    %v1887 = vmul.f32 %v1885, %v1886
    %v1888 = vsub.f32 1.0, %v1887
    %v1889 = vmul.f32 %v1886, %v1888
    %v1890 = vadd.f32 %v1886, %v1889
    %vm1891 = vweird.f32 %v1885
    %vm1892 = vweird.f32 %v1886
    %vm1893 = vmor %vm1891, %vm1892
    %v1894 = vsel %vm1893, %v1886, %v1890
    %v1895 = vand.u32 2147483647, %v1885
    %vm1896 = vcmp.eq.f32.partialorder %v1895, 8.507059e+37
    %v1897 = vand.u32 %v1885, 2147483648
    %v1898 = vor.u32 1.1754944e-38, %v1897
    %v1899 = vsel %vm1896, %v1898, %v1894
    %v1900 = vmul.f32 1.0, %v1899
    %v1902 = vrot.slane %v1805, 2
    %v1904 = vmul.f32 %v1880, %v1902
    %v1905 = vmul.f32 %v1880, %v1881
    %1907 = vrot.lane.b32.xlu0 %v1905, 64
    %v1908 = vpop.permute.xlu0 %1907
    %v1910 = vadd.f32 %v1904, %v1908
    %v1911 = vtanh.pop %v1910
    %v1912 = vmul.f32 %v1900, %v1911
    %v1914 = vrot.slane %v1912, 4
    %1915 = vrot.lane.b32.xlu0 %v1914, 64
    %v1916 = vpop.permute.xlu0 %1915
    %v1917 = vsel %vm172, %v1916, 0
    %1919 = vmatpush.msra.mxu0 0.0
    %1920 = vmatpush.msra.mxu0 0.0
    %1921 = vmatpush.msra.mxu0 0.0
    %1922 = vmatpush.msra.mxu0 0.0
    %1923 = vmatpush.msra.mxu0 0.0
    %1924 = vmatpush.msra.mxu0 0.0
    %1925 = vmatpush.msra.mxu0 0.0
    %1926 = vmatpush.msra.mxu0 0.0
    %1927 = vmatpush.msra.mxu0 %v1306
    %1928 = vmatpush.msra.mxu0 %v1304
    %1929 = vmatpush.msra.mxu0 %v1302
    %1930 = vmatpush.msra.mxu0 %v1300
    %1931 = vmatpush.msra.mxu0 %v1298
    %1932 = vmatpush.msra.mxu0 %v1296
    %1933 = vmatpush.msra.mxu0 %v1294
    %1934 = vmatpush.msra.mxu0 %v1292
    %1935 = vmatmul.f32.gmra.mxu0 %v1917
    %v1936 = vpop.f32.mrf.mxu0
    %v1937 = vadd.f32 0.0, %v1936
    %1938 = vdwg.mxu0
    %1939 = vmatpush.msra.mxu0 0.0
    %1940 = vmatpush.msra.mxu0 0.0
    %1941 = vmatpush.msra.mxu0 0.0
    %1942 = vmatpush.msra.mxu0 0.0
    %1943 = vmatpush.msra.mxu0 0.0
    %1944 = vmatpush.msra.mxu0 0.0
    %1945 = vmatpush.msra.mxu0 0.0
    %1946 = vmatpush.msra.mxu0 0.0
    %1947 = vmatpush.msra.mxu0 %v1307
    %1948 = vmatpush.msra.mxu0 %v1305
    %1949 = vmatpush.msra.mxu0 %v1303
    %1950 = vmatpush.msra.mxu0 %v1301
    %1951 = vmatpush.msra.mxu0 %v1299
    %1952 = vmatpush.msra.mxu0 %v1297
    %1953 = vmatpush.msra.mxu0 %v1295
    %1954 = vmatpush.msra.mxu0 %v1293
    %1955 = vmatmul.f32.gmra.mxu0 %v1917
    %v1956 = vpop.f32.mrf.mxu0
    %v1957 = vadd.f32 0.0, %v1956
    %1958 = vdwg.mxu0
    %v1961 = vrot.slane %v1937, 6
    %v1962 = vrot.slane %v1957, 6
    %v1965 = vadd.f32 %v1253, %v1961
    %v1966 = vadd.f32 %v1273, %v1962
    %v1967 = vsub.f32 0.0, %v1965
    %v1968 = vmul.f32 %v1967, 1.442695
    %v1969 = vpow.pop %v1968
    %v1970 = vadd.f32 %v1969, 1.0
    %v1971 = vrcp.pop %v1970
    %v1972 = vmul.f32 %v1970, %v1971
    %v1973 = vsub.f32 1.0, %v1972
    %v1974 = vmul.f32 %v1971, %v1973
    %v1975 = vadd.f32 %v1971, %v1974
    %vm1976 = vweird.f32 %v1970
    %vm1977 = vweird.f32 %v1971
    %vm1978 = vmor %vm1976, %vm1977
    %v1979 = vsel %vm1978, %v1971, %v1975
    %v1980 = vand.u32 2147483647, %v1970
    %vm1981 = vcmp.eq.f32.partialorder %v1980, 8.507059e+37
    %v1982 = vand.u32 %v1970, 2147483648
    %v1983 = vor.u32 1.1754944e-38, %v1982
    %v1984 = vsel %vm1981, %v1983, %v1979
    %v1985 = vmul.f32 1.0, %v1984
    %v1986 = vtanh.pop %v1966
    %v1987 = vsub.f32 0.0, %v1966
    %v1988 = vmul.f32 %v1987, 1.442695
    %v1989 = vpow.pop %v1988
    %v1990 = vadd.f32 %v1989, 1.0
    %v1991 = vrcp.pop %v1990
    %v1992 = vmul.f32 %v1990, %v1991
    %v1993 = vsub.f32 1.0, %v1992
    %v1994 = vmul.f32 %v1991, %v1993
    %v1995 = vadd.f32 %v1991, %v1994
    %vm1996 = vweird.f32 %v1990
    %vm1997 = vweird.f32 %v1991
    %vm1998 = vmor %vm1996, %vm1997
    %v1999 = vsel %vm1998, %v1991, %v1995
    %v2000 = vand.u32 2147483647, %v1990
    %vm2001 = vcmp.eq.f32.partialorder %v2000, 8.507059e+37
    %v2002 = vand.u32 %v1990, 2147483648
    %v2003 = vor.u32 1.1754944e-38, %v2002
    %v2004 = vsel %vm2001, %v2003, %v1999
    %v2005 = vmul.f32 1.0, %v2004
    %v2007 = vrot.slane %v1910, 2
    %v2009 = vmul.f32 %v1985, %v2007
    %v2010 = vmul.f32 %v1985, %v1986
    %2012 = vrot.lane.b32.xlu0 %v2010, 64
    %v2013 = vpop.permute.xlu0 %2012
    %v2015 = vadd.f32 %v2009, %v2013
    %v2016 = vtanh.pop %v2015
    %v2017 = vmul.f32 %v2005, %v2016
    %v2019 = vrot.slane %v2017, 2
    %2020 = vrot.lane.b32.xlu0 %v2019, 64
    %v2021 = vpop.permute.xlu0 %2020
    %v2022 = vsel %vm172, %v2021, 0
    %2024 = vmatpush.msra.mxu0 0.0
    %2025 = vmatpush.msra.mxu0 0.0
    %2026 = vmatpush.msra.mxu0 0.0
    %2027 = vmatpush.msra.mxu0 0.0
    %2028 = vmatpush.msra.mxu0 0.0
    %2029 = vmatpush.msra.mxu0 0.0
    %2030 = vmatpush.msra.mxu0 0.0
    %2031 = vmatpush.msra.mxu0 0.0
    %2032 = vmatpush.msra.mxu0 %v1306
    %2033 = vmatpush.msra.mxu0 %v1304
    %2034 = vmatpush.msra.mxu0 %v1302
    %2035 = vmatpush.msra.mxu0 %v1300
    %2036 = vmatpush.msra.mxu0 %v1298
    %2037 = vmatpush.msra.mxu0 %v1296
    %2038 = vmatpush.msra.mxu0 %v1294
    %2039 = vmatpush.msra.mxu0 %v1292
    %2040 = vmatmul.f32.gmra.mxu0 %v2022
    %v2041 = vpop.f32.mrf.mxu0
    %v2042 = vadd.f32 0.0, %v2041
    %2043 = vdwg.mxu0
    %2044 = vmatpush.msra.mxu0 0.0
    %2045 = vmatpush.msra.mxu0 0.0
    %2046 = vmatpush.msra.mxu0 0.0
    %2047 = vmatpush.msra.mxu0 0.0
    %2048 = vmatpush.msra.mxu0 0.0
    %2049 = vmatpush.msra.mxu0 0.0
    %2050 = vmatpush.msra.mxu0 0.0
    %2051 = vmatpush.msra.mxu0 0.0
    %2052 = vmatpush.msra.mxu0 %v1307
    %2053 = vmatpush.msra.mxu0 %v1305
    %2054 = vmatpush.msra.mxu0 %v1303
    %2055 = vmatpush.msra.mxu0 %v1301
    %2056 = vmatpush.msra.mxu0 %v1299
    %2057 = vmatpush.msra.mxu0 %v1297
    %2058 = vmatpush.msra.mxu0 %v1295
    %2059 = vmatpush.msra.mxu0 %v1293
    %2060 = vmatmul.f32.gmra.mxu0 %v2022
    %v2061 = vpop.f32.mrf.mxu0
    %v2062 = vadd.f32 0.0, %v2061
    %2063 = vdwg.mxu0
    %v2064 = vadd.f32 %v1253, %v2042
    %v2065 = vadd.f32 %v1273, %v2062
    %v2066 = vsub.f32 0.0, %v2064
    %v2067 = vmul.f32 %v2066, 1.442695
    %v2068 = vpow.pop %v2067
    %v2069 = vadd.f32 %v2068, 1.0
    %v2070 = vrcp.pop %v2069
    %v2071 = vmul.f32 %v2069, %v2070
    %v2072 = vsub.f32 1.0, %v2071
    %v2073 = vmul.f32 %v2070, %v2072
    %v2074 = vadd.f32 %v2070, %v2073
    %vm2075 = vweird.f32 %v2069
    %vm2076 = vweird.f32 %v2070
    %vm2077 = vmor %vm2075, %vm2076
    %v2078 = vsel %vm2077, %v2070, %v2074
    %v2079 = vand.u32 2147483647, %v2069
    %vm2080 = vcmp.eq.f32.partialorder %v2079, 8.507059e+37
    %v2081 = vand.u32 %v2069, 2147483648
    %v2082 = vor.u32 1.1754944e-38, %v2081
    %v2083 = vsel %vm2080, %v2082, %v2078
    %v2084 = vmul.f32 1.0, %v2083
    %v2085 = vtanh.pop %v2065
    %v2086 = vsub.f32 0.0, %v2065
    %v2087 = vmul.f32 %v2086, 1.442695
    %v2088 = vpow.pop %v2087
    %v2089 = vadd.f32 %v2088, 1.0
    %v2090 = vrcp.pop %v2089
    %v2091 = vmul.f32 %v2089, %v2090
    %v2092 = vsub.f32 1.0, %v2091
    %v2093 = vmul.f32 %v2090, %v2092
    %v2094 = vadd.f32 %v2090, %v2093
    %vm2095 = vweird.f32 %v2089
    %vm2096 = vweird.f32 %v2090
    %vm2097 = vmor %vm2095, %vm2096
    %v2098 = vsel %vm2097, %v2090, %v2094
    %v2099 = vand.u32 2147483647, %v2089
    %vm2100 = vcmp.eq.f32.partialorder %v2099, 8.507059e+37
    %v2101 = vand.u32 %v2089, 2147483648
    %v2102 = vor.u32 1.1754944e-38, %v2101
    %v2103 = vsel %vm2100, %v2102, %v2098
    %v2104 = vmul.f32 1.0, %v2103
    %v2106 = vrot.slane %v2015, 2
    %v2108 = vmul.f32 %v2084, %v2106
    %v2109 = vmul.f32 %v2084, %v2085
    %2111 = vrot.lane.b32.xlu0 %v2109, 64
    %v2112 = vpop.permute.xlu0 %2111
    %v2114 = vadd.f32 %v2108, %v2112
    %v2115 = vtanh.pop %v2114
    %v2116 = vmul.f32 %v2104, %v2115
    %v2118 = vsel %vm172, %v1400, %v2116
    %2119 = vrot.lane.b32.xlu0 %v1501, 64
    %v2120 = vpop.permute.xlu0 %2119
    %v2122 = vsel %vm172, %v2120, %v2017
    %2123 = vrot.lane.b32.xlu0 %v1606, 64
    %v2124 = vpop.permute.xlu0 %2123
    %v2126 = vsel %vm172, %v2124, %v1912
    %2128 = vrot.lane.b32.xlu0 %v1711, 64
    %v2129 = vpop.permute.xlu0 %2128
    %v2131 = vsel %vm172, %v2129, %v1807
    %v2132 = vsel %vm1116, %v2118, %v2122
    %v2133 = vsel %vm106, %v2132, %v2126
    %v2134 = vsel %vm1119, %v2133, %v2131
    %2135 = vst [vmem:[#allocation10] sm:$0xff] %v2134
    // Predicated region
    $region54: #{tpu_custom_call.1} parent=1 // pred_check
      _
    $region55: #{tpu_custom_call.1} parent=1 // pred_check_branch
      %2137 = sbr.rel (0) target = $region57
    $region56: #{tpu_custom_call.1} parent=1 // pred_region
      %2139 = vsyncadd [#allocation4], 0
      %s2141 = sshll.u32 [#allocation10], 4
      %s2142 = int_to_ptr.vmem [resolvable:$true] %s2141
      %s2143 = sshll.u32 %s9, 4
      %s2144 = int_to_ptr.hbm [resolvable:$true] %s2143
      %2146 = dma.vmem_to_hbm [thread:$0]  %s2142, 128, %s2144, [#allocation4]
    $region57: #{tpu_custom_call.1} parent=1 // pred_fallthru
      _
    // Predicated region
    $region58: #{tpu_custom_call.1} parent=1 // pred_check
      _
    $region59: #{tpu_custom_call.1} parent=1 // pred_check_branch
      %2148 = sbr.rel (0) target = $region61
    $region60: #{tpu_custom_call.1} parent=1 // pred_region
      %2150 = dma.done [#allocation4], 128
    $region61: #{tpu_custom_call.1} parent=1 // pred_fallthru
      _
    %2151 = vsyncpa [#allocation3], 1
    %2152 = vsyncpa [#allocation6], 1
    %2153 = vsyncpa [#allocation9], 1
    %2154 = vsyncpa [#allocation4], 1

</llo_original>
